<compile_context>
chip_gen: v6e
topology: v6e:2x2x1
jax: 0.10.0
libtpu: 0.0.40
codegen_flags: <defaults>
</compile_context>

<pallas_src>
import functools

import jax
import jax.numpy as jnp
from jax.experimental import pallas as pl
from jax.experimental.pallas import tpu as pltpu

# ----------------------------- configuration --------------------------------
N_LAYERS  = 2      # n_layers
HID_DIM   = 32     # hidden_size (scaled down from 256)
EMB_DIM   = 32     # embed_size  (scaled down from 512)
VOCAB     = 32     # dataset.vocab_size (synthetic)
VOCAB_PAD = 128    # lane-dense logits / one-hot width
FEAT_DIM  = 64     # stand-in for resnet50 fc.in_features (2048)
NEG_INF   = -1e30


# ----------------------------- fused kernel ----------------------------------
def _fused_seq2seq_kernel(
    tf_ref,                                   # SMEM: (T-1,) int32 teacher-forcing draws
    pooled_ref,                               # (Bp, C)        pooled image features
    trg_oh_ref,                               # (T-1, Bp, VP)  one-hot of trg[:, 0..T-2]
    w_bb_ref, b_bb_ref, w_fc_ref, b_fc_ref,   # encoder stand-in weights
    w0e_ref, whh0_ref, b0_ref,                # layer 0: (VP,4H) emb-folded, (H,4H), (1,4H)
    wih1_ref, whh1_ref, b1_ref,               # layer 1: (H,4H), (H,4H), (1,4H)
    wout_ref, bout_ref,                       # fc_out:  (H,VP), (1,VP)  (pad lanes -> -inf)
    logits_ref,                               # out: (T-1, Bp, VP)
    *, hid_dim, n_steps,
):
    H = hid_dim

    # ---- encoder (runs once): avg-pooled features -> linear -> relu -> linear
    # TODO(synk): frozen pretrained ResNet50 backbone has no clean Pallas
    # equivalent; approximated by global-average-pool + linear + relu + linear.
    backbone = jnp.dot(pooled_ref[...], w_bb_ref[...],
                       preferred_element_type=jnp.float32) + b_bb_ref[...]
    backbone = jnp.maximum(backbone, 0.0)
    feat = jnp.dot(backbone, w_fc_ref[...],
                   preferred_element_type=jnp.float32) + b_fc_ref[...]   # (Bp, H)
    Bp = feat.shape[0]

    # hoist weight loads out of the decode loop (stay in vregs / VMEM views)
    w0e = w0e_ref[...];  whh0 = whh0_ref[...]; b0 = b0_ref[...]
    wih1 = wih1_ref[...]; whh1 = whh1_ref[...]; b1 = b1_ref[...]
    wout = wout_ref[...]; bout = bout_ref[...]

    def gate_update(gates, c):
        # PyTorch gate order i,f,g,o.  g-columns were pre-scaled by 2 in the
        # wrapper, so tanh(g_raw) = 2*sigmoid(2*g_raw) - 1 needs only the one
        # 128-lane sigmoid below plus a cheap VPU fixup.
        s = jax.nn.sigmoid(gates)                       # single 128-lane EUP call
        i, f, o = s[:, 0:H], s[:, H:2 * H], s[:, 3 * H:4 * H]
        g = 2.0 * s[:, 2 * H:3 * H] - 1.0
        c_new = f * c + i * g
        h_new = o * jnp.tanh(c_new)
        return h_new, c_new

    def body(s, carry):
        h0, c0, h1, c1, top1_oh = carry

        # input one-hot: teacher forcing vs previous argmax
        use_trg = jnp.logical_or(s == 0, tf_ref[s] != 0)
        inp_oh = jnp.where(use_trg, trg_oh_ref[s], top1_oh)            # (Bp, VP)

        # layer 0: embedding folded into w0e -> gates = onehot@W0' + h@Whh + b
        # TODO(synk): embedding / inter-layer dropout (p=0.5) run as identity (eval mode).
        gates0 = (jnp.dot(inp_oh, w0e, preferred_element_type=jnp.float32)
                  + jnp.dot(h0, whh0, preferred_element_type=jnp.float32) + b0)
        h0n, c0n = gate_update(gates0, c0)

        # layer 1
        gates1 = (jnp.dot(h0n, wih1, preferred_element_type=jnp.float32)
                  + jnp.dot(h1, whh1, preferred_element_type=jnp.float32) + b1)
        h1n, c1n = gate_update(gates1, c1)

        # fc_out -> lane-dense (128-wide) store of this step's logits
        logits = jnp.dot(h1n, wout, preferred_element_type=jnp.float32) + bout
        logits_ref[s] = logits

        # in-kernel argmax -> one-hot next input (first-max tie-break)
        lane = jax.lax.broadcasted_iota(jnp.int32, logits.shape, 1).astype(jnp.float32)
        mx = jnp.max(logits, axis=-1, keepdims=True)
        eq = logits == mx
        neg_first = jnp.max(jnp.where(eq, -lane, -jnp.float32(VOCAB_PAD)),
                            axis=-1, keepdims=True)
        nxt_oh = (lane == -neg_first).astype(jnp.float32)

        return h0n, c0n, h1n, c1n, nxt_oh

    zeros_hc = jnp.zeros((Bp, H), jnp.float32)            # cell = zeros
    zeros_oh = jnp.zeros((Bp, VOCAB_PAD), jnp.float32)
    carry0 = (feat, zeros_hc, feat, zeros_hc, zeros_oh)   # hidden = expand(features, 2)
    jax.lax.fori_loop(0, n_steps, body, carry0, unroll=True)


# ------------------------------- Seq2Seq forward ----------------------------
def seq2seq_forward(src, trg, params, tf_key, teacher_forcing_ratio=0.5):
    B, trg_len = trg.shape
    _, C, Himg, Wimg = src.shape
    Bp = ((B + 7) // 8) * 8                    # fill all 8 sublanes
    T1 = trg_len - 1
    H = HID_DIM

    # ------- tiny plain-JAX glue (one-time, outside the time loop) -----------
    pooled = jnp.mean(src.reshape(B, C, Himg * Wimg).astype(jnp.float32), axis=-1)
    pooled = jnp.zeros((Bp, C), jnp.float32).at[:B].set(pooled)

    trg_pad = jnp.zeros((Bp, trg_len), trg.dtype).at[:B].set(trg)
    trg_oh = jax.nn.one_hot(trg_pad[:, :T1], VOCAB_PAD, dtype=jnp.float32)  # (Bp, T1, VP)
    trg_oh = jnp.transpose(trg_oh, (1, 0, 2))                               # (T1, Bp, VP)

    # Python random() replaced by a deterministic per-step PRNG draw.
    tf_draw = (jax.random.uniform(tf_key, (T1,)) <
               teacher_forcing_ratio).astype(jnp.int32)

    # ------- weight fusion / padding ------------------------------------------
    # Fold the embedding into the layer-0 input weights (valid: dropout = identity).
    emb_pad = jnp.zeros((VOCAB_PAD, EMB_DIM), jnp.float32).at[:VOCAB].set(params["emb"])
    w0e  = emb_pad @ params["wih0"]                         # (VP, 4H)
    whh0 = params["whh0"]
    b0   = params["bih0"] + params["bhh0"]
    wih1 = params["wih1"]
    whh1 = params["whh1"]
    b1   = params["bih1"] + params["bhh1"]

    # Pre-scale the cell-gate (g) columns by 2 so tanh(x) = 2*sigmoid(2x) - 1
    # can be computed from the single full-width sigmoid in the kernel.
    def scale_g(w):
        return w.at[..., 2 * H:3 * H].multiply(2.0)
    w0e, whh0, b0 = scale_g(w0e), scale_g(whh0), scale_g(b0)
    wih1, whh1, b1 = scale_g(wih1), scale_g(whh1), scale_g(b1)

    wout = jnp.zeros((H, VOCAB_PAD), jnp.float32).at[:, :VOCAB].set(params["wfc"])
    bout = jnp.full((1, VOCAB_PAD), NEG_INF, jnp.float32).at[:, :VOCAB].set(params["bfc"])

    # ------- single pallas_call, grid=(): everything VMEM-resident ------------
    vmem = pl.BlockSpec(memory_space=pltpu.MemorySpace.VMEM)
    smem = pl.BlockSpec(memory_space=pltpu.MemorySpace.SMEM)

    logits_all = pl.pallas_call(
        functools.partial(_fused_seq2seq_kernel, hid_dim=H, n_steps=T1),
        out_shape=jax.ShapeDtypeStruct((T1, Bp, VOCAB_PAD), jnp.float32),
        in_specs=[smem] + [vmem] * 14,
        out_specs=vmem,
    )(tf_draw, pooled, trg_oh,
      params["enc_w_bb"], params["enc_b_bb"], params["enc_w_fc"], params["enc_b_fc"],
      w0e, whh0, b0, wih1, whh1, b1, wout, bout)

    # outputs[0] stays zeros (as in the reference); drop batch/vocab padding.
    out = jnp.concatenate(
        [jnp.zeros((1, B, VOCAB), jnp.float32), logits_all[:, :B, :VOCAB]], axis=0)
    return out                                   # (trg_len, B, VOCAB)


# ------------------------------ parameter init -------------------------------
def init_params(key, in_channels):
    ks = jax.random.split(key, 16)
    s = 0.1
    p = {}
    # encoder (backbone stand-in + new fc)
    p["enc_w_bb"] = s * jax.random.normal(ks[0], (in_channels, FEAT_DIM), jnp.float32)
    p["enc_b_bb"] = s * jax.random.normal(ks[1], (1, FEAT_DIM), jnp.float32)
    p["enc_w_fc"] = s * jax.random.normal(ks[2], (FEAT_DIM, HID_DIM), jnp.float32)
    p["enc_b_fc"] = s * jax.random.normal(ks[3], (1, HID_DIM), jnp.float32)
    # decoder embedding
    p["emb"] = s * jax.random.normal(ks[4], (VOCAB, EMB_DIM), jnp.float32)
    # LSTM layer 0: input = EMB_DIM
    p["wih0"] = s * jax.random.normal(ks[5], (EMB_DIM, 4 * HID_DIM), jnp.float32)
    p["whh0"] = s * jax.random.normal(ks[6], (HID_DIM, 4 * HID_DIM), jnp.float32)
    p["bih0"] = s * jax.random.normal(ks[7], (1, 4 * HID_DIM), jnp.float32)
    p["bhh0"] = s * jax.random.normal(ks[8], (1, 4 * HID_DIM), jnp.float32)
    # LSTM layer 1: input = HID_DIM
    p["wih1"] = s * jax.random.normal(ks[9], (HID_DIM, 4 * HID_DIM), jnp.float32)
    p["whh1"] = s * jax.random.normal(ks[10], (HID_DIM, 4 * HID_DIM), jnp.float32)
    p["bih1"] = s * jax.random.normal(ks[11], (1, 4 * HID_DIM), jnp.float32)
    p["bhh1"] = s * jax.random.normal(ks[12], (1, 4 * HID_DIM), jnp.float32)
    # fc_out
    p["wfc"] = s * jax.random.normal(ks[13], (HID_DIM, VOCAB), jnp.float32)
    p["bfc"] = s * jax.random.normal(ks[14], (1, VOCAB), jnp.float32)
    return p


if __name__ == "__main__":
    key = jax.random.PRNGKey(0)
    k_src, k_trg, k_param, k_tf = jax.random.split(key, 4)

    B, C, H, W = 2, 4, 16, 16
    TRG_LEN = 8

    src = jax.random.normal(k_src, (B, C, H, W), jnp.float32)          # NCHW
    trg = jax.random.randint(k_trg, (B, TRG_LEN), 0, VOCAB, jnp.int32)

    params = init_params(k_param, C)

    fwd = jax.jit(seq2seq_forward)
    out = fwd(src, trg, params, k_tf, 0.5)
    out = jax.block_until_ready(out)
    assert out.shape == (TRG_LEN, B, VOCAB), out.shape
    assert bool(jnp.all(jnp.isfinite(out)))
    print("KERNEL_OK")
</pallas_src>

<mosaic_0001>
module attributes {stable_mosaic.version = 11 : i64} {
  func.func @_fused_seq2seq_kernel(%arg0: memref<7xi32, #tpu.memory_space<smem>>, %arg1: memref<8x4xf32, #tpu.memory_space<vmem>>, %arg2: memref<7x8x128xf32, #tpu.memory_space<vmem>>, %arg3: memref<4x64xf32, #tpu.memory_space<vmem>>, %arg4: memref<1x64xf32, #tpu.memory_space<vmem>>, %arg5: memref<64x32xf32, #tpu.memory_space<vmem>>, %arg6: memref<1x32xf32, #tpu.memory_space<vmem>>, %arg7: memref<128x128xf32, #tpu.memory_space<vmem>>, %arg8: memref<32x128xf32, #tpu.memory_space<vmem>>, %arg9: memref<1x128xf32, #tpu.memory_space<vmem>>, %arg10: memref<32x128xf32, #tpu.memory_space<vmem>>, %arg11: memref<32x128xf32, #tpu.memory_space<vmem>>, %arg12: memref<1x128xf32, #tpu.memory_space<vmem>>, %arg13: memref<32x128xf32, #tpu.memory_space<vmem>>, %arg14: memref<1x128xf32, #tpu.memory_space<vmem>>, %arg15: memref<7x8x128xf32, #tpu.memory_space<vmem>>) attributes {dimension_semantics = [], scalar_prefetch = 0 : i64, scratch_operands = 0 : i64, tpu.core_type = #tpu.core_type<tc>} {
    %c0 = arith.constant 0 : index
    %c0_0 = arith.constant 0 : index
    %0 = vector.load %arg1[%c0, %c0_0] : memref<8x4xf32, #tpu.memory_space<vmem>>, vector<8x4xf32>
    %c0_1 = arith.constant 0 : index
    %c0_2 = arith.constant 0 : index
    %1 = vector.load %arg3[%c0_1, %c0_2] : memref<4x64xf32, #tpu.memory_space<vmem>>, vector<4x64xf32>
    %cst = arith.constant dense<0.000000e+00> : vector<8x64xf32>
    %2 = tpu.matmul %0, %1, %cst {dimension_numbers = #tpu.dot_dimension_numbers<[1], [0], [0], [1], [0, 0, 1, 1], [], []>} : vector<8x4xf32>, vector<4x64xf32>, vector<8x64xf32> -> vector<8x64xf32>
    %c0_3 = arith.constant 0 : index
    %c0_4 = arith.constant 0 : index
    %3 = vector.load %arg4[%c0_3, %c0_4] : memref<1x64xf32, #tpu.memory_space<vmem>>, vector<1x64xf32>
    %4 = vector.broadcast %3 : vector<1x64xf32> to vector<8x64xf32>
    %5 = arith.addf %2, %4 : vector<8x64xf32>
    %cst_5 = arith.constant 0.000000e+00 : f32
    %6 = vector.broadcast %cst_5 : f32 to vector<8x64xf32>
    %7 = arith.maximumf %5, %6 : vector<8x64xf32>
    %c0_6 = arith.constant 0 : index
    %c0_7 = arith.constant 0 : index
    %8 = vector.load %arg5[%c0_6, %c0_7] : memref<64x32xf32, #tpu.memory_space<vmem>>, vector<64x32xf32>
    %cst_8 = arith.constant dense<0.000000e+00> : vector<8x32xf32>
    %9 = tpu.matmul %7, %8, %cst_8 {dimension_numbers = #tpu.dot_dimension_numbers<[1], [0], [0], [1], [0, 0, 1, 1], [], []>} : vector<8x64xf32>, vector<64x32xf32>, vector<8x32xf32> -> vector<8x32xf32>
    %c0_9 = arith.constant 0 : index
    %c0_10 = arith.constant 0 : index
    %10 = vector.load %arg6[%c0_9, %c0_10] : memref<1x32xf32, #tpu.memory_space<vmem>>, vector<1x32xf32>
    %11 = vector.broadcast %10 : vector<1x32xf32> to vector<8x32xf32>
    %12 = arith.addf %9, %11 : vector<8x32xf32>
    %c0_11 = arith.constant 0 : index
    %c0_12 = arith.constant 0 : index
    %13 = vector.load %arg7[%c0_11, %c0_12] : memref<128x128xf32, #tpu.memory_space<vmem>>, vector<128x128xf32>
    %c0_13 = arith.constant 0 : index
    %c0_14 = arith.constant 0 : index
    %14 = vector.load %arg8[%c0_13, %c0_14] : memref<32x128xf32, #tpu.memory_space<vmem>>, vector<32x128xf32>
    %c0_15 = arith.constant 0 : index
    %c0_16 = arith.constant 0 : index
    %15 = vector.load %arg9[%c0_15, %c0_16] : memref<1x128xf32, #tpu.memory_space<vmem>>, vector<1x128xf32>
    %c0_17 = arith.constant 0 : index
    %c0_18 = arith.constant 0 : index
    %16 = vector.load %arg10[%c0_17, %c0_18] : memref<32x128xf32, #tpu.memory_space<vmem>>, vector<32x128xf32>
    %c0_19 = arith.constant 0 : index
    %c0_20 = arith.constant 0 : index
    %17 = vector.load %arg11[%c0_19, %c0_20] : memref<32x128xf32, #tpu.memory_space<vmem>>, vector<32x128xf32>
    %c0_21 = arith.constant 0 : index
    %c0_22 = arith.constant 0 : index
    %18 = vector.load %arg12[%c0_21, %c0_22] : memref<1x128xf32, #tpu.memory_space<vmem>>, vector<1x128xf32>
    %c0_23 = arith.constant 0 : index
    %c0_24 = arith.constant 0 : index
    %19 = vector.load %arg13[%c0_23, %c0_24] : memref<32x128xf32, #tpu.memory_space<vmem>>, vector<32x128xf32>
    %c0_25 = arith.constant 0 : index
    %c0_26 = arith.constant 0 : index
    %20 = vector.load %arg14[%c0_25, %c0_26] : memref<1x128xf32, #tpu.memory_space<vmem>>, vector<1x128xf32>
    %cst_27 = arith.constant 0.000000e+00 : f32
    %21 = vector.broadcast %cst_27 : f32 to vector<8x32xf32>
    %cst_28 = arith.constant 0.000000e+00 : f32
    %22 = vector.broadcast %cst_28 : f32 to vector<8x128xf32>
    %c0_i32 = arith.constant 0 : i32
    %c0_i32_29 = arith.constant 0 : i32
    %23 = arith.cmpi eq, %c0_i32, %c0_i32_29 : i32
    %24 = arith.index_cast %c0_i32 : i32 to index
    %25 = memref.load %arg0[%24] : memref<7xi32, #tpu.memory_space<smem>>
    %c0_i32_30 = arith.constant 0 : i32
    %26 = arith.cmpi ne, %25, %c0_i32_30 : i32
    %27 = arith.ori %23, %26 : i1
    %28 = arith.index_cast %c0_i32 : i32 to index
    %c0_31 = arith.constant 0 : index
    %c0_32 = arith.constant 0 : index
    %29 = vector.load %arg2[%28, %c0_31, %c0_32] : memref<7x8x128xf32, #tpu.memory_space<vmem>>, vector<1x8x128xf32>
    %30 = vector.shape_cast %29 : vector<1x8x128xf32> to vector<8x128xf32>
    %31 = arith.select %27, %30, %22 : vector<8x128xf32>
    %cst_33 = arith.constant dense<0.000000e+00> : vector<8x128xf32>
    %32 = tpu.matmul %31, %13, %cst_33 {dimension_numbers = #tpu.dot_dimension_numbers<[1], [0], [0], [1], [0, 0, 1, 1], [], []>} : vector<8x128xf32>, vector<128x128xf32>, vector<8x128xf32> -> vector<8x128xf32>
    %cst_34 = arith.constant dense<0.000000e+00> : vector<8x128xf32>
    %33 = tpu.matmul %12, %14, %cst_34 {dimension_numbers = #tpu.dot_dimension_numbers<[1], [0], [0], [1], [0, 0, 1, 1], [], []>} : vector<8x32xf32>, vector<32x128xf32>, vector<8x128xf32> -> vector<8x128xf32>
    %34 = arith.addf %32, %33 : vector<8x128xf32>
    %35 = vector.broadcast %15 : vector<1x128xf32> to vector<8x128xf32>
    %36 = arith.addf %34, %35 : vector<8x128xf32>
    %37 = arith.negf %36 : vector<8x128xf32>
    %38 = math.exp %37 : vector<8x128xf32>
    %cst_35 = arith.constant 1.000000e+00 : f32
    %39 = vector.broadcast %cst_35 : f32 to vector<8x128xf32>
    %40 = arith.addf %39, %38 : vector<8x128xf32>
    %41 = arith.divf %39, %40 : vector<8x128xf32>
    %42 = vector.extract_strided_slice %41 {offsets = [0, 0], sizes = [8, 32], strides = [1, 1]} : vector<8x128xf32> to vector<8x32xf32>
    %43 = vector.extract_strided_slice %41 {offsets = [0, 32], sizes = [8, 32], strides = [1, 1]} : vector<8x128xf32> to vector<8x32xf32>
    %44 = vector.extract_strided_slice %41 {offsets = [0, 96], sizes = [8, 32], strides = [1, 1]} : vector<8x128xf32> to vector<8x32xf32>
    %45 = vector.extract_strided_slice %41 {offsets = [0, 64], sizes = [8, 32], strides = [1, 1]} : vector<8x128xf32> to vector<8x32xf32>
    %cst_36 = arith.constant 2.000000e+00 : f32
    %46 = vector.broadcast %cst_36 : f32 to vector<8x32xf32>
    %47 = arith.mulf %46, %45 : vector<8x32xf32>
    %cst_37 = arith.constant 1.000000e+00 : f32
    %48 = vector.broadcast %cst_37 : f32 to vector<8x32xf32>
    %49 = arith.subf %47, %48 : vector<8x32xf32>
    %50 = arith.mulf %43, %21 : vector<8x32xf32>
    %51 = arith.mulf %42, %49 : vector<8x32xf32>
    %52 = arith.addf %50, %51 : vector<8x32xf32>
    %53 = math.tanh %52 : vector<8x32xf32>
    %54 = arith.mulf %44, %53 : vector<8x32xf32>
    %cst_38 = arith.constant dense<0.000000e+00> : vector<8x128xf32>
    %55 = tpu.matmul %54, %16, %cst_38 {dimension_numbers = #tpu.dot_dimension_numbers<[1], [0], [0], [1], [0, 0, 1, 1], [], []>} : vector<8x32xf32>, vector<32x128xf32>, vector<8x128xf32> -> vector<8x128xf32>
    %cst_39 = arith.constant dense<0.000000e+00> : vector<8x128xf32>
    %56 = tpu.matmul %12, %17, %cst_39 {dimension_numbers = #tpu.dot_dimension_numbers<[1], [0], [0], [1], [0, 0, 1, 1], [], []>} : vector<8x32xf32>, vector<32x128xf32>, vector<8x128xf32> -> vector<8x128xf32>
    %57 = arith.addf %55, %56 : vector<8x128xf32>
    %58 = vector.broadcast %18 : vector<1x128xf32> to vector<8x128xf32>
    %59 = arith.addf %57, %58 : vector<8x128xf32>
    %60 = arith.negf %59 : vector<8x128xf32>
    %61 = math.exp %60 : vector<8x128xf32>
    %cst_40 = arith.constant 1.000000e+00 : f32
    %62 = vector.broadcast %cst_40 : f32 to vector<8x128xf32>
    %63 = arith.addf %62, %61 : vector<8x128xf32>
    %64 = arith.divf %62, %63 : vector<8x128xf32>
    %65 = vector.extract_strided_slice %64 {offsets = [0, 0], sizes = [8, 32], strides = [1, 1]} : vector<8x128xf32> to vector<8x32xf32>
    %66 = vector.extract_strided_slice %64 {offsets = [0, 32], sizes = [8, 32], strides = [1, 1]} : vector<8x128xf32> to vector<8x32xf32>
    %67 = vector.extract_strided_slice %64 {offsets = [0, 96], sizes = [8, 32], strides = [1, 1]} : vector<8x128xf32> to vector<8x32xf32>
    %68 = vector.extract_strided_slice %64 {offsets = [0, 64], sizes = [8, 32], strides = [1, 1]} : vector<8x128xf32> to vector<8x32xf32>
    %cst_41 = arith.constant 2.000000e+00 : f32
    %69 = vector.broadcast %cst_41 : f32 to vector<8x32xf32>
    %70 = arith.mulf %69, %68 : vector<8x32xf32>
    %cst_42 = arith.constant 1.000000e+00 : f32
    %71 = vector.broadcast %cst_42 : f32 to vector<8x32xf32>
    %72 = arith.subf %70, %71 : vector<8x32xf32>
    %73 = arith.mulf %66, %21 : vector<8x32xf32>
    %74 = arith.mulf %65, %72 : vector<8x32xf32>
    %75 = arith.addf %73, %74 : vector<8x32xf32>
    %76 = math.tanh %75 : vector<8x32xf32>
    %77 = arith.mulf %67, %76 : vector<8x32xf32>
    %cst_43 = arith.constant dense<0.000000e+00> : vector<8x128xf32>
    %78 = tpu.matmul %77, %19, %cst_43 {dimension_numbers = #tpu.dot_dimension_numbers<[1], [0], [0], [1], [0, 0, 1, 1], [], []>} : vector<8x32xf32>, vector<32x128xf32>, vector<8x128xf32> -> vector<8x128xf32>
    %79 = vector.broadcast %20 : vector<1x128xf32> to vector<8x128xf32>
    %80 = arith.addf %78, %79 : vector<8x128xf32>
    %81 = arith.index_cast %c0_i32 : i32 to index
    %c0_44 = arith.constant 0 : index
    %c0_45 = arith.constant 0 : index
    %82 = vector.load %arg15[%81, %c0_44, %c0_45] : memref<7x8x128xf32, #tpu.memory_space<vmem>>, vector<1x8x128xf32>
    %83 = vector.shape_cast %82 : vector<1x8x128xf32> to vector<8x128xf32>
    %84 = vector.shape_cast %80 : vector<8x128xf32> to vector<1x8x128xf32>
    tpu.vector_store %arg15[%81, %c0_44, %c0_45], %84 {strides = array<i32>} : memref<7x8x128xf32, #tpu.memory_space<vmem>>, vector<1x8x128xf32>,
    %85 = tpu.iota {dimensions = array<i32: 1>} : vector<8x128xi32>
    %86 = arith.sitofp %85 : vector<8x128xi32> to vector<8x128xf32>
    %cst_46 = arith.constant dense<0xFF800000> : vector<8xf32>
    %87 = vector.multi_reduction <maximumf>, %80, %cst_46 [1] : vector<8x128xf32> to vector<8xf32>
    %88 = vector.shape_cast %87 : vector<8xf32> to vector<8x1xf32>
    %89 = vector.broadcast %88 : vector<8x1xf32> to vector<8x128xf32>
    %90 = arith.cmpf oeq, %80, %89 : vector<8x128xf32>
    %cst_47 = arith.constant 0.000000e+00 : f32
    %91 = vector.broadcast %cst_47 : f32 to vector<8x128xf32>
    %92 = arith.subf %91, %86 : vector<8x128xf32>
    %cst_48 = arith.constant 0.000000e+00 : f32
    %cst_49 = arith.constant 1.280000e+02 : f32
    %93 = arith.subf %cst_48, %cst_49 : f32
    %94 = vector.broadcast %93 : f32 to vector<8x128xf32>
    %95 = arith.select %90, %92, %94 : vector<8x128xi1>, vector<8x128xf32>
    %cst_50 = arith.constant dense<0xFF800000> : vector<8xf32>
    %96 = vector.multi_reduction <maximumf>, %95, %cst_50 [1] : vector<8x128xf32> to vector<8xf32>
    %97 = vector.shape_cast %96 : vector<8xf32> to vector<8x1xf32>
    %cst_51 = arith.constant 0.000000e+00 : f32
    %98 = vector.broadcast %cst_51 : f32 to vector<8x1xf32>
    %99 = arith.subf %98, %97 : vector<8x1xf32>
    %100 = vector.broadcast %99 : vector<8x1xf32> to vector<8x128xf32>
    %101 = arith.cmpf oeq, %86, %100 : vector<8x128xf32>
    %102 = arith.extui %101 : vector<8x128xi1> to vector<8x128xi32>
    %103 = arith.sitofp %102 : vector<8x128xi32> to vector<8x128xf32>
    %c1_i32 = arith.constant 1 : i32
    %c0_i32_52 = arith.constant 0 : i32
    %104 = arith.cmpi eq, %c1_i32, %c0_i32_52 : i32
    %105 = arith.index_cast %c1_i32 : i32 to index
    %106 = memref.load %arg0[%105] : memref<7xi32, #tpu.memory_space<smem>>
    %c0_i32_53 = arith.constant 0 : i32
    %107 = arith.cmpi ne, %106, %c0_i32_53 : i32
    %108 = arith.ori %104, %107 : i1
    %109 = arith.index_cast %c1_i32 : i32 to index
    %c0_54 = arith.constant 0 : index
    %c0_55 = arith.constant 0 : index
    %110 = vector.load %arg2[%109, %c0_54, %c0_55] : memref<7x8x128xf32, #tpu.memory_space<vmem>>, vector<1x8x128xf32>
    %111 = vector.shape_cast %110 : vector<1x8x128xf32> to vector<8x128xf32>
    %112 = arith.select %108, %111, %103 : vector<8x128xf32>
    %cst_56 = arith.constant dense<0.000000e+00> : vector<8x128xf32>
    %113 = tpu.matmul %112, %13, %cst_56 {dimension_numbers = #tpu.dot_dimension_numbers<[1], [0], [0], [1], [0, 0, 1, 1], [], []>} : vector<8x128xf32>, vector<128x128xf32>, vector<8x128xf32> -> vector<8x128xf32>
    %cst_57 = arith.constant dense<0.000000e+00> : vector<8x128xf32>
    %114 = tpu.matmul %54, %14, %cst_57 {dimension_numbers = #tpu.dot_dimension_numbers<[1], [0], [0], [1], [0, 0, 1, 1], [], []>} : vector<8x32xf32>, vector<32x128xf32>, vector<8x128xf32> -> vector<8x128xf32>
    %115 = arith.addf %113, %114 : vector<8x128xf32>
    %116 = vector.broadcast %15 : vector<1x128xf32> to vector<8x128xf32>
    %117 = arith.addf %115, %116 : vector<8x128xf32>
    %118 = arith.negf %117 : vector<8x128xf32>
    %119 = math.exp %118 : vector<8x128xf32>
    %cst_58 = arith.constant 1.000000e+00 : f32
    %120 = vector.broadcast %cst_58 : f32 to vector<8x128xf32>
    %121 = arith.addf %120, %119 : vector<8x128xf32>
    %122 = arith.divf %120, %121 : vector<8x128xf32>
    %123 = vector.extract_strided_slice %122 {offsets = [0, 0], sizes = [8, 32], strides = [1, 1]} : vector<8x128xf32> to vector<8x32xf32>
    %124 = vector.extract_strided_slice %122 {offsets = [0, 32], sizes = [8, 32], strides = [1, 1]} : vector<8x128xf32> to vector<8x32xf32>
    %125 = vector.extract_strided_slice %122 {offsets = [0, 96], sizes = [8, 32], strides = [1, 1]} : vector<8x128xf32> to vector<8x32xf32>
    %126 = vector.extract_strided_slice %122 {offsets = [0, 64], sizes = [8, 32], strides = [1, 1]} : vector<8x128xf32> to vector<8x32xf32>
    %cst_59 = arith.constant 2.000000e+00 : f32
    %127 = vector.broadcast %cst_59 : f32 to vector<8x32xf32>
    %128 = arith.mulf %127, %126 : vector<8x32xf32>
    %cst_60 = arith.constant 1.000000e+00 : f32
    %129 = vector.broadcast %cst_60 : f32 to vector<8x32xf32>
    %130 = arith.subf %128, %129 : vector<8x32xf32>
    %131 = arith.mulf %124, %52 : vector<8x32xf32>
    %132 = arith.mulf %123, %130 : vector<8x32xf32>
    %133 = arith.addf %131, %132 : vector<8x32xf32>
    %134 = math.tanh %133 : vector<8x32xf32>
    %135 = arith.mulf %125, %134 : vector<8x32xf32>
    %cst_61 = arith.constant dense<0.000000e+00> : vector<8x128xf32>
    %136 = tpu.matmul %135, %16, %cst_61 {dimension_numbers = #tpu.dot_dimension_numbers<[1], [0], [0], [1], [0, 0, 1, 1], [], []>} : vector<8x32xf32>, vector<32x128xf32>, vector<8x128xf32> -> vector<8x128xf32>
    %cst_62 = arith.constant dense<0.000000e+00> : vector<8x128xf32>
    %137 = tpu.matmul %77, %17, %cst_62 {dimension_numbers = #tpu.dot_dimension_numbers<[1], [0], [0], [1], [0, 0, 1, 1], [], []>} : vector<8x32xf32>, vector<32x128xf32>, vector<8x128xf32> -> vector<8x128xf32>
    %138 = arith.addf %136, %137 : vector<8x128xf32>
    %139 = vector.broadcast %18 : vector<1x128xf32> to vector<8x128xf32>
    %140 = arith.addf %138, %139 : vector<8x128xf32>
    %141 = arith.negf %140 : vector<8x128xf32>
    %142 = math.exp %141 : vector<8x128xf32>
    %cst_63 = arith.constant 1.000000e+00 : f32
    %143 = vector.broadcast %cst_63 : f32 to vector<8x128xf32>
    %144 = arith.addf %143, %142 : vector<8x128xf32>
    %145 = arith.divf %143, %144 : vector<8x128xf32>
    %146 = vector.extract_strided_slice %145 {offsets = [0, 0], sizes = [8, 32], strides = [1, 1]} : vector<8x128xf32> to vector<8x32xf32>
    %147 = vector.extract_strided_slice %145 {offsets = [0, 32], sizes = [8, 32], strides = [1, 1]} : vector<8x128xf32> to vector<8x32xf32>
    %148 = vector.extract_strided_slice %145 {offsets = [0, 96], sizes = [8, 32], strides = [1, 1]} : vector<8x128xf32> to vector<8x32xf32>
    %149 = vector.extract_strided_slice %145 {offsets = [0, 64], sizes = [8, 32], strides = [1, 1]} : vector<8x128xf32> to vector<8x32xf32>
    %cst_64 = arith.constant 2.000000e+00 : f32
    %150 = vector.broadcast %cst_64 : f32 to vector<8x32xf32>
    %151 = arith.mulf %150, %149 : vector<8x32xf32>
    %cst_65 = arith.constant 1.000000e+00 : f32
    %152 = vector.broadcast %cst_65 : f32 to vector<8x32xf32>
    %153 = arith.subf %151, %152 : vector<8x32xf32>
    %154 = arith.mulf %147, %75 : vector<8x32xf32>
    %155 = arith.mulf %146, %153 : vector<8x32xf32>
    %156 = arith.addf %154, %155 : vector<8x32xf32>
    %157 = math.tanh %156 : vector<8x32xf32>
    %158 = arith.mulf %148, %157 : vector<8x32xf32>
    %cst_66 = arith.constant dense<0.000000e+00> : vector<8x128xf32>
    %159 = tpu.matmul %158, %19, %cst_66 {dimension_numbers = #tpu.dot_dimension_numbers<[1], [0], [0], [1], [0, 0, 1, 1], [], []>} : vector<8x32xf32>, vector<32x128xf32>, vector<8x128xf32> -> vector<8x128xf32>
    %160 = vector.broadcast %20 : vector<1x128xf32> to vector<8x128xf32>
    %161 = arith.addf %159, %160 : vector<8x128xf32>
    %162 = arith.index_cast %c1_i32 : i32 to index
    %c0_67 = arith.constant 0 : index
    %c0_68 = arith.constant 0 : index
    %163 = vector.load %arg15[%162, %c0_67, %c0_68] : memref<7x8x128xf32, #tpu.memory_space<vmem>>, vector<1x8x128xf32>
    %164 = vector.shape_cast %163 : vector<1x8x128xf32> to vector<8x128xf32>
    %165 = vector.shape_cast %161 : vector<8x128xf32> to vector<1x8x128xf32>
    tpu.vector_store %arg15[%162, %c0_67, %c0_68], %165 {strides = array<i32>} : memref<7x8x128xf32, #tpu.memory_space<vmem>>, vector<1x8x128xf32>,
    %166 = tpu.iota {dimensions = array<i32: 1>} : vector<8x128xi32>
    %167 = arith.sitofp %166 : vector<8x128xi32> to vector<8x128xf32>
    %cst_69 = arith.constant dense<0xFF800000> : vector<8xf32>
    %168 = vector.multi_reduction <maximumf>, %161, %cst_69 [1] : vector<8x128xf32> to vector<8xf32>
    %169 = vector.shape_cast %168 : vector<8xf32> to vector<8x1xf32>
    %170 = vector.broadcast %169 : vector<8x1xf32> to vector<8x128xf32>
    %171 = arith.cmpf oeq, %161, %170 : vector<8x128xf32>
    %cst_70 = arith.constant 0.000000e+00 : f32
    %172 = vector.broadcast %cst_70 : f32 to vector<8x128xf32>
    %173 = arith.subf %172, %167 : vector<8x128xf32>
    %cst_71 = arith.constant 0.000000e+00 : f32
    %cst_72 = arith.constant 1.280000e+02 : f32
    %174 = arith.subf %cst_71, %cst_72 : f32
    %175 = vector.broadcast %174 : f32 to vector<8x128xf32>
    %176 = arith.select %171, %173, %175 : vector<8x128xi1>, vector<8x128xf32>
    %cst_73 = arith.constant dense<0xFF800000> : vector<8xf32>
    %177 = vector.multi_reduction <maximumf>, %176, %cst_73 [1] : vector<8x128xf32> to vector<8xf32>
    %178 = vector.shape_cast %177 : vector<8xf32> to vector<8x1xf32>
    %cst_74 = arith.constant 0.000000e+00 : f32
    %179 = vector.broadcast %cst_74 : f32 to vector<8x1xf32>
    %180 = arith.subf %179, %178 : vector<8x1xf32>
    %181 = vector.broadcast %180 : vector<8x1xf32> to vector<8x128xf32>
    %182 = arith.cmpf oeq, %167, %181 : vector<8x128xf32>
    %183 = arith.extui %182 : vector<8x128xi1> to vector<8x128xi32>
    %184 = arith.sitofp %183 : vector<8x128xi32> to vector<8x128xf32>
    %c2_i32 = arith.constant 2 : i32
    %c0_i32_75 = arith.constant 0 : i32
    %185 = arith.cmpi eq, %c2_i32, %c0_i32_75 : i32
    %186 = arith.index_cast %c2_i32 : i32 to index
    %187 = memref.load %arg0[%186] : memref<7xi32, #tpu.memory_space<smem>>
    %c0_i32_76 = arith.constant 0 : i32
    %188 = arith.cmpi ne, %187, %c0_i32_76 : i32
    %189 = arith.ori %185, %188 : i1
    %190 = arith.index_cast %c2_i32 : i32 to index
    %c0_77 = arith.constant 0 : index
    %c0_78 = arith.constant 0 : index
    %191 = vector.load %arg2[%190, %c0_77, %c0_78] : memref<7x8x128xf32, #tpu.memory_space<vmem>>, vector<1x8x128xf32>
    %192 = vector.shape_cast %191 : vector<1x8x128xf32> to vector<8x128xf32>
    %193 = arith.select %189, %192, %184 : vector<8x128xf32>
    %cst_79 = arith.constant dense<0.000000e+00> : vector<8x128xf32>
    %194 = tpu.matmul %193, %13, %cst_79 {dimension_numbers = #tpu.dot_dimension_numbers<[1], [0], [0], [1], [0, 0, 1, 1], [], []>} : vector<8x128xf32>, vector<128x128xf32>, vector<8x128xf32> -> vector<8x128xf32>
    %cst_80 = arith.constant dense<0.000000e+00> : vector<8x128xf32>
    %195 = tpu.matmul %135, %14, %cst_80 {dimension_numbers = #tpu.dot_dimension_numbers<[1], [0], [0], [1], [0, 0, 1, 1], [], []>} : vector<8x32xf32>, vector<32x128xf32>, vector<8x128xf32> -> vector<8x128xf32>
    %196 = arith.addf %194, %195 : vector<8x128xf32>
    %197 = vector.broadcast %15 : vector<1x128xf32> to vector<8x128xf32>
    %198 = arith.addf %196, %197 : vector<8x128xf32>
    %199 = arith.negf %198 : vector<8x128xf32>
    %200 = math.exp %199 : vector<8x128xf32>
    %cst_81 = arith.constant 1.000000e+00 : f32
    %201 = vector.broadcast %cst_81 : f32 to vector<8x128xf32>
    %202 = arith.addf %201, %200 : vector<8x128xf32>
    %203 = arith.divf %201, %202 : vector<8x128xf32>
    %204 = vector.extract_strided_slice %203 {offsets = [0, 0], sizes = [8, 32], strides = [1, 1]} : vector<8x128xf32> to vector<8x32xf32>
    %205 = vector.extract_strided_slice %203 {offsets = [0, 32], sizes = [8, 32], strides = [1, 1]} : vector<8x128xf32> to vector<8x32xf32>
    %206 = vector.extract_strided_slice %203 {offsets = [0, 96], sizes = [8, 32], strides = [1, 1]} : vector<8x128xf32> to vector<8x32xf32>
    %207 = vector.extract_strided_slice %203 {offsets = [0, 64], sizes = [8, 32], strides = [1, 1]} : vector<8x128xf32> to vector<8x32xf32>
    %cst_82 = arith.constant 2.000000e+00 : f32
    %208 = vector.broadcast %cst_82 : f32 to vector<8x32xf32>
    %209 = arith.mulf %208, %207 : vector<8x32xf32>
    %cst_83 = arith.constant 1.000000e+00 : f32
    %210 = vector.broadcast %cst_83 : f32 to vector<8x32xf32>
    %211 = arith.subf %209, %210 : vector<8x32xf32>
    %212 = arith.mulf %205, %133 : vector<8x32xf32>
    %213 = arith.mulf %204, %211 : vector<8x32xf32>
    %214 = arith.addf %212, %213 : vector<8x32xf32>
    %215 = math.tanh %214 : vector<8x32xf32>
    %216 = arith.mulf %206, %215 : vector<8x32xf32>
    %cst_84 = arith.constant dense<0.000000e+00> : vector<8x128xf32>
    %217 = tpu.matmul %216, %16, %cst_84 {dimension_numbers = #tpu.dot_dimension_numbers<[1], [0], [0], [1], [0, 0, 1, 1], [], []>} : vector<8x32xf32>, vector<32x128xf32>, vector<8x128xf32> -> vector<8x128xf32>
    %cst_85 = arith.constant dense<0.000000e+00> : vector<8x128xf32>
    %218 = tpu.matmul %158, %17, %cst_85 {dimension_numbers = #tpu.dot_dimension_numbers<[1], [0], [0], [1], [0, 0, 1, 1], [], []>} : vector<8x32xf32>, vector<32x128xf32>, vector<8x128xf32> -> vector<8x128xf32>
    %219 = arith.addf %217, %218 : vector<8x128xf32>
    %220 = vector.broadcast %18 : vector<1x128xf32> to vector<8x128xf32>
    %221 = arith.addf %219, %220 : vector<8x128xf32>
    %222 = arith.negf %221 : vector<8x128xf32>
    %223 = math.exp %222 : vector<8x128xf32>
    %cst_86 = arith.constant 1.000000e+00 : f32
    %224 = vector.broadcast %cst_86 : f32 to vector<8x128xf32>
    %225 = arith.addf %224, %223 : vector<8x128xf32>
    %226 = arith.divf %224, %225 : vector<8x128xf32>
    %227 = vector.extract_strided_slice %226 {offsets = [0, 0], sizes = [8, 32], strides = [1, 1]} : vector<8x128xf32> to vector<8x32xf32>
    %228 = vector.extract_strided_slice %226 {offsets = [0, 32], sizes = [8, 32], strides = [1, 1]} : vector<8x128xf32> to vector<8x32xf32>
    %229 = vector.extract_strided_slice %226 {offsets = [0, 96], sizes = [8, 32], strides = [1, 1]} : vector<8x128xf32> to vector<8x32xf32>
    %230 = vector.extract_strided_slice %226 {offsets = [0, 64], sizes = [8, 32], strides = [1, 1]} : vector<8x128xf32> to vector<8x32xf32>
    %cst_87 = arith.constant 2.000000e+00 : f32
    %231 = vector.broadcast %cst_87 : f32 to vector<8x32xf32>
    %232 = arith.mulf %231, %230 : vector<8x32xf32>
    %cst_88 = arith.constant 1.000000e+00 : f32
    %233 = vector.broadcast %cst_88 : f32 to vector<8x32xf32>
    %234 = arith.subf %232, %233 : vector<8x32xf32>
    %235 = arith.mulf %228, %156 : vector<8x32xf32>
    %236 = arith.mulf %227, %234 : vector<8x32xf32>
    %237 = arith.addf %235, %236 : vector<8x32xf32>
    %238 = math.tanh %237 : vector<8x32xf32>
    %239 = arith.mulf %229, %238 : vector<8x32xf32>
    %cst_89 = arith.constant dense<0.000000e+00> : vector<8x128xf32>
    %240 = tpu.matmul %239, %19, %cst_89 {dimension_numbers = #tpu.dot_dimension_numbers<[1], [0], [0], [1], [0, 0, 1, 1], [], []>} : vector<8x32xf32>, vector<32x128xf32>, vector<8x128xf32> -> vector<8x128xf32>
    %241 = vector.broadcast %20 : vector<1x128xf32> to vector<8x128xf32>
    %242 = arith.addf %240, %241 : vector<8x128xf32>
    %243 = arith.index_cast %c2_i32 : i32 to index
    %c0_90 = arith.constant 0 : index
    %c0_91 = arith.constant 0 : index
    %244 = vector.load %arg15[%243, %c0_90, %c0_91] : memref<7x8x128xf32, #tpu.memory_space<vmem>>, vector<1x8x128xf32>
    %245 = vector.shape_cast %244 : vector<1x8x128xf32> to vector<8x128xf32>
    %246 = vector.shape_cast %242 : vector<8x128xf32> to vector<1x8x128xf32>
    tpu.vector_store %arg15[%243, %c0_90, %c0_91], %246 {strides = array<i32>} : memref<7x8x128xf32, #tpu.memory_space<vmem>>, vector<1x8x128xf32>,
    %247 = tpu.iota {dimensions = array<i32: 1>} : vector<8x128xi32>
    %248 = arith.sitofp %247 : vector<8x128xi32> to vector<8x128xf32>
    %cst_92 = arith.constant dense<0xFF800000> : vector<8xf32>
    %249 = vector.multi_reduction <maximumf>, %242, %cst_92 [1] : vector<8x128xf32> to vector<8xf32>
    %250 = vector.shape_cast %249 : vector<8xf32> to vector<8x1xf32>
    %251 = vector.broadcast %250 : vector<8x1xf32> to vector<8x128xf32>
    %252 = arith.cmpf oeq, %242, %251 : vector<8x128xf32>
    %cst_93 = arith.constant 0.000000e+00 : f32
    %253 = vector.broadcast %cst_93 : f32 to vector<8x128xf32>
    %254 = arith.subf %253, %248 : vector<8x128xf32>
    %cst_94 = arith.constant 0.000000e+00 : f32
    %cst_95 = arith.constant 1.280000e+02 : f32
    %255 = arith.subf %cst_94, %cst_95 : f32
    %256 = vector.broadcast %255 : f32 to vector<8x128xf32>
    %257 = arith.select %252, %254, %256 : vector<8x128xi1>, vector<8x128xf32>
    %cst_96 = arith.constant dense<0xFF800000> : vector<8xf32>
    %258 = vector.multi_reduction <maximumf>, %257, %cst_96 [1] : vector<8x128xf32> to vector<8xf32>
    %259 = vector.shape_cast %258 : vector<8xf32> to vector<8x1xf32>
    %cst_97 = arith.constant 0.000000e+00 : f32
    %260 = vector.broadcast %cst_97 : f32 to vector<8x1xf32>
    %261 = arith.subf %260, %259 : vector<8x1xf32>
    %262 = vector.broadcast %261 : vector<8x1xf32> to vector<8x128xf32>
    %263 = arith.cmpf oeq, %248, %262 : vector<8x128xf32>
    %264 = arith.extui %263 : vector<8x128xi1> to vector<8x128xi32>
    %265 = arith.sitofp %264 : vector<8x128xi32> to vector<8x128xf32>
    %c3_i32 = arith.constant 3 : i32
    %c0_i32_98 = arith.constant 0 : i32
    %266 = arith.cmpi eq, %c3_i32, %c0_i32_98 : i32
    %267 = arith.index_cast %c3_i32 : i32 to index
    %268 = memref.load %arg0[%267] : memref<7xi32, #tpu.memory_space<smem>>
    %c0_i32_99 = arith.constant 0 : i32
    %269 = arith.cmpi ne, %268, %c0_i32_99 : i32
    %270 = arith.ori %266, %269 : i1
    %271 = arith.index_cast %c3_i32 : i32 to index
    %c0_100 = arith.constant 0 : index
    %c0_101 = arith.constant 0 : index
    %272 = vector.load %arg2[%271, %c0_100, %c0_101] : memref<7x8x128xf32, #tpu.memory_space<vmem>>, vector<1x8x128xf32>
    %273 = vector.shape_cast %272 : vector<1x8x128xf32> to vector<8x128xf32>
    %274 = arith.select %270, %273, %265 : vector<8x128xf32>
    %cst_102 = arith.constant dense<0.000000e+00> : vector<8x128xf32>
    %275 = tpu.matmul %274, %13, %cst_102 {dimension_numbers = #tpu.dot_dimension_numbers<[1], [0], [0], [1], [0, 0, 1, 1], [], []>} : vector<8x128xf32>, vector<128x128xf32>, vector<8x128xf32> -> vector<8x128xf32>
    %cst_103 = arith.constant dense<0.000000e+00> : vector<8x128xf32>
    %276 = tpu.matmul %216, %14, %cst_103 {dimension_numbers = #tpu.dot_dimension_numbers<[1], [0], [0], [1], [0, 0, 1, 1], [], []>} : vector<8x32xf32>, vector<32x128xf32>, vector<8x128xf32> -> vector<8x128xf32>
    %277 = arith.addf %275, %276 : vector<8x128xf32>
    %278 = vector.broadcast %15 : vector<1x128xf32> to vector<8x128xf32>
    %279 = arith.addf %277, %278 : vector<8x128xf32>
    %280 = arith.negf %279 : vector<8x128xf32>
    %281 = math.exp %280 : vector<8x128xf32>
    %cst_104 = arith.constant 1.000000e+00 : f32
    %282 = vector.broadcast %cst_104 : f32 to vector<8x128xf32>
    %283 = arith.addf %282, %281 : vector<8x128xf32>
    %284 = arith.divf %282, %283 : vector<8x128xf32>
    %285 = vector.extract_strided_slice %284 {offsets = [0, 0], sizes = [8, 32], strides = [1, 1]} : vector<8x128xf32> to vector<8x32xf32>
    %286 = vector.extract_strided_slice %284 {offsets = [0, 32], sizes = [8, 32], strides = [1, 1]} : vector<8x128xf32> to vector<8x32xf32>
    %287 = vector.extract_strided_slice %284 {offsets = [0, 96], sizes = [8, 32], strides = [1, 1]} : vector<8x128xf32> to vector<8x32xf32>
    %288 = vector.extract_strided_slice %284 {offsets = [0, 64], sizes = [8, 32], strides = [1, 1]} : vector<8x128xf32> to vector<8x32xf32>
    %cst_105 = arith.constant 2.000000e+00 : f32
    %289 = vector.broadcast %cst_105 : f32 to vector<8x32xf32>
    %290 = arith.mulf %289, %288 : vector<8x32xf32>
    %cst_106 = arith.constant 1.000000e+00 : f32
    %291 = vector.broadcast %cst_106 : f32 to vector<8x32xf32>
    %292 = arith.subf %290, %291 : vector<8x32xf32>
    %293 = arith.mulf %286, %214 : vector<8x32xf32>
    %294 = arith.mulf %285, %292 : vector<8x32xf32>
    %295 = arith.addf %293, %294 : vector<8x32xf32>
    %296 = math.tanh %295 : vector<8x32xf32>
    %297 = arith.mulf %287, %296 : vector<8x32xf32>
    %cst_107 = arith.constant dense<0.000000e+00> : vector<8x128xf32>
    %298 = tpu.matmul %297, %16, %cst_107 {dimension_numbers = #tpu.dot_dimension_numbers<[1], [0], [0], [1], [0, 0, 1, 1], [], []>} : vector<8x32xf32>, vector<32x128xf32>, vector<8x128xf32> -> vector<8x128xf32>
    %cst_108 = arith.constant dense<0.000000e+00> : vector<8x128xf32>
    %299 = tpu.matmul %239, %17, %cst_108 {dimension_numbers = #tpu.dot_dimension_numbers<[1], [0], [0], [1], [0, 0, 1, 1], [], []>} : vector<8x32xf32>, vector<32x128xf32>, vector<8x128xf32> -> vector<8x128xf32>
    %300 = arith.addf %298, %299 : vector<8x128xf32>
    %301 = vector.broadcast %18 : vector<1x128xf32> to vector<8x128xf32>
    %302 = arith.addf %300, %301 : vector<8x128xf32>
    %303 = arith.negf %302 : vector<8x128xf32>
    %304 = math.exp %303 : vector<8x128xf32>
    %cst_109 = arith.constant 1.000000e+00 : f32
    %305 = vector.broadcast %cst_109 : f32 to vector<8x128xf32>
    %306 = arith.addf %305, %304 : vector<8x128xf32>
    %307 = arith.divf %305, %306 : vector<8x128xf32>
    %308 = vector.extract_strided_slice %307 {offsets = [0, 0], sizes = [8, 32], strides = [1, 1]} : vector<8x128xf32> to vector<8x32xf32>
    %309 = vector.extract_strided_slice %307 {offsets = [0, 32], sizes = [8, 32], strides = [1, 1]} : vector<8x128xf32> to vector<8x32xf32>
    %310 = vector.extract_strided_slice %307 {offsets = [0, 96], sizes = [8, 32], strides = [1, 1]} : vector<8x128xf32> to vector<8x32xf32>
    %311 = vector.extract_strided_slice %307 {offsets = [0, 64], sizes = [8, 32], strides = [1, 1]} : vector<8x128xf32> to vector<8x32xf32>
    %cst_110 = arith.constant 2.000000e+00 : f32
    %312 = vector.broadcast %cst_110 : f32 to vector<8x32xf32>
    %313 = arith.mulf %312, %311 : vector<8x32xf32>
    %cst_111 = arith.constant 1.000000e+00 : f32
    %314 = vector.broadcast %cst_111 : f32 to vector<8x32xf32>
    %315 = arith.subf %313, %314 : vector<8x32xf32>
    %316 = arith.mulf %309, %237 : vector<8x32xf32>
    %317 = arith.mulf %308, %315 : vector<8x32xf32>
    %318 = arith.addf %316, %317 : vector<8x32xf32>
    %319 = math.tanh %318 : vector<8x32xf32>
    %320 = arith.mulf %310, %319 : vector<8x32xf32>
    %cst_112 = arith.constant dense<0.000000e+00> : vector<8x128xf32>
    %321 = tpu.matmul %320, %19, %cst_112 {dimension_numbers = #tpu.dot_dimension_numbers<[1], [0], [0], [1], [0, 0, 1, 1], [], []>} : vector<8x32xf32>, vector<32x128xf32>, vector<8x128xf32> -> vector<8x128xf32>
    %322 = vector.broadcast %20 : vector<1x128xf32> to vector<8x128xf32>
    %323 = arith.addf %321, %322 : vector<8x128xf32>
    %324 = arith.index_cast %c3_i32 : i32 to index
    %c0_113 = arith.constant 0 : index
    %c0_114 = arith.constant 0 : index
    %325 = vector.load %arg15[%324, %c0_113, %c0_114] : memref<7x8x128xf32, #tpu.memory_space<vmem>>, vector<1x8x128xf32>
    %326 = vector.shape_cast %325 : vector<1x8x128xf32> to vector<8x128xf32>
    %327 = vector.shape_cast %323 : vector<8x128xf32> to vector<1x8x128xf32>
    tpu.vector_store %arg15[%324, %c0_113, %c0_114], %327 {strides = array<i32>} : memref<7x8x128xf32, #tpu.memory_space<vmem>>, vector<1x8x128xf32>,
    %328 = tpu.iota {dimensions = array<i32: 1>} : vector<8x128xi32>
    %329 = arith.sitofp %328 : vector<8x128xi32> to vector<8x128xf32>
    %cst_115 = arith.constant dense<0xFF800000> : vector<8xf32>
    %330 = vector.multi_reduction <maximumf>, %323, %cst_115 [1] : vector<8x128xf32> to vector<8xf32>
    %331 = vector.shape_cast %330 : vector<8xf32> to vector<8x1xf32>
    %332 = vector.broadcast %331 : vector<8x1xf32> to vector<8x128xf32>
    %333 = arith.cmpf oeq, %323, %332 : vector<8x128xf32>
    %cst_116 = arith.constant 0.000000e+00 : f32
    %334 = vector.broadcast %cst_116 : f32 to vector<8x128xf32>
    %335 = arith.subf %334, %329 : vector<8x128xf32>
    %cst_117 = arith.constant 0.000000e+00 : f32
    %cst_118 = arith.constant 1.280000e+02 : f32
    %336 = arith.subf %cst_117, %cst_118 : f32
    %337 = vector.broadcast %336 : f32 to vector<8x128xf32>
    %338 = arith.select %333, %335, %337 : vector<8x128xi1>, vector<8x128xf32>
    %cst_119 = arith.constant dense<0xFF800000> : vector<8xf32>
    %339 = vector.multi_reduction <maximumf>, %338, %cst_119 [1] : vector<8x128xf32> to vector<8xf32>
    %340 = vector.shape_cast %339 : vector<8xf32> to vector<8x1xf32>
    %cst_120 = arith.constant 0.000000e+00 : f32
    %341 = vector.broadcast %cst_120 : f32 to vector<8x1xf32>
    %342 = arith.subf %341, %340 : vector<8x1xf32>
    %343 = vector.broadcast %342 : vector<8x1xf32> to vector<8x128xf32>
    %344 = arith.cmpf oeq, %329, %343 : vector<8x128xf32>
    %345 = arith.extui %344 : vector<8x128xi1> to vector<8x128xi32>
    %346 = arith.sitofp %345 : vector<8x128xi32> to vector<8x128xf32>
    %c4_i32 = arith.constant 4 : i32
    %c0_i32_121 = arith.constant 0 : i32
    %347 = arith.cmpi eq, %c4_i32, %c0_i32_121 : i32
    %348 = arith.index_cast %c4_i32 : i32 to index
    %349 = memref.load %arg0[%348] : memref<7xi32, #tpu.memory_space<smem>>
    %c0_i32_122 = arith.constant 0 : i32
    %350 = arith.cmpi ne, %349, %c0_i32_122 : i32
    %351 = arith.ori %347, %350 : i1
    %352 = arith.index_cast %c4_i32 : i32 to index
    %c0_123 = arith.constant 0 : index
    %c0_124 = arith.constant 0 : index
    %353 = vector.load %arg2[%352, %c0_123, %c0_124] : memref<7x8x128xf32, #tpu.memory_space<vmem>>, vector<1x8x128xf32>
    %354 = vector.shape_cast %353 : vector<1x8x128xf32> to vector<8x128xf32>
    %355 = arith.select %351, %354, %346 : vector<8x128xf32>
    %cst_125 = arith.constant dense<0.000000e+00> : vector<8x128xf32>
    %356 = tpu.matmul %355, %13, %cst_125 {dimension_numbers = #tpu.dot_dimension_numbers<[1], [0], [0], [1], [0, 0, 1, 1], [], []>} : vector<8x128xf32>, vector<128x128xf32>, vector<8x128xf32> -> vector<8x128xf32>
    %cst_126 = arith.constant dense<0.000000e+00> : vector<8x128xf32>
    %357 = tpu.matmul %297, %14, %cst_126 {dimension_numbers = #tpu.dot_dimension_numbers<[1], [0], [0], [1], [0, 0, 1, 1], [], []>} : vector<8x32xf32>, vector<32x128xf32>, vector<8x128xf32> -> vector<8x128xf32>
    %358 = arith.addf %356, %357 : vector<8x128xf32>
    %359 = vector.broadcast %15 : vector<1x128xf32> to vector<8x128xf32>
    %360 = arith.addf %358, %359 : vector<8x128xf32>
    %361 = arith.negf %360 : vector<8x128xf32>
    %362 = math.exp %361 : vector<8x128xf32>
    %cst_127 = arith.constant 1.000000e+00 : f32
    %363 = vector.broadcast %cst_127 : f32 to vector<8x128xf32>
    %364 = arith.addf %363, %362 : vector<8x128xf32>
    %365 = arith.divf %363, %364 : vector<8x128xf32>
    %366 = vector.extract_strided_slice %365 {offsets = [0, 0], sizes = [8, 32], strides = [1, 1]} : vector<8x128xf32> to vector<8x32xf32>
    %367 = vector.extract_strided_slice %365 {offsets = [0, 32], sizes = [8, 32], strides = [1, 1]} : vector<8x128xf32> to vector<8x32xf32>
    %368 = vector.extract_strided_slice %365 {offsets = [0, 96], sizes = [8, 32], strides = [1, 1]} : vector<8x128xf32> to vector<8x32xf32>
    %369 = vector.extract_strided_slice %365 {offsets = [0, 64], sizes = [8, 32], strides = [1, 1]} : vector<8x128xf32> to vector<8x32xf32>
    %cst_128 = arith.constant 2.000000e+00 : f32
    %370 = vector.broadcast %cst_128 : f32 to vector<8x32xf32>
    %371 = arith.mulf %370, %369 : vector<8x32xf32>
    %cst_129 = arith.constant 1.000000e+00 : f32
    %372 = vector.broadcast %cst_129 : f32 to vector<8x32xf32>
    %373 = arith.subf %371, %372 : vector<8x32xf32>
    %374 = arith.mulf %367, %295 : vector<8x32xf32>
    %375 = arith.mulf %366, %373 : vector<8x32xf32>
    %376 = arith.addf %374, %375 : vector<8x32xf32>
    %377 = math.tanh %376 : vector<8x32xf32>
    %378 = arith.mulf %368, %377 : vector<8x32xf32>
    %cst_130 = arith.constant dense<0.000000e+00> : vector<8x128xf32>
    %379 = tpu.matmul %378, %16, %cst_130 {dimension_numbers = #tpu.dot_dimension_numbers<[1], [0], [0], [1], [0, 0, 1, 1], [], []>} : vector<8x32xf32>, vector<32x128xf32>, vector<8x128xf32> -> vector<8x128xf32>
    %cst_131 = arith.constant dense<0.000000e+00> : vector<8x128xf32>
    %380 = tpu.matmul %320, %17, %cst_131 {dimension_numbers = #tpu.dot_dimension_numbers<[1], [0], [0], [1], [0, 0, 1, 1], [], []>} : vector<8x32xf32>, vector<32x128xf32>, vector<8x128xf32> -> vector<8x128xf32>
    %381 = arith.addf %379, %380 : vector<8x128xf32>
    %382 = vector.broadcast %18 : vector<1x128xf32> to vector<8x128xf32>
    %383 = arith.addf %381, %382 : vector<8x128xf32>
    %384 = arith.negf %383 : vector<8x128xf32>
    %385 = math.exp %384 : vector<8x128xf32>
    %cst_132 = arith.constant 1.000000e+00 : f32
    %386 = vector.broadcast %cst_132 : f32 to vector<8x128xf32>
    %387 = arith.addf %386, %385 : vector<8x128xf32>
    %388 = arith.divf %386, %387 : vector<8x128xf32>
    %389 = vector.extract_strided_slice %388 {offsets = [0, 0], sizes = [8, 32], strides = [1, 1]} : vector<8x128xf32> to vector<8x32xf32>
    %390 = vector.extract_strided_slice %388 {offsets = [0, 32], sizes = [8, 32], strides = [1, 1]} : vector<8x128xf32> to vector<8x32xf32>
    %391 = vector.extract_strided_slice %388 {offsets = [0, 96], sizes = [8, 32], strides = [1, 1]} : vector<8x128xf32> to vector<8x32xf32>
    %392 = vector.extract_strided_slice %388 {offsets = [0, 64], sizes = [8, 32], strides = [1, 1]} : vector<8x128xf32> to vector<8x32xf32>
    %cst_133 = arith.constant 2.000000e+00 : f32
    %393 = vector.broadcast %cst_133 : f32 to vector<8x32xf32>
    %394 = arith.mulf %393, %392 : vector<8x32xf32>
    %cst_134 = arith.constant 1.000000e+00 : f32
    %395 = vector.broadcast %cst_134 : f32 to vector<8x32xf32>
    %396 = arith.subf %394, %395 : vector<8x32xf32>
    %397 = arith.mulf %390, %318 : vector<8x32xf32>
    %398 = arith.mulf %389, %396 : vector<8x32xf32>
    %399 = arith.addf %397, %398 : vector<8x32xf32>
    %400 = math.tanh %399 : vector<8x32xf32>
    %401 = arith.mulf %391, %400 : vector<8x32xf32>
    %cst_135 = arith.constant dense<0.000000e+00> : vector<8x128xf32>
    %402 = tpu.matmul %401, %19, %cst_135 {dimension_numbers = #tpu.dot_dimension_numbers<[1], [0], [0], [1], [0, 0, 1, 1], [], []>} : vector<8x32xf32>, vector<32x128xf32>, vector<8x128xf32> -> vector<8x128xf32>
    %403 = vector.broadcast %20 : vector<1x128xf32> to vector<8x128xf32>
    %404 = arith.addf %402, %403 : vector<8x128xf32>
    %405 = arith.index_cast %c4_i32 : i32 to index
    %c0_136 = arith.constant 0 : index
    %c0_137 = arith.constant 0 : index
    %406 = vector.load %arg15[%405, %c0_136, %c0_137] : memref<7x8x128xf32, #tpu.memory_space<vmem>>, vector<1x8x128xf32>
    %407 = vector.shape_cast %406 : vector<1x8x128xf32> to vector<8x128xf32>
    %408 = vector.shape_cast %404 : vector<8x128xf32> to vector<1x8x128xf32>
    tpu.vector_store %arg15[%405, %c0_136, %c0_137], %408 {strides = array<i32>} : memref<7x8x128xf32, #tpu.memory_space<vmem>>, vector<1x8x128xf32>,
    %409 = tpu.iota {dimensions = array<i32: 1>} : vector<8x128xi32>
    %410 = arith.sitofp %409 : vector<8x128xi32> to vector<8x128xf32>
    %cst_138 = arith.constant dense<0xFF800000> : vector<8xf32>
    %411 = vector.multi_reduction <maximumf>, %404, %cst_138 [1] : vector<8x128xf32> to vector<8xf32>
    %412 = vector.shape_cast %411 : vector<8xf32> to vector<8x1xf32>
    %413 = vector.broadcast %412 : vector<8x1xf32> to vector<8x128xf32>
    %414 = arith.cmpf oeq, %404, %413 : vector<8x128xf32>
    %cst_139 = arith.constant 0.000000e+00 : f32
    %415 = vector.broadcast %cst_139 : f32 to vector<8x128xf32>
    %416 = arith.subf %415, %410 : vector<8x128xf32>
    %cst_140 = arith.constant 0.000000e+00 : f32
    %cst_141 = arith.constant 1.280000e+02 : f32
    %417 = arith.subf %cst_140, %cst_141 : f32
    %418 = vector.broadcast %417 : f32 to vector<8x128xf32>
    %419 = arith.select %414, %416, %418 : vector<8x128xi1>, vector<8x128xf32>
    %cst_142 = arith.constant dense<0xFF800000> : vector<8xf32>
    %420 = vector.multi_reduction <maximumf>, %419, %cst_142 [1] : vector<8x128xf32> to vector<8xf32>
    %421 = vector.shape_cast %420 : vector<8xf32> to vector<8x1xf32>
    %cst_143 = arith.constant 0.000000e+00 : f32
    %422 = vector.broadcast %cst_143 : f32 to vector<8x1xf32>
    %423 = arith.subf %422, %421 : vector<8x1xf32>
    %424 = vector.broadcast %423 : vector<8x1xf32> to vector<8x128xf32>
    %425 = arith.cmpf oeq, %410, %424 : vector<8x128xf32>
    %426 = arith.extui %425 : vector<8x128xi1> to vector<8x128xi32>
    %427 = arith.sitofp %426 : vector<8x128xi32> to vector<8x128xf32>
    %c5_i32 = arith.constant 5 : i32
    %c0_i32_144 = arith.constant 0 : i32
    %428 = arith.cmpi eq, %c5_i32, %c0_i32_144 : i32
    %429 = arith.index_cast %c5_i32 : i32 to index
    %430 = memref.load %arg0[%429] : memref<7xi32, #tpu.memory_space<smem>>
    %c0_i32_145 = arith.constant 0 : i32
    %431 = arith.cmpi ne, %430, %c0_i32_145 : i32
    %432 = arith.ori %428, %431 : i1
    %433 = arith.index_cast %c5_i32 : i32 to index
    %c0_146 = arith.constant 0 : index
    %c0_147 = arith.constant 0 : index
    %434 = vector.load %arg2[%433, %c0_146, %c0_147] : memref<7x8x128xf32, #tpu.memory_space<vmem>>, vector<1x8x128xf32>
    %435 = vector.shape_cast %434 : vector<1x8x128xf32> to vector<8x128xf32>
    %436 = arith.select %432, %435, %427 : vector<8x128xf32>
    %cst_148 = arith.constant dense<0.000000e+00> : vector<8x128xf32>
    %437 = tpu.matmul %436, %13, %cst_148 {dimension_numbers = #tpu.dot_dimension_numbers<[1], [0], [0], [1], [0, 0, 1, 1], [], []>} : vector<8x128xf32>, vector<128x128xf32>, vector<8x128xf32> -> vector<8x128xf32>
    %cst_149 = arith.constant dense<0.000000e+00> : vector<8x128xf32>
    %438 = tpu.matmul %378, %14, %cst_149 {dimension_numbers = #tpu.dot_dimension_numbers<[1], [0], [0], [1], [0, 0, 1, 1], [], []>} : vector<8x32xf32>, vector<32x128xf32>, vector<8x128xf32> -> vector<8x128xf32>
    %439 = arith.addf %437, %438 : vector<8x128xf32>
    %440 = vector.broadcast %15 : vector<1x128xf32> to vector<8x128xf32>
    %441 = arith.addf %439, %440 : vector<8x128xf32>
    %442 = arith.negf %441 : vector<8x128xf32>
    %443 = math.exp %442 : vector<8x128xf32>
    %cst_150 = arith.constant 1.000000e+00 : f32
    %444 = vector.broadcast %cst_150 : f32 to vector<8x128xf32>
    %445 = arith.addf %444, %443 : vector<8x128xf32>
    %446 = arith.divf %444, %445 : vector<8x128xf32>
    %447 = vector.extract_strided_slice %446 {offsets = [0, 0], sizes = [8, 32], strides = [1, 1]} : vector<8x128xf32> to vector<8x32xf32>
    %448 = vector.extract_strided_slice %446 {offsets = [0, 32], sizes = [8, 32], strides = [1, 1]} : vector<8x128xf32> to vector<8x32xf32>
    %449 = vector.extract_strided_slice %446 {offsets = [0, 96], sizes = [8, 32], strides = [1, 1]} : vector<8x128xf32> to vector<8x32xf32>
    %450 = vector.extract_strided_slice %446 {offsets = [0, 64], sizes = [8, 32], strides = [1, 1]} : vector<8x128xf32> to vector<8x32xf32>
    %cst_151 = arith.constant 2.000000e+00 : f32
    %451 = vector.broadcast %cst_151 : f32 to vector<8x32xf32>
    %452 = arith.mulf %451, %450 : vector<8x32xf32>
    %cst_152 = arith.constant 1.000000e+00 : f32
    %453 = vector.broadcast %cst_152 : f32 to vector<8x32xf32>
    %454 = arith.subf %452, %453 : vector<8x32xf32>
    %455 = arith.mulf %448, %376 : vector<8x32xf32>
    %456 = arith.mulf %447, %454 : vector<8x32xf32>
    %457 = arith.addf %455, %456 : vector<8x32xf32>
    %458 = math.tanh %457 : vector<8x32xf32>
    %459 = arith.mulf %449, %458 : vector<8x32xf32>
    %cst_153 = arith.constant dense<0.000000e+00> : vector<8x128xf32>
    %460 = tpu.matmul %459, %16, %cst_153 {dimension_numbers = #tpu.dot_dimension_numbers<[1], [0], [0], [1], [0, 0, 1, 1], [], []>} : vector<8x32xf32>, vector<32x128xf32>, vector<8x128xf32> -> vector<8x128xf32>
    %cst_154 = arith.constant dense<0.000000e+00> : vector<8x128xf32>
    %461 = tpu.matmul %401, %17, %cst_154 {dimension_numbers = #tpu.dot_dimension_numbers<[1], [0], [0], [1], [0, 0, 1, 1], [], []>} : vector<8x32xf32>, vector<32x128xf32>, vector<8x128xf32> -> vector<8x128xf32>
    %462 = arith.addf %460, %461 : vector<8x128xf32>
    %463 = vector.broadcast %18 : vector<1x128xf32> to vector<8x128xf32>
    %464 = arith.addf %462, %463 : vector<8x128xf32>
    %465 = arith.negf %464 : vector<8x128xf32>
    %466 = math.exp %465 : vector<8x128xf32>
    %cst_155 = arith.constant 1.000000e+00 : f32
    %467 = vector.broadcast %cst_155 : f32 to vector<8x128xf32>
    %468 = arith.addf %467, %466 : vector<8x128xf32>
    %469 = arith.divf %467, %468 : vector<8x128xf32>
    %470 = vector.extract_strided_slice %469 {offsets = [0, 0], sizes = [8, 32], strides = [1, 1]} : vector<8x128xf32> to vector<8x32xf32>
    %471 = vector.extract_strided_slice %469 {offsets = [0, 32], sizes = [8, 32], strides = [1, 1]} : vector<8x128xf32> to vector<8x32xf32>
    %472 = vector.extract_strided_slice %469 {offsets = [0, 96], sizes = [8, 32], strides = [1, 1]} : vector<8x128xf32> to vector<8x32xf32>
    %473 = vector.extract_strided_slice %469 {offsets = [0, 64], sizes = [8, 32], strides = [1, 1]} : vector<8x128xf32> to vector<8x32xf32>
    %cst_156 = arith.constant 2.000000e+00 : f32
    %474 = vector.broadcast %cst_156 : f32 to vector<8x32xf32>
    %475 = arith.mulf %474, %473 : vector<8x32xf32>
    %cst_157 = arith.constant 1.000000e+00 : f32
    %476 = vector.broadcast %cst_157 : f32 to vector<8x32xf32>
    %477 = arith.subf %475, %476 : vector<8x32xf32>
    %478 = arith.mulf %471, %399 : vector<8x32xf32>
    %479 = arith.mulf %470, %477 : vector<8x32xf32>
    %480 = arith.addf %478, %479 : vector<8x32xf32>
    %481 = math.tanh %480 : vector<8x32xf32>
    %482 = arith.mulf %472, %481 : vector<8x32xf32>
    %cst_158 = arith.constant dense<0.000000e+00> : vector<8x128xf32>
    %483 = tpu.matmul %482, %19, %cst_158 {dimension_numbers = #tpu.dot_dimension_numbers<[1], [0], [0], [1], [0, 0, 1, 1], [], []>} : vector<8x32xf32>, vector<32x128xf32>, vector<8x128xf32> -> vector<8x128xf32>
    %484 = vector.broadcast %20 : vector<1x128xf32> to vector<8x128xf32>
    %485 = arith.addf %483, %484 : vector<8x128xf32>
    %486 = arith.index_cast %c5_i32 : i32 to index
    %c0_159 = arith.constant 0 : index
    %c0_160 = arith.constant 0 : index
    %487 = vector.load %arg15[%486, %c0_159, %c0_160] : memref<7x8x128xf32, #tpu.memory_space<vmem>>, vector<1x8x128xf32>
    %488 = vector.shape_cast %487 : vector<1x8x128xf32> to vector<8x128xf32>
    %489 = vector.shape_cast %485 : vector<8x128xf32> to vector<1x8x128xf32>
    tpu.vector_store %arg15[%486, %c0_159, %c0_160], %489 {strides = array<i32>} : memref<7x8x128xf32, #tpu.memory_space<vmem>>, vector<1x8x128xf32>,
    %490 = tpu.iota {dimensions = array<i32: 1>} : vector<8x128xi32>
    %491 = arith.sitofp %490 : vector<8x128xi32> to vector<8x128xf32>
    %cst_161 = arith.constant dense<0xFF800000> : vector<8xf32>
    %492 = vector.multi_reduction <maximumf>, %485, %cst_161 [1] : vector<8x128xf32> to vector<8xf32>
    %493 = vector.shape_cast %492 : vector<8xf32> to vector<8x1xf32>
    %494 = vector.broadcast %493 : vector<8x1xf32> to vector<8x128xf32>
    %495 = arith.cmpf oeq, %485, %494 : vector<8x128xf32>
    %cst_162 = arith.constant 0.000000e+00 : f32
    %496 = vector.broadcast %cst_162 : f32 to vector<8x128xf32>
    %497 = arith.subf %496, %491 : vector<8x128xf32>
    %cst_163 = arith.constant 0.000000e+00 : f32
    %cst_164 = arith.constant 1.280000e+02 : f32
    %498 = arith.subf %cst_163, %cst_164 : f32
    %499 = vector.broadcast %498 : f32 to vector<8x128xf32>
    %500 = arith.select %495, %497, %499 : vector<8x128xi1>, vector<8x128xf32>
    %cst_165 = arith.constant dense<0xFF800000> : vector<8xf32>
    %501 = vector.multi_reduction <maximumf>, %500, %cst_165 [1] : vector<8x128xf32> to vector<8xf32>
    %502 = vector.shape_cast %501 : vector<8xf32> to vector<8x1xf32>
    %cst_166 = arith.constant 0.000000e+00 : f32
    %503 = vector.broadcast %cst_166 : f32 to vector<8x1xf32>
    %504 = arith.subf %503, %502 : vector<8x1xf32>
    %505 = vector.broadcast %504 : vector<8x1xf32> to vector<8x128xf32>
    %506 = arith.cmpf oeq, %491, %505 : vector<8x128xf32>
    %507 = arith.extui %506 : vector<8x128xi1> to vector<8x128xi32>
    %508 = arith.sitofp %507 : vector<8x128xi32> to vector<8x128xf32>
    %c6_i32 = arith.constant 6 : i32
    %c0_i32_167 = arith.constant 0 : i32
    %509 = arith.cmpi eq, %c6_i32, %c0_i32_167 : i32
    %510 = arith.index_cast %c6_i32 : i32 to index
    %511 = memref.load %arg0[%510] : memref<7xi32, #tpu.memory_space<smem>>
    %c0_i32_168 = arith.constant 0 : i32
    %512 = arith.cmpi ne, %511, %c0_i32_168 : i32
    %513 = arith.ori %509, %512 : i1
    %514 = arith.index_cast %c6_i32 : i32 to index
    %c0_169 = arith.constant 0 : index
    %c0_170 = arith.constant 0 : index
    %515 = vector.load %arg2[%514, %c0_169, %c0_170] : memref<7x8x128xf32, #tpu.memory_space<vmem>>, vector<1x8x128xf32>
    %516 = vector.shape_cast %515 : vector<1x8x128xf32> to vector<8x128xf32>
    %517 = arith.select %513, %516, %508 : vector<8x128xf32>
    %cst_171 = arith.constant dense<0.000000e+00> : vector<8x128xf32>
    %518 = tpu.matmul %517, %13, %cst_171 {dimension_numbers = #tpu.dot_dimension_numbers<[1], [0], [0], [1], [0, 0, 1, 1], [], []>} : vector<8x128xf32>, vector<128x128xf32>, vector<8x128xf32> -> vector<8x128xf32>
    %cst_172 = arith.constant dense<0.000000e+00> : vector<8x128xf32>
    %519 = tpu.matmul %459, %14, %cst_172 {dimension_numbers = #tpu.dot_dimension_numbers<[1], [0], [0], [1], [0, 0, 1, 1], [], []>} : vector<8x32xf32>, vector<32x128xf32>, vector<8x128xf32> -> vector<8x128xf32>
    %520 = arith.addf %518, %519 : vector<8x128xf32>
    %521 = vector.broadcast %15 : vector<1x128xf32> to vector<8x128xf32>
    %522 = arith.addf %520, %521 : vector<8x128xf32>
    %523 = arith.negf %522 : vector<8x128xf32>
    %524 = math.exp %523 : vector<8x128xf32>
    %cst_173 = arith.constant 1.000000e+00 : f32
    %525 = vector.broadcast %cst_173 : f32 to vector<8x128xf32>
    %526 = arith.addf %525, %524 : vector<8x128xf32>
    %527 = arith.divf %525, %526 : vector<8x128xf32>
    %528 = vector.extract_strided_slice %527 {offsets = [0, 0], sizes = [8, 32], strides = [1, 1]} : vector<8x128xf32> to vector<8x32xf32>
    %529 = vector.extract_strided_slice %527 {offsets = [0, 32], sizes = [8, 32], strides = [1, 1]} : vector<8x128xf32> to vector<8x32xf32>
    %530 = vector.extract_strided_slice %527 {offsets = [0, 96], sizes = [8, 32], strides = [1, 1]} : vector<8x128xf32> to vector<8x32xf32>
    %531 = vector.extract_strided_slice %527 {offsets = [0, 64], sizes = [8, 32], strides = [1, 1]} : vector<8x128xf32> to vector<8x32xf32>
    %cst_174 = arith.constant 2.000000e+00 : f32
    %532 = vector.broadcast %cst_174 : f32 to vector<8x32xf32>
    %533 = arith.mulf %532, %531 : vector<8x32xf32>
    %cst_175 = arith.constant 1.000000e+00 : f32
    %534 = vector.broadcast %cst_175 : f32 to vector<8x32xf32>
    %535 = arith.subf %533, %534 : vector<8x32xf32>
    %536 = arith.mulf %529, %457 : vector<8x32xf32>
    %537 = arith.mulf %528, %535 : vector<8x32xf32>
    %538 = arith.addf %536, %537 : vector<8x32xf32>
    %539 = math.tanh %538 : vector<8x32xf32>
    %540 = arith.mulf %530, %539 : vector<8x32xf32>
    %cst_176 = arith.constant dense<0.000000e+00> : vector<8x128xf32>
    %541 = tpu.matmul %540, %16, %cst_176 {dimension_numbers = #tpu.dot_dimension_numbers<[1], [0], [0], [1], [0, 0, 1, 1], [], []>} : vector<8x32xf32>, vector<32x128xf32>, vector<8x128xf32> -> vector<8x128xf32>
    %cst_177 = arith.constant dense<0.000000e+00> : vector<8x128xf32>
    %542 = tpu.matmul %482, %17, %cst_177 {dimension_numbers = #tpu.dot_dimension_numbers<[1], [0], [0], [1], [0, 0, 1, 1], [], []>} : vector<8x32xf32>, vector<32x128xf32>, vector<8x128xf32> -> vector<8x128xf32>
    %543 = arith.addf %541, %542 : vector<8x128xf32>
    %544 = vector.broadcast %18 : vector<1x128xf32> to vector<8x128xf32>
    %545 = arith.addf %543, %544 : vector<8x128xf32>
    %546 = arith.negf %545 : vector<8x128xf32>
    %547 = math.exp %546 : vector<8x128xf32>
    %cst_178 = arith.constant 1.000000e+00 : f32
    %548 = vector.broadcast %cst_178 : f32 to vector<8x128xf32>
    %549 = arith.addf %548, %547 : vector<8x128xf32>
    %550 = arith.divf %548, %549 : vector<8x128xf32>
    %551 = vector.extract_strided_slice %550 {offsets = [0, 0], sizes = [8, 32], strides = [1, 1]} : vector<8x128xf32> to vector<8x32xf32>
    %552 = vector.extract_strided_slice %550 {offsets = [0, 32], sizes = [8, 32], strides = [1, 1]} : vector<8x128xf32> to vector<8x32xf32>
    %553 = vector.extract_strided_slice %550 {offsets = [0, 96], sizes = [8, 32], strides = [1, 1]} : vector<8x128xf32> to vector<8x32xf32>
    %554 = vector.extract_strided_slice %550 {offsets = [0, 64], sizes = [8, 32], strides = [1, 1]} : vector<8x128xf32> to vector<8x32xf32>
    %cst_179 = arith.constant 2.000000e+00 : f32
    %555 = vector.broadcast %cst_179 : f32 to vector<8x32xf32>
    %556 = arith.mulf %555, %554 : vector<8x32xf32>
    %cst_180 = arith.constant 1.000000e+00 : f32
    %557 = vector.broadcast %cst_180 : f32 to vector<8x32xf32>
    %558 = arith.subf %556, %557 : vector<8x32xf32>
    %559 = arith.mulf %552, %480 : vector<8x32xf32>
    %560 = arith.mulf %551, %558 : vector<8x32xf32>
    %561 = arith.addf %559, %560 : vector<8x32xf32>
    %562 = math.tanh %561 : vector<8x32xf32>
    %563 = arith.mulf %553, %562 : vector<8x32xf32>
    %cst_181 = arith.constant dense<0.000000e+00> : vector<8x128xf32>
    %564 = tpu.matmul %563, %19, %cst_181 {dimension_numbers = #tpu.dot_dimension_numbers<[1], [0], [0], [1], [0, 0, 1, 1], [], []>} : vector<8x32xf32>, vector<32x128xf32>, vector<8x128xf32> -> vector<8x128xf32>
    %565 = vector.broadcast %20 : vector<1x128xf32> to vector<8x128xf32>
    %566 = arith.addf %564, %565 : vector<8x128xf32>
    %567 = arith.index_cast %c6_i32 : i32 to index
    %c0_182 = arith.constant 0 : index
    %c0_183 = arith.constant 0 : index
    %568 = vector.load %arg15[%567, %c0_182, %c0_183] : memref<7x8x128xf32, #tpu.memory_space<vmem>>, vector<1x8x128xf32>
    %569 = vector.shape_cast %568 : vector<1x8x128xf32> to vector<8x128xf32>
    %570 = vector.shape_cast %566 : vector<8x128xf32> to vector<1x8x128xf32>
    tpu.vector_store %arg15[%567, %c0_182, %c0_183], %570 {strides = array<i32>} : memref<7x8x128xf32, #tpu.memory_space<vmem>>, vector<1x8x128xf32>,
    %571 = tpu.iota {dimensions = array<i32: 1>} : vector<8x128xi32>
    %572 = arith.sitofp %571 : vector<8x128xi32> to vector<8x128xf32>
    %cst_184 = arith.constant dense<0xFF800000> : vector<8xf32>
    %573 = vector.multi_reduction <maximumf>, %566, %cst_184 [1] : vector<8x128xf32> to vector<8xf32>
    %574 = vector.shape_cast %573 : vector<8xf32> to vector<8x1xf32>
    %575 = vector.broadcast %574 : vector<8x1xf32> to vector<8x128xf32>
    %576 = arith.cmpf oeq, %566, %575 : vector<8x128xf32>
    %cst_185 = arith.constant 0.000000e+00 : f32
    %577 = vector.broadcast %cst_185 : f32 to vector<8x128xf32>
    %578 = arith.subf %577, %572 : vector<8x128xf32>
    %cst_186 = arith.constant 0.000000e+00 : f32
    %cst_187 = arith.constant 1.280000e+02 : f32
    %579 = arith.subf %cst_186, %cst_187 : f32
    %580 = vector.broadcast %579 : f32 to vector<8x128xf32>
    %581 = arith.select %576, %578, %580 : vector<8x128xi1>, vector<8x128xf32>
    %cst_188 = arith.constant dense<0xFF800000> : vector<8xf32>
    %582 = vector.multi_reduction <maximumf>, %581, %cst_188 [1] : vector<8x128xf32> to vector<8xf32>
    %583 = vector.shape_cast %582 : vector<8xf32> to vector<8x1xf32>
    %cst_189 = arith.constant 0.000000e+00 : f32
    %584 = vector.broadcast %cst_189 : f32 to vector<8x1xf32>
    %585 = arith.subf %584, %583 : vector<8x1xf32>
    %586 = vector.broadcast %585 : vector<8x1xf32> to vector<8x128xf32>
    %587 = arith.cmpf oeq, %572, %586 : vector<8x128xf32>
    %588 = arith.extui %587 : vector<8x128xi1> to vector<8x128xi32>
    %589 = arith.sitofp %588 : vector<8x128xi32> to vector<8x128xf32>
    %c7_i32 = arith.constant 7 : i32
    return
  }
}

</mosaic_0001>

<llo_original>
// kernel: seq2seq_forward.1
$region0: #{seq2seq_forward.1}
  #allocation0 [shape = 'u32[]', space=smem, size = 0x4, offset = 0x4, fixed_abs, tag = 'smem constant byte address 0x4 - core index']
  #allocation1 [shape = 'u32[144,128]{1,0:T(1,128)}', space=vmem, size = 0x12000, scoped, tag = 'internal scratch']
  %s0 = inlined_call_operand.vmem [shape: s32[7], index: 0, kind: input, shape index: {}]
  %s1 = inlined_call_operand.vmem [shape: f32[8,4], index: 1, kind: input, shape index: {}]
  %s2 = inlined_call_operand.vmem [shape: f32[7,8,128], index: 2, kind: input, shape index: {}]
  %s3 = inlined_call_operand.vmem [shape: f32[4,64], index: 3, kind: input, shape index: {}]
  %s4 = inlined_call_operand.vmem [shape: f32[1,64], index: 4, kind: input, shape index: {}]
  %s5 = inlined_call_operand.vmem [shape: f32[64,32], index: 5, kind: input, shape index: {}]
  %s6 = inlined_call_operand.vmem [shape: f32[1,32], index: 6, kind: input, shape index: {}]
  %s7 = inlined_call_operand.vmem [shape: f32[128,128], index: 7, kind: input, shape index: {}]
  %s8 = inlined_call_operand.vmem [shape: f32[32,128], index: 8, kind: input, shape index: {}]
  %s9 = inlined_call_operand.vmem [shape: f32[1,128], index: 9, kind: input, shape index: {}]
  %s10 = inlined_call_operand.vmem [shape: f32[32,128], index: 10, kind: input, shape index: {}]
  %s11 = inlined_call_operand.vmem [shape: f32[32,128], index: 11, kind: input, shape index: {}]
  %s12 = inlined_call_operand.vmem [shape: f32[1,128], index: 12, kind: input, shape index: {}]
  %s13 = inlined_call_operand.vmem [shape: f32[32,128], index: 13, kind: input, shape index: {}]
  %s14 = inlined_call_operand.vmem [shape: f32[1,128], index: 14, kind: input, shape index: {}]
  %s15 = inlined_call_operand.vmem [shape: f32[7,8,128], index: 15, kind: output, shape index: {}]
  %s16 = sld [smem:[#allocation0]]
  $region74: #{seq2seq_forward.1} parent=0
    _
  %s18 = ssub.s32 1, %s16
  %s19 = scalar_select 0, %s18, %s16
  $region1: #{seq2seq_forward.1} parent=0
    #allocation2 [shape = 'u8[512]{0}', space=smem, size = 0x200, scoped, tag = 'input window, operand 0, single buffered']
    #allocation3 [shape = 's32[1]{0}', space=sflag, size = 0x4, scoped, tag = 'scoped memory for seq2seq_forward.1']
    %20 = vsyncpa [#allocation3], 0
    // Predicated region
    $region2: #{seq2seq_forward.1} parent=1 // pred_check
      _
    $region3: #{seq2seq_forward.1} parent=1 // pred_check_branch
      %22 = sbr.rel (0) target = $region5
    $region4: #{seq2seq_forward.1} parent=1 // pred_region
      %s24 = ssub.s32 16, 16
      %25 = vsyncadd [#allocation3], %s24
      %s27 = sshll.u32 %s0, 4
      %s28 = int_to_ptr.vmem [resolvable:$true] %s27
      %30 = dma.vmem_to_smem %s28, 16, [#allocation2], [#allocation3]
    $region5: #{seq2seq_forward.1} parent=1 // pred_fallthru
      _
    // Predicated region
    $region6: #{seq2seq_forward.1} parent=1 // pred_check
      _
    $region7: #{seq2seq_forward.1} parent=1 // pred_check_branch
      %32 = sbr.rel (0) target = $region9
    $region8: #{seq2seq_forward.1} parent=1 // pred_region
      _
    $region9: #{seq2seq_forward.1} parent=1 // pred_fallthru
      _
    // Predicated region
    $region10: #{seq2seq_forward.1} parent=1 // pred_check
      _
    $region11: #{seq2seq_forward.1} parent=1 // pred_check_branch
      %34 = sbr.rel (0) target = $region13
    $region12: #{seq2seq_forward.1} parent=1 // pred_region
      _
    $region13: #{seq2seq_forward.1} parent=1 // pred_fallthru
      _
    // Predicated region
    $region14: #{seq2seq_forward.1} parent=1 // pred_check
      _
    $region15: #{seq2seq_forward.1} parent=1 // pred_check_branch
      %36 = sbr.rel (0) target = $region17
    $region16: #{seq2seq_forward.1} parent=1 // pred_region
      _
    $region17: #{seq2seq_forward.1} parent=1 // pred_fallthru
      _
    // Predicated region
    $region18: #{seq2seq_forward.1} parent=1 // pred_check
      _
    $region19: #{seq2seq_forward.1} parent=1 // pred_check_branch
      %38 = sbr.rel (0) target = $region21
    $region20: #{seq2seq_forward.1} parent=1 // pred_region
      _
    $region21: #{seq2seq_forward.1} parent=1 // pred_fallthru
      _
    // Predicated region
    $region22: #{seq2seq_forward.1} parent=1 // pred_check
      _
    $region23: #{seq2seq_forward.1} parent=1 // pred_check_branch
      %40 = sbr.rel (0) target = $region25
    $region24: #{seq2seq_forward.1} parent=1 // pred_region
      _
    $region25: #{seq2seq_forward.1} parent=1 // pred_fallthru
      _
    // Predicated region
    $region26: #{seq2seq_forward.1} parent=1 // pred_check
      _
    $region27: #{seq2seq_forward.1} parent=1 // pred_check_branch
      %42 = sbr.rel (0) target = $region29
    $region28: #{seq2seq_forward.1} parent=1 // pred_region
      _
    $region29: #{seq2seq_forward.1} parent=1 // pred_fallthru
      _
    // Predicated region
    $region30: #{seq2seq_forward.1} parent=1 // pred_check
      _
    $region31: #{seq2seq_forward.1} parent=1 // pred_check_branch
      %44 = sbr.rel (0) target = $region33
    $region32: #{seq2seq_forward.1} parent=1 // pred_region
      _
    $region33: #{seq2seq_forward.1} parent=1 // pred_fallthru
      _
    // Predicated region
    $region34: #{seq2seq_forward.1} parent=1 // pred_check
      _
    $region35: #{seq2seq_forward.1} parent=1 // pred_check_branch
      %46 = sbr.rel (0) target = $region37
    $region36: #{seq2seq_forward.1} parent=1 // pred_region
      _
    $region37: #{seq2seq_forward.1} parent=1 // pred_fallthru
      _
    // Predicated region
    $region38: #{seq2seq_forward.1} parent=1 // pred_check
      _
    $region39: #{seq2seq_forward.1} parent=1 // pred_check_branch
      %48 = sbr.rel (0) target = $region41
    $region40: #{seq2seq_forward.1} parent=1 // pred_region
      _
    $region41: #{seq2seq_forward.1} parent=1 // pred_fallthru
      _
    // Predicated region
    $region42: #{seq2seq_forward.1} parent=1 // pred_check
      _
    $region43: #{seq2seq_forward.1} parent=1 // pred_check_branch
      %50 = sbr.rel (0) target = $region45
    $region44: #{seq2seq_forward.1} parent=1 // pred_region
      _
    $region45: #{seq2seq_forward.1} parent=1 // pred_fallthru
      _
    // Predicated region
    $region46: #{seq2seq_forward.1} parent=1 // pred_check
      _
    $region47: #{seq2seq_forward.1} parent=1 // pred_check_branch
      %52 = sbr.rel (0) target = $region49
    $region48: #{seq2seq_forward.1} parent=1 // pred_region
      _
    $region49: #{seq2seq_forward.1} parent=1 // pred_fallthru
      _
    // Predicated region
    $region50: #{seq2seq_forward.1} parent=1 // pred_check
      _
    $region51: #{seq2seq_forward.1} parent=1 // pred_check_branch
      %54 = sbr.rel (0) target = $region53
    $region52: #{seq2seq_forward.1} parent=1 // pred_region
      _
    $region53: #{seq2seq_forward.1} parent=1 // pred_fallthru
      _
    // Predicated region
    $region54: #{seq2seq_forward.1} parent=1 // pred_check
      _
    $region55: #{seq2seq_forward.1} parent=1 // pred_check_branch
      %56 = sbr.rel (0) target = $region57
    $region56: #{seq2seq_forward.1} parent=1 // pred_region
      _
    $region57: #{seq2seq_forward.1} parent=1 // pred_fallthru
      _
    // Predicated region
    $region58: #{seq2seq_forward.1} parent=1 // pred_check
      _
    $region59: #{seq2seq_forward.1} parent=1 // pred_check_branch
      %58 = sbr.rel (0) target = $region61
    $region60: #{seq2seq_forward.1} parent=1 // pred_region
      _
    $region61: #{seq2seq_forward.1} parent=1 // pred_fallthru
      _
    // Predicated region
    $region62: #{seq2seq_forward.1} parent=1 // pred_check
      _
    $region63: #{seq2seq_forward.1} parent=1 // pred_check_branch
      %60 = sbr.rel (0) target = $region65
    $region64: #{seq2seq_forward.1} parent=1 // pred_region
      %61 = dma.done [#allocation3], 16
    $region65: #{seq2seq_forward.1} parent=1 // pred_fallthru
      _
    %62 = sfence
    %v63 = vld [vmem:[%s1] sm:$0xff]
    %v64 = vld [vmem:[%s3] sm:$0xf]
    %v65 = vld [vmem:[%s4] sm:$0x1]
    %v67 = vlaneseq
    %v68 = vshrl.u32 %v67, 7
    %v69 = vsub.s32 0, %v68
    %v70 = vrot.slane %v65, %v69
    %vm72 = vcmask 31744
    %v74 = vsel %vm72, %v63, 0
    %vm76 = vcmask 1043456
    %v78 = vsel %vm76, %v64, 0
    %80 = vmatprep.subr.mxu0 0.0
    %81 = vmatpush1.msra.mxu0 0.0
    %82 = vmatprep.subr.mxu0 0.0
    %83 = vmatpush1.msra.mxu0 0.0
    %84 = vmatprep.subr.mxu0 0.0
    %85 = vmatpush1.msra.mxu0 0.0
    %86 = vmatprep.subr.mxu0 0.0
    %87 = vmatpush1.msra.mxu0 0.0
    %88 = vmatprep.subr.mxu0 0.0
    %89 = vmatpush1.msra.mxu0 0.0
    %90 = vmatprep.subr.mxu0 0.0
    %91 = vmatpush1.msra.mxu0 0.0
    %92 = vmatprep.subr.mxu0 0.0
    %93 = vmatpush1.msra.mxu0 0.0
    %94 = vmatprep.subr.mxu0 0.0
    %95 = vmatpush1.msra.mxu0 0.0
    %96 = vmatprep.subr.mxu0 0.0
    %97 = vmatpush1.msra.mxu0 0.0
    %98 = vmatprep.subr.mxu0 0.0
    %99 = vmatpush1.msra.mxu0 0.0
    %100 = vmatprep.subr.mxu0 0.0
    %101 = vmatpush1.msra.mxu0 0.0
    %102 = vmatprep.subr.mxu0 0.0
    %103 = vmatpush1.msra.mxu0 0.0
    %104 = vmatprep.subr.mxu0 0.0
    %105 = vmatpush1.msra.mxu0 0.0
    %106 = vmatprep.subr.mxu0 0.0
    %107 = vmatpush1.msra.mxu0 0.0
    %108 = vmatprep.subr.mxu0 0.0
    %109 = vmatpush1.msra.mxu0 0.0
    %110 = vmatprep.subr.mxu0 0.0
    %111 = vmatpush1.msra.mxu0 %v78
    %112 = vmatprep.subr.mxu0 0.0
    %113 = vmatpush2.msra.mxu0 0.0
    %114 = vmatprep.subr.mxu0 0.0
    %115 = vmatpush2.msra.mxu0 0.0
    %116 = vmatprep.subr.mxu0 0.0
    %117 = vmatpush2.msra.mxu0 0.0
    %118 = vmatprep.subr.mxu0 0.0
    %119 = vmatpush2.msra.mxu0 0.0
    %120 = vmatprep.subr.mxu0 0.0
    %121 = vmatpush2.msra.mxu0 0.0
    %122 = vmatprep.subr.mxu0 0.0
    %123 = vmatpush2.msra.mxu0 0.0
    %124 = vmatprep.subr.mxu0 0.0
    %125 = vmatpush2.msra.mxu0 0.0
    %126 = vmatprep.subr.mxu0 0.0
    %127 = vmatpush2.msra.mxu0 0.0
    %128 = vmatprep.subr.mxu0 0.0
    %129 = vmatpush2.msra.mxu0 0.0
    %130 = vmatprep.subr.mxu0 0.0
    %131 = vmatpush2.msra.mxu0 0.0
    %132 = vmatprep.subr.mxu0 0.0
    %133 = vmatpush2.msra.mxu0 0.0
    %134 = vmatprep.subr.mxu0 0.0
    %135 = vmatpush2.msra.mxu0 0.0
    %136 = vmatprep.subr.mxu0 0.0
    %137 = vmatpush2.msra.mxu0 0.0
    %138 = vmatprep.subr.mxu0 0.0
    %139 = vmatpush2.msra.mxu0 0.0
    %140 = vmatprep.subr.mxu0 0.0
    %141 = vmatpush2.msra.mxu0 0.0
    %142 = vmatprep.subr.mxu0 0.0
    %143 = vmatpush2.msra.mxu0 0.0
    %144 = vmatprep.mubr.f32.mxu0 0.0
    %145 = vmatmul.mubr.f32.gmra.mxu0 %v74
    %v146 = vpop.f32.mrf.mxu0
    %v147 = vadd.f32 %v70, %v146
    %v148 = vpop.f32.mrf.mxu0
    %149 = vdwg.mxu0
    %v150 = vmax.f32 %v147, 0.0
    %v151 = vld [vmem:[%s5] sm:$0xff]
    %v152 = vld [vmem:[%s5 + $0x8] sm:$0xff]
    %v153 = vld [vmem:[%s5 + $0x10] sm:$0xff]
    %v154 = vld [vmem:[%s5 + $0x18] sm:$0xff]
    %v155 = vld [vmem:[%s5 + $0x20] sm:$0xff]
    %v156 = vld [vmem:[%s5 + $0x28] sm:$0xff]
    %v157 = vld [vmem:[%s5 + $0x30] sm:$0xff]
    %v158 = vld [vmem:[%s5 + $0x38] sm:$0xff]
    %v159 = vld [vmem:[%s6] sm:$0x1]
    %v161 = vlaneseq
    %v162 = vshrl.u32 %v161, 7
    %v163 = vsub.s32 0, %v162
    %v164 = vrot.slane %v159, %v163
    %vm166 = vcmask 523264
    %v168 = vsel %vm166, %v150, 0
    %170 = vmatprep.subr.mxu0 0.0
    %171 = vmatpush1.msra.mxu0 0.0
    %172 = vmatprep.subr.mxu0 0.0
    %173 = vmatpush1.msra.mxu0 0.0
    %174 = vmatprep.subr.mxu0 0.0
    %175 = vmatpush1.msra.mxu0 0.0
    %176 = vmatprep.subr.mxu0 0.0
    %177 = vmatpush1.msra.mxu0 0.0
    %178 = vmatprep.subr.mxu0 0.0
    %179 = vmatpush1.msra.mxu0 0.0
    %180 = vmatprep.subr.mxu0 0.0
    %181 = vmatpush1.msra.mxu0 0.0
    %182 = vmatprep.subr.mxu0 0.0
    %183 = vmatpush1.msra.mxu0 0.0
    %184 = vmatprep.subr.mxu0 0.0
    %185 = vmatpush1.msra.mxu0 0.0
    %186 = vmatprep.subr.mxu0 0.0
    %187 = vmatpush1.msra.mxu0 %v158
    %188 = vmatprep.subr.mxu0 0.0
    %189 = vmatpush1.msra.mxu0 %v157
    %190 = vmatprep.subr.mxu0 0.0
    %191 = vmatpush1.msra.mxu0 %v156
    %192 = vmatprep.subr.mxu0 0.0
    %193 = vmatpush1.msra.mxu0 %v155
    %194 = vmatprep.subr.mxu0 0.0
    %195 = vmatpush1.msra.mxu0 %v154
    %196 = vmatprep.subr.mxu0 0.0
    %197 = vmatpush1.msra.mxu0 %v153
    %198 = vmatprep.subr.mxu0 0.0
    %199 = vmatpush1.msra.mxu0 %v152
    %200 = vmatprep.subr.mxu0 0.0
    %201 = vmatpush1.msra.mxu0 %v151
    %202 = vmatprep.subr.mxu0 0.0
    %203 = vmatpush2.msra.mxu0 0.0
    %204 = vmatprep.subr.mxu0 0.0
    %205 = vmatpush2.msra.mxu0 0.0
    %206 = vmatprep.subr.mxu0 0.0
    %207 = vmatpush2.msra.mxu0 0.0
    %208 = vmatprep.subr.mxu0 0.0
    %209 = vmatpush2.msra.mxu0 0.0
    %210 = vmatprep.subr.mxu0 0.0
    %211 = vmatpush2.msra.mxu0 0.0
    %212 = vmatprep.subr.mxu0 0.0
    %213 = vmatpush2.msra.mxu0 0.0
    %214 = vmatprep.subr.mxu0 0.0
    %215 = vmatpush2.msra.mxu0 0.0
    %216 = vmatprep.subr.mxu0 0.0
    %217 = vmatpush2.msra.mxu0 0.0
    %218 = vmatprep.subr.mxu0 0.0
    %219 = vmatpush2.msra.mxu0 0.0
    %220 = vmatprep.subr.mxu0 0.0
    %221 = vmatpush2.msra.mxu0 0.0
    %222 = vmatprep.subr.mxu0 0.0
    %223 = vmatpush2.msra.mxu0 0.0
    %224 = vmatprep.subr.mxu0 0.0
    %225 = vmatpush2.msra.mxu0 0.0
    %226 = vmatprep.subr.mxu0 0.0
    %227 = vmatpush2.msra.mxu0 0.0
    %228 = vmatprep.subr.mxu0 0.0
    %229 = vmatpush2.msra.mxu0 0.0
    %230 = vmatprep.subr.mxu0 0.0
    %231 = vmatpush2.msra.mxu0 0.0
    %232 = vmatprep.subr.mxu0 0.0
    %233 = vmatpush2.msra.mxu0 0.0
    %234 = vmatprep.mubr.f32.mxu0 0.0
    %235 = vmatmul.mubr.f32.gmra.mxu0 %v168
    %v236 = vpop.f32.mrf.mxu0
    %v237 = vadd.f32 %v164, %v236
    %v238 = vpop.f32.mrf.mxu0
    %239 = vdwg.mxu0
    %v240 = vld [vmem:[%s7] sm:$0xff]
    %v241 = vld [vmem:[%s7 + $0x8] sm:$0xff]
    %v242 = vld [vmem:[%s7 + $0x10] sm:$0xff]
    %v243 = vld [vmem:[%s7 + $0x18] sm:$0xff]
    %v244 = vld [vmem:[%s7 + $0x20] sm:$0xff]
    %v245 = vld [vmem:[%s7 + $0x28] sm:$0xff]
    %v246 = vld [vmem:[%s7 + $0x30] sm:$0xff]
    %v247 = vld [vmem:[%s7 + $0x38] sm:$0xff]
    %v248 = vld [vmem:[%s7 + $0x40] sm:$0xff]
    %v249 = vld [vmem:[%s7 + $0x48] sm:$0xff]
    %v250 = vld [vmem:[%s7 + $0x50] sm:$0xff]
    %v251 = vld [vmem:[%s7 + $0x58] sm:$0xff]
    %v252 = vld [vmem:[%s7 + $0x60] sm:$0xff]
    %v253 = vld [vmem:[%s7 + $0x68] sm:$0xff]
    %v254 = vld [vmem:[%s7 + $0x70] sm:$0xff]
    %v255 = vld [vmem:[%s7 + $0x78] sm:$0xff]
    %v256 = vld [vmem:[%s8] sm:$0xff]
    %v257 = vld [vmem:[%s8 + $0x8] sm:$0xff]
    %v258 = vld [vmem:[%s8 + $0x10] sm:$0xff]
    %v259 = vld [vmem:[%s8 + $0x18] sm:$0xff]
    %v260 = vld [vmem:[%s9] sm:$0x1]
    %v261 = vld [vmem:[%s10] sm:$0xff]
    %v262 = vld [vmem:[%s10 + $0x8] sm:$0xff]
    %v263 = vld [vmem:[%s10 + $0x10] sm:$0xff]
    %v264 = vld [vmem:[%s10 + $0x18] sm:$0xff]
    %v265 = vld [vmem:[%s11] sm:$0xff]
    %v266 = vld [vmem:[%s11 + $0x8] sm:$0xff]
    %v267 = vld [vmem:[%s11 + $0x10] sm:$0xff]
    %v268 = vld [vmem:[%s11 + $0x18] sm:$0xff]
    %v269 = vld [vmem:[%s12] sm:$0x1]
    %v270 = vld [vmem:[%s13] sm:$0xff]
    %v271 = vld [vmem:[%s13 + $0x8] sm:$0xff]
    %v272 = vld [vmem:[%s13 + $0x10] sm:$0xff]
    %v273 = vld [vmem:[%s13 + $0x18] sm:$0xff]
    %v274 = vld [vmem:[%s14] sm:$0x1]
    %v275 = vld [vmem:[%s2] sm:$0xff]
    %vm276 = vcmask 261120
    %v278 = vsel %vm276, %v237, 0
    %280 = vmatprep.subr.mxu0 0.0
    %281 = vmatpush1.msra.mxu0 0.0
    %282 = vmatprep.subr.mxu0 0.0
    %283 = vmatpush1.msra.mxu0 0.0
    %284 = vmatprep.subr.mxu0 0.0
    %285 = vmatpush1.msra.mxu0 0.0
    %286 = vmatprep.subr.mxu0 0.0
    %287 = vmatpush1.msra.mxu0 0.0
    %288 = vmatprep.subr.mxu0 0.0
    %289 = vmatpush1.msra.mxu0 0.0
    %290 = vmatprep.subr.mxu0 0.0
    %291 = vmatpush1.msra.mxu0 0.0
    %292 = vmatprep.subr.mxu0 0.0
    %293 = vmatpush1.msra.mxu0 0.0
    %294 = vmatprep.subr.mxu0 0.0
    %295 = vmatpush1.msra.mxu0 0.0
    %296 = vmatprep.subr.mxu0 0.0
    %297 = vmatpush1.msra.mxu0 0.0
    %298 = vmatprep.subr.mxu0 0.0
    %299 = vmatpush1.msra.mxu0 0.0
    %300 = vmatprep.subr.mxu0 0.0
    %301 = vmatpush1.msra.mxu0 0.0
    %302 = vmatprep.subr.mxu0 0.0
    %303 = vmatpush1.msra.mxu0 0.0
    %304 = vmatprep.subr.mxu0 0.0
    %305 = vmatpush1.msra.mxu0 %v259
    %306 = vmatprep.subr.mxu0 0.0
    %307 = vmatpush1.msra.mxu0 %v258
    %308 = vmatprep.subr.mxu0 0.0
    %309 = vmatpush1.msra.mxu0 %v257
    %310 = vmatprep.subr.mxu0 0.0
    %311 = vmatpush1.msra.mxu0 %v256
    %312 = vmatprep.subr.mxu0 0.0
    %313 = vmatpush2.msra.mxu0 0.0
    %314 = vmatprep.subr.mxu0 0.0
    %315 = vmatpush2.msra.mxu0 0.0
    %316 = vmatprep.subr.mxu0 0.0
    %317 = vmatpush2.msra.mxu0 0.0
    %318 = vmatprep.subr.mxu0 0.0
    %319 = vmatpush2.msra.mxu0 0.0
    %320 = vmatprep.subr.mxu0 0.0
    %321 = vmatpush2.msra.mxu0 0.0
    %322 = vmatprep.subr.mxu0 0.0
    %323 = vmatpush2.msra.mxu0 0.0
    %324 = vmatprep.subr.mxu0 0.0
    %325 = vmatpush2.msra.mxu0 0.0
    %326 = vmatprep.subr.mxu0 0.0
    %327 = vmatpush2.msra.mxu0 0.0
    %328 = vmatprep.subr.mxu0 0.0
    %329 = vmatpush2.msra.mxu0 0.0
    %330 = vmatprep.subr.mxu0 0.0
    %331 = vmatpush2.msra.mxu0 0.0
    %332 = vmatprep.subr.mxu0 0.0
    %333 = vmatpush2.msra.mxu0 0.0
    %334 = vmatprep.subr.mxu0 0.0
    %335 = vmatpush2.msra.mxu0 0.0
    %336 = vmatprep.subr.mxu0 0.0
    %337 = vmatpush2.msra.mxu0 0.0
    %338 = vmatprep.subr.mxu0 0.0
    %339 = vmatpush2.msra.mxu0 0.0
    %340 = vmatprep.subr.mxu0 0.0
    %341 = vmatpush2.msra.mxu0 0.0
    %342 = vmatprep.subr.mxu0 0.0
    %343 = vmatpush2.msra.mxu0 0.0
    %344 = vmatprep.mubr.f32.mxu0 0.0
    %345 = vmatmul.mubr.f32.gmra.mxu0 %v278
    %v346 = vpop.f32.mrf.mxu0
    %v347 = vadd.f32 0.0, %v346
    %v348 = vpop.f32.mrf.mxu0
    %349 = vdwg.mxu0
    %350 = vmatprep.subr.mxu0 0.0
    %351 = vmatpush1.msra.mxu0 %v255
    %352 = vmatprep.subr.mxu0 0.0
    %353 = vmatpush1.msra.mxu0 %v254
    %354 = vmatprep.subr.mxu0 0.0
    %355 = vmatpush1.msra.mxu0 %v253
    %356 = vmatprep.subr.mxu0 0.0
    %357 = vmatpush1.msra.mxu0 %v252
    %358 = vmatprep.subr.mxu0 0.0
    %359 = vmatpush1.msra.mxu0 %v251
    %360 = vmatprep.subr.mxu0 0.0
    %361 = vmatpush1.msra.mxu0 %v250
    %362 = vmatprep.subr.mxu0 0.0
    %363 = vmatpush1.msra.mxu0 %v249
    %364 = vmatprep.subr.mxu0 0.0
    %365 = vmatpush1.msra.mxu0 %v248
    %366 = vmatprep.subr.mxu0 0.0
    %367 = vmatpush1.msra.mxu0 %v247
    %368 = vmatprep.subr.mxu0 0.0
    %369 = vmatpush1.msra.mxu0 %v246
    %370 = vmatprep.subr.mxu0 0.0
    %371 = vmatpush1.msra.mxu0 %v245
    %372 = vmatprep.subr.mxu0 0.0
    %373 = vmatpush1.msra.mxu0 %v244
    %374 = vmatprep.subr.mxu0 0.0
    %375 = vmatpush1.msra.mxu0 %v243
    %376 = vmatprep.subr.mxu0 0.0
    %377 = vmatpush1.msra.mxu0 %v242
    %378 = vmatprep.subr.mxu0 0.0
    %379 = vmatpush1.msra.mxu0 %v241
    %380 = vmatprep.subr.mxu0 0.0
    %381 = vmatpush1.msra.mxu0 %v240
    %382 = vmatprep.subr.mxu0 0.0
    %383 = vmatpush2.msra.mxu0 0.0
    %384 = vmatprep.subr.mxu0 0.0
    %385 = vmatpush2.msra.mxu0 0.0
    %386 = vmatprep.subr.mxu0 0.0
    %387 = vmatpush2.msra.mxu0 0.0
    %388 = vmatprep.subr.mxu0 0.0
    %389 = vmatpush2.msra.mxu0 0.0
    %390 = vmatprep.subr.mxu0 0.0
    %391 = vmatpush2.msra.mxu0 0.0
    %392 = vmatprep.subr.mxu0 0.0
    %393 = vmatpush2.msra.mxu0 0.0
    %394 = vmatprep.subr.mxu0 0.0
    %395 = vmatpush2.msra.mxu0 0.0
    %396 = vmatprep.subr.mxu0 0.0
    %397 = vmatpush2.msra.mxu0 0.0
    %398 = vmatprep.subr.mxu0 0.0
    %399 = vmatpush2.msra.mxu0 0.0
    %400 = vmatprep.subr.mxu0 0.0
    %401 = vmatpush2.msra.mxu0 0.0
    %402 = vmatprep.subr.mxu0 0.0
    %403 = vmatpush2.msra.mxu0 0.0
    %404 = vmatprep.subr.mxu0 0.0
    %405 = vmatpush2.msra.mxu0 0.0
    %406 = vmatprep.subr.mxu0 0.0
    %407 = vmatpush2.msra.mxu0 0.0
    %408 = vmatprep.subr.mxu0 0.0
    %409 = vmatpush2.msra.mxu0 0.0
    %410 = vmatprep.subr.mxu0 0.0
    %411 = vmatpush2.msra.mxu0 0.0
    %412 = vmatprep.subr.mxu0 0.0
    %413 = vmatpush2.msra.mxu0 0.0
    %414 = vmatprep.mubr.f32.mxu0 0.0
    %415 = vmatmul.mubr.f32.gmra.mxu0 %v275
    %v416 = vpop.f32.mrf.mxu0
    %v417 = vadd.f32 %v347, %v416
    %v418 = vpop.f32.mrf.mxu0
    %419 = vdwg.mxu0
    %v421 = vlaneseq
    %v422 = vshrl.u32 %v421, 7
    %v423 = vsub.s32 0, %v422
    %v424 = vrot.slane %v260, %v423
    %v426 = vadd.f32 %v417, %v424
    %v427 = vxor.u32 %v426, 2147483648
    %v428 = vmul.f32 %v427, 1.442695
    %v429 = vpow.pop %v428
    %v430 = vadd.f32 %v429, 1.0
    %v431 = vrcp.pop %v430
    %v432 = vmul.f32 1.0, %v431
    %v433 = vmul.f32 %v432, 2.0
    %v434 = vsub.f32 %v433, 1.0
    %v435 = vmul.f32 %v432, 0.0
    %437 = vrot.lane.b32.xlu0 %v434, 64
    %v438 = vpop.permute.xlu0 %437
    %v440 = vmul.f32 %v432, %v438
    %442 = vrot.lane.b32.xlu0 %v440, 32
    %v443 = vpop.permute.xlu0 %442
    %v445 = vadd.f32 %v435, %v443
    %v446 = vtanh.pop %v445
    %448 = vrot.lane.b32.xlu0 %v446, 64
    %v449 = vpop.permute.xlu0 %448
    %v451 = vmul.f32 %v432, %v449
    %452 = vmatprep.subr.mxu0 0.0
    %453 = vmatpush1.msra.mxu0 0.0
    %454 = vmatprep.subr.mxu0 0.0
    %455 = vmatpush1.msra.mxu0 0.0
    %456 = vmatprep.subr.mxu0 0.0
    %457 = vmatpush1.msra.mxu0 0.0
    %458 = vmatprep.subr.mxu0 0.0
    %459 = vmatpush1.msra.mxu0 0.0
    %460 = vmatprep.subr.mxu0 0.0
    %461 = vmatpush1.msra.mxu0 0.0
    %462 = vmatprep.subr.mxu0 0.0
    %463 = vmatpush1.msra.mxu0 0.0
    %464 = vmatprep.subr.mxu0 0.0
    %465 = vmatpush1.msra.mxu0 0.0
    %466 = vmatprep.subr.mxu0 0.0
    %467 = vmatpush1.msra.mxu0 0.0
    %468 = vmatprep.subr.mxu0 0.0
    %469 = vmatpush1.msra.mxu0 0.0
    %470 = vmatprep.subr.mxu0 0.0
    %471 = vmatpush1.msra.mxu0 0.0
    %472 = vmatprep.subr.mxu0 0.0
    %473 = vmatpush1.msra.mxu0 0.0
    %474 = vmatprep.subr.mxu0 0.0
    %475 = vmatpush1.msra.mxu0 0.0
    %476 = vmatprep.subr.mxu0 0.0
    %477 = vmatpush1.msra.mxu0 %v268
    %478 = vmatprep.subr.mxu0 0.0
    %479 = vmatpush1.msra.mxu0 %v267
    %480 = vmatprep.subr.mxu0 0.0
    %481 = vmatpush1.msra.mxu0 %v266
    %482 = vmatprep.subr.mxu0 0.0
    %483 = vmatpush1.msra.mxu0 %v265
    %484 = vmatprep.subr.mxu0 0.0
    %485 = vmatpush2.msra.mxu0 0.0
    %486 = vmatprep.subr.mxu0 0.0
    %487 = vmatpush2.msra.mxu0 0.0
    %488 = vmatprep.subr.mxu0 0.0
    %489 = vmatpush2.msra.mxu0 0.0
    %490 = vmatprep.subr.mxu0 0.0
    %491 = vmatpush2.msra.mxu0 0.0
    %492 = vmatprep.subr.mxu0 0.0
    %493 = vmatpush2.msra.mxu0 0.0
    %494 = vmatprep.subr.mxu0 0.0
    %495 = vmatpush2.msra.mxu0 0.0
    %496 = vmatprep.subr.mxu0 0.0
    %497 = vmatpush2.msra.mxu0 0.0
    %498 = vmatprep.subr.mxu0 0.0
    %499 = vmatpush2.msra.mxu0 0.0
    %500 = vmatprep.subr.mxu0 0.0
    %501 = vmatpush2.msra.mxu0 0.0
    %502 = vmatprep.subr.mxu0 0.0
    %503 = vmatpush2.msra.mxu0 0.0
    %504 = vmatprep.subr.mxu0 0.0
    %505 = vmatpush2.msra.mxu0 0.0
    %506 = vmatprep.subr.mxu0 0.0
    %507 = vmatpush2.msra.mxu0 0.0
    %508 = vmatprep.subr.mxu0 0.0
    %509 = vmatpush2.msra.mxu0 0.0
    %510 = vmatprep.subr.mxu0 0.0
    %511 = vmatpush2.msra.mxu0 0.0
    %512 = vmatprep.subr.mxu0 0.0
    %513 = vmatpush2.msra.mxu0 0.0
    %514 = vmatprep.subr.mxu0 0.0
    %515 = vmatpush2.msra.mxu0 0.0
    %516 = vmatprep.mubr.f32.mxu0 0.0
    %517 = vmatmul.mubr.f32.gmra.mxu0 %v278
    %v518 = vpop.f32.mrf.mxu0
    %v519 = vadd.f32 0.0, %v518
    %v520 = vpop.f32.mrf.mxu0
    %521 = vdwg.mxu0
    %523 = vrot.lane.b32.xlu0 %v451, 32
    %v524 = vpop.permute.xlu0 %523
    %v525 = vsel %vm276, %v524, 0
    %527 = vmatprep.subr.mxu0 0.0
    %528 = vmatpush1.msra.mxu0 0.0
    %529 = vmatprep.subr.mxu0 0.0
    %530 = vmatpush1.msra.mxu0 0.0
    %531 = vmatprep.subr.mxu0 0.0
    %532 = vmatpush1.msra.mxu0 0.0
    %533 = vmatprep.subr.mxu0 0.0
    %534 = vmatpush1.msra.mxu0 0.0
    %535 = vmatprep.subr.mxu0 0.0
    %536 = vmatpush1.msra.mxu0 0.0
    %537 = vmatprep.subr.mxu0 0.0
    %538 = vmatpush1.msra.mxu0 0.0
    %539 = vmatprep.subr.mxu0 0.0
    %540 = vmatpush1.msra.mxu0 0.0
    %541 = vmatprep.subr.mxu0 0.0
    %542 = vmatpush1.msra.mxu0 0.0
    %543 = vmatprep.subr.mxu0 0.0
    %544 = vmatpush1.msra.mxu0 0.0
    %545 = vmatprep.subr.mxu0 0.0
    %546 = vmatpush1.msra.mxu0 0.0
    %547 = vmatprep.subr.mxu0 0.0
    %548 = vmatpush1.msra.mxu0 0.0
    %549 = vmatprep.subr.mxu0 0.0
    %550 = vmatpush1.msra.mxu0 0.0
    %551 = vmatprep.subr.mxu0 0.0
    %552 = vmatpush1.msra.mxu0 %v264
    %553 = vmatprep.subr.mxu0 0.0
    %554 = vmatpush1.msra.mxu0 %v263
    %555 = vmatprep.subr.mxu0 0.0
    %556 = vmatpush1.msra.mxu0 %v262
    %557 = vmatprep.subr.mxu0 0.0
    %558 = vmatpush1.msra.mxu0 %v261
    %559 = vmatprep.subr.mxu0 0.0
    %560 = vmatpush2.msra.mxu0 0.0
    %561 = vmatprep.subr.mxu0 0.0
    %562 = vmatpush2.msra.mxu0 0.0
    %563 = vmatprep.subr.mxu0 0.0
    %564 = vmatpush2.msra.mxu0 0.0
    %565 = vmatprep.subr.mxu0 0.0
    %566 = vmatpush2.msra.mxu0 0.0
    %567 = vmatprep.subr.mxu0 0.0
    %568 = vmatpush2.msra.mxu0 0.0
    %569 = vmatprep.subr.mxu0 0.0
    %570 = vmatpush2.msra.mxu0 0.0
    %571 = vmatprep.subr.mxu0 0.0
    %572 = vmatpush2.msra.mxu0 0.0
    %573 = vmatprep.subr.mxu0 0.0
    %574 = vmatpush2.msra.mxu0 0.0
    %575 = vmatprep.subr.mxu0 0.0
    %576 = vmatpush2.msra.mxu0 0.0
    %577 = vmatprep.subr.mxu0 0.0
    %578 = vmatpush2.msra.mxu0 0.0
    %579 = vmatprep.subr.mxu0 0.0
    %580 = vmatpush2.msra.mxu0 0.0
    %581 = vmatprep.subr.mxu0 0.0
    %582 = vmatpush2.msra.mxu0 0.0
    %583 = vmatprep.subr.mxu0 0.0
    %584 = vmatpush2.msra.mxu0 0.0
    %585 = vmatprep.subr.mxu0 0.0
    %586 = vmatpush2.msra.mxu0 0.0
    %587 = vmatprep.subr.mxu0 0.0
    %588 = vmatpush2.msra.mxu0 0.0
    %589 = vmatprep.subr.mxu0 0.0
    %590 = vmatpush2.msra.mxu0 0.0
    %591 = vmatprep.mubr.f32.mxu0 0.0
    %592 = vmatmul.mubr.f32.gmra.mxu0 %v525
    %v593 = vpop.f32.mrf.mxu0
    %v594 = vadd.f32 %v519, %v593
    %v595 = vpop.f32.mrf.mxu0
    %596 = vdwg.mxu0
    %v598 = vlaneseq
    %v599 = vshrl.u32 %v598, 7
    %v600 = vsub.s32 0, %v599
    %v601 = vrot.slane %v269, %v600
    %v603 = vadd.f32 %v594, %v601
    %v604 = vxor.u32 %v603, 2147483648
    %v605 = vmul.f32 %v604, 1.442695
    %v606 = vpow.pop %v605
    %v607 = vadd.f32 %v606, 1.0
    %v608 = vrcp.pop %v607
    %v609 = vmul.f32 1.0, %v608
    %v610 = vmul.f32 %v609, 2.0
    %v611 = vsub.f32 %v610, 1.0
    %v612 = vmul.f32 %v609, 0.0
    %614 = vrot.lane.b32.xlu0 %v611, 64
    %v615 = vpop.permute.xlu0 %614
    %v617 = vmul.f32 %v609, %v615
    %619 = vrot.lane.b32.xlu0 %v617, 32
    %v620 = vpop.permute.xlu0 %619
    %v622 = vadd.f32 %v612, %v620
    %v623 = vtanh.pop %v622
    %625 = vrot.lane.b32.xlu0 %v623, 64
    %v626 = vpop.permute.xlu0 %625
    %v628 = vmul.f32 %v609, %v626
    %v630 = vlaneseq
    %v631 = vshrl.u32 %v630, 7
    %v632 = vsub.s32 0, %v631
    %v633 = vrot.slane %v274, %v632
    %636 = vrot.lane.b32.xlu0 %v628, 32
    %v637 = vpop.permute.xlu0 %636
    %v638 = vsel %vm276, %v637, 0
    %640 = vmatprep.subr.mxu0 0.0
    %641 = vmatpush1.msra.mxu0 0.0
    %642 = vmatprep.subr.mxu0 0.0
    %643 = vmatpush1.msra.mxu0 0.0
    %644 = vmatprep.subr.mxu0 0.0
    %645 = vmatpush1.msra.mxu0 0.0
    %646 = vmatprep.subr.mxu0 0.0
    %647 = vmatpush1.msra.mxu0 0.0
    %648 = vmatprep.subr.mxu0 0.0
    %649 = vmatpush1.msra.mxu0 0.0
    %650 = vmatprep.subr.mxu0 0.0
    %651 = vmatpush1.msra.mxu0 0.0
    %652 = vmatprep.subr.mxu0 0.0
    %653 = vmatpush1.msra.mxu0 0.0
    %654 = vmatprep.subr.mxu0 0.0
    %655 = vmatpush1.msra.mxu0 0.0
    %656 = vmatprep.subr.mxu0 0.0
    %657 = vmatpush1.msra.mxu0 0.0
    %658 = vmatprep.subr.mxu0 0.0
    %659 = vmatpush1.msra.mxu0 0.0
    %660 = vmatprep.subr.mxu0 0.0
    %661 = vmatpush1.msra.mxu0 0.0
    %662 = vmatprep.subr.mxu0 0.0
    %663 = vmatpush1.msra.mxu0 0.0
    %664 = vmatprep.subr.mxu0 0.0
    %665 = vmatpush1.msra.mxu0 %v273
    %666 = vmatprep.subr.mxu0 0.0
    %667 = vmatpush1.msra.mxu0 %v272
    %668 = vmatprep.subr.mxu0 0.0
    %669 = vmatpush1.msra.mxu0 %v271
    %670 = vmatprep.subr.mxu0 0.0
    %671 = vmatpush1.msra.mxu0 %v270
    %672 = vmatprep.subr.mxu0 0.0
    %673 = vmatpush2.msra.mxu0 0.0
    %674 = vmatprep.subr.mxu0 0.0
    %675 = vmatpush2.msra.mxu0 0.0
    %676 = vmatprep.subr.mxu0 0.0
    %677 = vmatpush2.msra.mxu0 0.0
    %678 = vmatprep.subr.mxu0 0.0
    %679 = vmatpush2.msra.mxu0 0.0
    %680 = vmatprep.subr.mxu0 0.0
    %681 = vmatpush2.msra.mxu0 0.0
    %682 = vmatprep.subr.mxu0 0.0
    %683 = vmatpush2.msra.mxu0 0.0
    %684 = vmatprep.subr.mxu0 0.0
    %685 = vmatpush2.msra.mxu0 0.0
    %686 = vmatprep.subr.mxu0 0.0
    %687 = vmatpush2.msra.mxu0 0.0
    %688 = vmatprep.subr.mxu0 0.0
    %689 = vmatpush2.msra.mxu0 0.0
    %690 = vmatprep.subr.mxu0 0.0
    %691 = vmatpush2.msra.mxu0 0.0
    %692 = vmatprep.subr.mxu0 0.0
    %693 = vmatpush2.msra.mxu0 0.0
    %694 = vmatprep.subr.mxu0 0.0
    %695 = vmatpush2.msra.mxu0 0.0
    %696 = vmatprep.subr.mxu0 0.0
    %697 = vmatpush2.msra.mxu0 0.0
    %698 = vmatprep.subr.mxu0 0.0
    %699 = vmatpush2.msra.mxu0 0.0
    %700 = vmatprep.subr.mxu0 0.0
    %701 = vmatpush2.msra.mxu0 0.0
    %702 = vmatprep.subr.mxu0 0.0
    %703 = vmatpush2.msra.mxu0 0.0
    %704 = vmatprep.mubr.f32.mxu0 0.0
    %705 = vmatmul.mubr.f32.gmra.mxu0 %v638
    %v706 = vpop.f32.mrf.mxu0
    %v707 = vadd.f32 %v633, %v706
    %v708 = vpop.f32.mrf.mxu0
    %709 = vdwg.mxu0
    %710 = vst [vmem:[%s15] sm:$0xff] %v707
    %v711 = vlaneseq
    %v712 = vand.u32 %v711, 127
    %v713 = vcvt.s32.f32 %v712
    %714 = vmax.xlane.f32.xlu0 %v707
    %v715 = vpop.xlane.xlu0 %714
    %vm716 = vcmp.eq.f32.partialorder %v707, %v715
    %v717 = vsub.f32 0.0, %v713
    %v718 = vsel %vm716, %v717, -128.0
    %719 = vmax.xlane.f32.xlu0 %v718
    %v720 = vpop.xlane.xlu0 %719
    %v721 = vsub.f32 0.0, %v720
    %vm722 = vcmp.eq.f32.partialorder %v713, %v721
    %v723 = vsel %vm722, 1, 0
    %v724 = vcvt.s32.f32 %v723
    %s725 = sld [smem:[#allocation2 + $0x1]]
    %p726 = scmp.ne.s32.totalorder %s725, 0
    %s727 = scalar_lea.vmem %s2, 8
    %v728 = vld [vmem:[%s727] sm:$0xff]
    %s729 = scalar_select %p726, 1, 0
    %v730 = vstv %s729
    %vm731 = vcmp.eq.s32.totalorder %v730, 1
    %v732 = vsel %vm731, %v728, %v724
    %733 = vmatprep.subr.mxu0 0.0
    %734 = vmatpush1.msra.mxu0 0.0
    %735 = vmatprep.subr.mxu0 0.0
    %736 = vmatpush1.msra.mxu0 0.0
    %737 = vmatprep.subr.mxu0 0.0
    %738 = vmatpush1.msra.mxu0 0.0
    %739 = vmatprep.subr.mxu0 0.0
    %740 = vmatpush1.msra.mxu0 0.0
    %741 = vmatprep.subr.mxu0 0.0
    %742 = vmatpush1.msra.mxu0 0.0
    %743 = vmatprep.subr.mxu0 0.0
    %744 = vmatpush1.msra.mxu0 0.0
    %745 = vmatprep.subr.mxu0 0.0
    %746 = vmatpush1.msra.mxu0 0.0
    %747 = vmatprep.subr.mxu0 0.0
    %748 = vmatpush1.msra.mxu0 0.0
    %749 = vmatprep.subr.mxu0 0.0
    %750 = vmatpush1.msra.mxu0 0.0
    %751 = vmatprep.subr.mxu0 0.0
    %752 = vmatpush1.msra.mxu0 0.0
    %753 = vmatprep.subr.mxu0 0.0
    %754 = vmatpush1.msra.mxu0 0.0
    %755 = vmatprep.subr.mxu0 0.0
    %756 = vmatpush1.msra.mxu0 0.0
    %757 = vmatprep.subr.mxu0 0.0
    %758 = vmatpush1.msra.mxu0 %v259
    %759 = vmatprep.subr.mxu0 0.0
    %760 = vmatpush1.msra.mxu0 %v258
    %761 = vmatprep.subr.mxu0 0.0
    %762 = vmatpush1.msra.mxu0 %v257
    %763 = vmatprep.subr.mxu0 0.0
    %764 = vmatpush1.msra.mxu0 %v256
    %765 = vmatprep.subr.mxu0 0.0
    %766 = vmatpush2.msra.mxu0 0.0
    %767 = vmatprep.subr.mxu0 0.0
    %768 = vmatpush2.msra.mxu0 0.0
    %769 = vmatprep.subr.mxu0 0.0
    %770 = vmatpush2.msra.mxu0 0.0
    %771 = vmatprep.subr.mxu0 0.0
    %772 = vmatpush2.msra.mxu0 0.0
    %773 = vmatprep.subr.mxu0 0.0
    %774 = vmatpush2.msra.mxu0 0.0
    %775 = vmatprep.subr.mxu0 0.0
    %776 = vmatpush2.msra.mxu0 0.0
    %777 = vmatprep.subr.mxu0 0.0
    %778 = vmatpush2.msra.mxu0 0.0
    %779 = vmatprep.subr.mxu0 0.0
    %780 = vmatpush2.msra.mxu0 0.0
    %781 = vmatprep.subr.mxu0 0.0
    %782 = vmatpush2.msra.mxu0 0.0
    %783 = vmatprep.subr.mxu0 0.0
    %784 = vmatpush2.msra.mxu0 0.0
    %785 = vmatprep.subr.mxu0 0.0
    %786 = vmatpush2.msra.mxu0 0.0
    %787 = vmatprep.subr.mxu0 0.0
    %788 = vmatpush2.msra.mxu0 0.0
    %789 = vmatprep.subr.mxu0 0.0
    %790 = vmatpush2.msra.mxu0 0.0
    %791 = vmatprep.subr.mxu0 0.0
    %792 = vmatpush2.msra.mxu0 0.0
    %793 = vmatprep.subr.mxu0 0.0
    %794 = vmatpush2.msra.mxu0 0.0
    %795 = vmatprep.subr.mxu0 0.0
    %796 = vmatpush2.msra.mxu0 0.0
    %797 = vmatprep.mubr.f32.mxu0 0.0
    %798 = vmatmul.mubr.f32.gmra.mxu0 %v525
    %v799 = vpop.f32.mrf.mxu0
    %v800 = vadd.f32 0.0, %v799
    %v801 = vpop.f32.mrf.mxu0
    %802 = vdwg.mxu0
    %803 = vmatprep.subr.mxu0 0.0
    %804 = vmatpush1.msra.mxu0 %v255
    %805 = vmatprep.subr.mxu0 0.0
    %806 = vmatpush1.msra.mxu0 %v254
    %807 = vmatprep.subr.mxu0 0.0
    %808 = vmatpush1.msra.mxu0 %v253
    %809 = vmatprep.subr.mxu0 0.0
    %810 = vmatpush1.msra.mxu0 %v252
    %811 = vmatprep.subr.mxu0 0.0
    %812 = vmatpush1.msra.mxu0 %v251
    %813 = vmatprep.subr.mxu0 0.0
    %814 = vmatpush1.msra.mxu0 %v250
    %815 = vmatprep.subr.mxu0 0.0
    %816 = vmatpush1.msra.mxu0 %v249
    %817 = vmatprep.subr.mxu0 0.0
    %818 = vmatpush1.msra.mxu0 %v248
    %819 = vmatprep.subr.mxu0 0.0
    %820 = vmatpush1.msra.mxu0 %v247
    %821 = vmatprep.subr.mxu0 0.0
    %822 = vmatpush1.msra.mxu0 %v246
    %823 = vmatprep.subr.mxu0 0.0
    %824 = vmatpush1.msra.mxu0 %v245
    %825 = vmatprep.subr.mxu0 0.0
    %826 = vmatpush1.msra.mxu0 %v244
    %827 = vmatprep.subr.mxu0 0.0
    %828 = vmatpush1.msra.mxu0 %v243
    %829 = vmatprep.subr.mxu0 0.0
    %830 = vmatpush1.msra.mxu0 %v242
    %831 = vmatprep.subr.mxu0 0.0
    %832 = vmatpush1.msra.mxu0 %v241
    %833 = vmatprep.subr.mxu0 0.0
    %834 = vmatpush1.msra.mxu0 %v240
    %835 = vmatprep.subr.mxu0 0.0
    %836 = vmatpush2.msra.mxu0 0.0
    %837 = vmatprep.subr.mxu0 0.0
    %838 = vmatpush2.msra.mxu0 0.0
    %839 = vmatprep.subr.mxu0 0.0
    %840 = vmatpush2.msra.mxu0 0.0
    %841 = vmatprep.subr.mxu0 0.0
    %842 = vmatpush2.msra.mxu0 0.0
    %843 = vmatprep.subr.mxu0 0.0
    %844 = vmatpush2.msra.mxu0 0.0
    %845 = vmatprep.subr.mxu0 0.0
    %846 = vmatpush2.msra.mxu0 0.0
    %847 = vmatprep.subr.mxu0 0.0
    %848 = vmatpush2.msra.mxu0 0.0
    %849 = vmatprep.subr.mxu0 0.0
    %850 = vmatpush2.msra.mxu0 0.0
    %851 = vmatprep.subr.mxu0 0.0
    %852 = vmatpush2.msra.mxu0 0.0
    %853 = vmatprep.subr.mxu0 0.0
    %854 = vmatpush2.msra.mxu0 0.0
    %855 = vmatprep.subr.mxu0 0.0
    %856 = vmatpush2.msra.mxu0 0.0
    %857 = vmatprep.subr.mxu0 0.0
    %858 = vmatpush2.msra.mxu0 0.0
    %859 = vmatprep.subr.mxu0 0.0
    %860 = vmatpush2.msra.mxu0 0.0
    %861 = vmatprep.subr.mxu0 0.0
    %862 = vmatpush2.msra.mxu0 0.0
    %863 = vmatprep.subr.mxu0 0.0
    %864 = vmatpush2.msra.mxu0 0.0
    %865 = vmatprep.subr.mxu0 0.0
    %866 = vmatpush2.msra.mxu0 0.0
    %867 = vmatprep.mubr.f32.mxu0 0.0
    %868 = vmatmul.mubr.f32.gmra.mxu0 %v732
    %v869 = vpop.f32.mrf.mxu0
    %v870 = vadd.f32 %v800, %v869
    %v871 = vpop.f32.mrf.mxu0
    %872 = vdwg.mxu0
    %v873 = vadd.f32 %v870, %v424
    %v874 = vxor.u32 %v873, 2147483648
    %v875 = vmul.f32 %v874, 1.442695
    %v876 = vpow.pop %v875
    %v877 = vadd.f32 %v876, 1.0
    %v878 = vrcp.pop %v877
    %v879 = vmul.f32 1.0, %v878
    %v880 = vmul.f32 %v879, 2.0
    %v881 = vsub.f32 %v880, 1.0
    %v882 = vmul.f32 %v879, %v445
    %884 = vrot.lane.b32.xlu0 %v881, 64
    %v885 = vpop.permute.xlu0 %884
    %v887 = vmul.f32 %v879, %v885
    %889 = vrot.lane.b32.xlu0 %v887, 32
    %v890 = vpop.permute.xlu0 %889
    %v892 = vadd.f32 %v882, %v890
    %v893 = vtanh.pop %v892
    %895 = vrot.lane.b32.xlu0 %v893, 64
    %v896 = vpop.permute.xlu0 %895
    %v898 = vmul.f32 %v879, %v896
    %899 = vmatprep.subr.mxu0 0.0
    %900 = vmatpush1.msra.mxu0 0.0
    %901 = vmatprep.subr.mxu0 0.0
    %902 = vmatpush1.msra.mxu0 0.0
    %903 = vmatprep.subr.mxu0 0.0
    %904 = vmatpush1.msra.mxu0 0.0
    %905 = vmatprep.subr.mxu0 0.0
    %906 = vmatpush1.msra.mxu0 0.0
    %907 = vmatprep.subr.mxu0 0.0
    %908 = vmatpush1.msra.mxu0 0.0
    %909 = vmatprep.subr.mxu0 0.0
    %910 = vmatpush1.msra.mxu0 0.0
    %911 = vmatprep.subr.mxu0 0.0
    %912 = vmatpush1.msra.mxu0 0.0
    %913 = vmatprep.subr.mxu0 0.0
    %914 = vmatpush1.msra.mxu0 0.0
    %915 = vmatprep.subr.mxu0 0.0
    %916 = vmatpush1.msra.mxu0 0.0
    %917 = vmatprep.subr.mxu0 0.0
    %918 = vmatpush1.msra.mxu0 0.0
    %919 = vmatprep.subr.mxu0 0.0
    %920 = vmatpush1.msra.mxu0 0.0
    %921 = vmatprep.subr.mxu0 0.0
    %922 = vmatpush1.msra.mxu0 0.0
    %923 = vmatprep.subr.mxu0 0.0
    %924 = vmatpush1.msra.mxu0 %v268
    %925 = vmatprep.subr.mxu0 0.0
    %926 = vmatpush1.msra.mxu0 %v267
    %927 = vmatprep.subr.mxu0 0.0
    %928 = vmatpush1.msra.mxu0 %v266
    %929 = vmatprep.subr.mxu0 0.0
    %930 = vmatpush1.msra.mxu0 %v265
    %931 = vmatprep.subr.mxu0 0.0
    %932 = vmatpush2.msra.mxu0 0.0
    %933 = vmatprep.subr.mxu0 0.0
    %934 = vmatpush2.msra.mxu0 0.0
    %935 = vmatprep.subr.mxu0 0.0
    %936 = vmatpush2.msra.mxu0 0.0
    %937 = vmatprep.subr.mxu0 0.0
    %938 = vmatpush2.msra.mxu0 0.0
    %939 = vmatprep.subr.mxu0 0.0
    %940 = vmatpush2.msra.mxu0 0.0
    %941 = vmatprep.subr.mxu0 0.0
    %942 = vmatpush2.msra.mxu0 0.0
    %943 = vmatprep.subr.mxu0 0.0
    %944 = vmatpush2.msra.mxu0 0.0
    %945 = vmatprep.subr.mxu0 0.0
    %946 = vmatpush2.msra.mxu0 0.0
    %947 = vmatprep.subr.mxu0 0.0
    %948 = vmatpush2.msra.mxu0 0.0
    %949 = vmatprep.subr.mxu0 0.0
    %950 = vmatpush2.msra.mxu0 0.0
    %951 = vmatprep.subr.mxu0 0.0
    %952 = vmatpush2.msra.mxu0 0.0
    %953 = vmatprep.subr.mxu0 0.0
    %954 = vmatpush2.msra.mxu0 0.0
    %955 = vmatprep.subr.mxu0 0.0
    %956 = vmatpush2.msra.mxu0 0.0
    %957 = vmatprep.subr.mxu0 0.0
    %958 = vmatpush2.msra.mxu0 0.0
    %959 = vmatprep.subr.mxu0 0.0
    %960 = vmatpush2.msra.mxu0 0.0
    %961 = vmatprep.subr.mxu0 0.0
    %962 = vmatpush2.msra.mxu0 0.0
    %963 = vmatprep.mubr.f32.mxu0 0.0
    %964 = vmatmul.mubr.f32.gmra.mxu0 %v638
    %v965 = vpop.f32.mrf.mxu0
    %v966 = vadd.f32 0.0, %v965
    %v967 = vpop.f32.mrf.mxu0
    %968 = vdwg.mxu0
    %970 = vrot.lane.b32.xlu0 %v898, 32
    %v971 = vpop.permute.xlu0 %970
    %v972 = vsel %vm276, %v971, 0
    %974 = vmatprep.subr.mxu0 0.0
    %975 = vmatpush1.msra.mxu0 0.0
    %976 = vmatprep.subr.mxu0 0.0
    %977 = vmatpush1.msra.mxu0 0.0
    %978 = vmatprep.subr.mxu0 0.0
    %979 = vmatpush1.msra.mxu0 0.0
    %980 = vmatprep.subr.mxu0 0.0
    %981 = vmatpush1.msra.mxu0 0.0
    %982 = vmatprep.subr.mxu0 0.0
    %983 = vmatpush1.msra.mxu0 0.0
    %984 = vmatprep.subr.mxu0 0.0
    %985 = vmatpush1.msra.mxu0 0.0
    %986 = vmatprep.subr.mxu0 0.0
    %987 = vmatpush1.msra.mxu0 0.0
    %988 = vmatprep.subr.mxu0 0.0
    %989 = vmatpush1.msra.mxu0 0.0
    %990 = vmatprep.subr.mxu0 0.0
    %991 = vmatpush1.msra.mxu0 0.0
    %992 = vmatprep.subr.mxu0 0.0
    %993 = vmatpush1.msra.mxu0 0.0
    %994 = vmatprep.subr.mxu0 0.0
    %995 = vmatpush1.msra.mxu0 0.0
    %996 = vmatprep.subr.mxu0 0.0
    %997 = vmatpush1.msra.mxu0 0.0
    %998 = vmatprep.subr.mxu0 0.0
    %999 = vmatpush1.msra.mxu0 %v264
    %1000 = vmatprep.subr.mxu0 0.0
    %1001 = vmatpush1.msra.mxu0 %v263
    %1002 = vmatprep.subr.mxu0 0.0
    %1003 = vmatpush1.msra.mxu0 %v262
    %1004 = vmatprep.subr.mxu0 0.0
    %1005 = vmatpush1.msra.mxu0 %v261
    %1006 = vmatprep.subr.mxu0 0.0
    %1007 = vmatpush2.msra.mxu0 0.0
    %1008 = vmatprep.subr.mxu0 0.0
    %1009 = vmatpush2.msra.mxu0 0.0
    %1010 = vmatprep.subr.mxu0 0.0
    %1011 = vmatpush2.msra.mxu0 0.0
    %1012 = vmatprep.subr.mxu0 0.0
    %1013 = vmatpush2.msra.mxu0 0.0
    %1014 = vmatprep.subr.mxu0 0.0
    %1015 = vmatpush2.msra.mxu0 0.0
    %1016 = vmatprep.subr.mxu0 0.0
    %1017 = vmatpush2.msra.mxu0 0.0
    %1018 = vmatprep.subr.mxu0 0.0
    %1019 = vmatpush2.msra.mxu0 0.0
    %1020 = vmatprep.subr.mxu0 0.0
    %1021 = vmatpush2.msra.mxu0 0.0
    %1022 = vmatprep.subr.mxu0 0.0
    %1023 = vmatpush2.msra.mxu0 0.0
    %1024 = vmatprep.subr.mxu0 0.0
    %1025 = vmatpush2.msra.mxu0 0.0
    %1026 = vmatprep.subr.mxu0 0.0
    %1027 = vmatpush2.msra.mxu0 0.0
    %1028 = vmatprep.subr.mxu0 0.0
    %1029 = vmatpush2.msra.mxu0 0.0
    %1030 = vmatprep.subr.mxu0 0.0
    %1031 = vmatpush2.msra.mxu0 0.0
    %1032 = vmatprep.subr.mxu0 0.0
    %1033 = vmatpush2.msra.mxu0 0.0
    %1034 = vmatprep.subr.mxu0 0.0
    %1035 = vmatpush2.msra.mxu0 0.0
    %1036 = vmatprep.subr.mxu0 0.0
    %1037 = vmatpush2.msra.mxu0 0.0
    %1038 = vmatprep.mubr.f32.mxu0 0.0
    %1039 = vmatmul.mubr.f32.gmra.mxu0 %v972
    %v1040 = vpop.f32.mrf.mxu0
    %v1041 = vadd.f32 %v966, %v1040
    %v1042 = vpop.f32.mrf.mxu0
    %1043 = vdwg.mxu0
    %v1044 = vadd.f32 %v1041, %v601
    %v1045 = vxor.u32 %v1044, 2147483648
    %v1046 = vmul.f32 %v1045, 1.442695
    %v1047 = vpow.pop %v1046
    %v1048 = vadd.f32 %v1047, 1.0
    %v1049 = vrcp.pop %v1048
    %v1050 = vmul.f32 1.0, %v1049
    %v1051 = vmul.f32 %v1050, 2.0
    %v1052 = vsub.f32 %v1051, 1.0
    %v1053 = vmul.f32 %v1050, %v622
    %1055 = vrot.lane.b32.xlu0 %v1052, 64
    %v1056 = vpop.permute.xlu0 %1055
    %v1058 = vmul.f32 %v1050, %v1056
    %1060 = vrot.lane.b32.xlu0 %v1058, 32
    %v1061 = vpop.permute.xlu0 %1060
    %v1063 = vadd.f32 %v1053, %v1061
    %v1064 = vtanh.pop %v1063
    %1066 = vrot.lane.b32.xlu0 %v1064, 64
    %v1067 = vpop.permute.xlu0 %1066
    %v1069 = vmul.f32 %v1050, %v1067
    %1071 = vrot.lane.b32.xlu0 %v1069, 32
    %v1072 = vpop.permute.xlu0 %1071
    %v1073 = vsel %vm276, %v1072, 0
    %1075 = vmatprep.subr.mxu0 0.0
    %1076 = vmatpush1.msra.mxu0 0.0
    %1077 = vmatprep.subr.mxu0 0.0
    %1078 = vmatpush1.msra.mxu0 0.0
    %1079 = vmatprep.subr.mxu0 0.0
    %1080 = vmatpush1.msra.mxu0 0.0
    %1081 = vmatprep.subr.mxu0 0.0
    %1082 = vmatpush1.msra.mxu0 0.0
    %1083 = vmatprep.subr.mxu0 0.0
    %1084 = vmatpush1.msra.mxu0 0.0
    %1085 = vmatprep.subr.mxu0 0.0
    %1086 = vmatpush1.msra.mxu0 0.0
    %1087 = vmatprep.subr.mxu0 0.0
    %1088 = vmatpush1.msra.mxu0 0.0
    %1089 = vmatprep.subr.mxu0 0.0
    %1090 = vmatpush1.msra.mxu0 0.0
    %1091 = vmatprep.subr.mxu0 0.0
    %1092 = vmatpush1.msra.mxu0 0.0
    %1093 = vmatprep.subr.mxu0 0.0
    %1094 = vmatpush1.msra.mxu0 0.0
    %1095 = vmatprep.subr.mxu0 0.0
    %1096 = vmatpush1.msra.mxu0 0.0
    %1097 = vmatprep.subr.mxu0 0.0
    %1098 = vmatpush1.msra.mxu0 0.0
    %1099 = vmatprep.subr.mxu0 0.0
    %1100 = vmatpush1.msra.mxu0 %v273
    %1101 = vmatprep.subr.mxu0 0.0
    %1102 = vmatpush1.msra.mxu0 %v272
    %1103 = vmatprep.subr.mxu0 0.0
    %1104 = vmatpush1.msra.mxu0 %v271
    %1105 = vmatprep.subr.mxu0 0.0
    %1106 = vmatpush1.msra.mxu0 %v270
    %1107 = vmatprep.subr.mxu0 0.0
    %1108 = vmatpush2.msra.mxu0 0.0
    %1109 = vmatprep.subr.mxu0 0.0
    %1110 = vmatpush2.msra.mxu0 0.0
    %1111 = vmatprep.subr.mxu0 0.0
    %1112 = vmatpush2.msra.mxu0 0.0
    %1113 = vmatprep.subr.mxu0 0.0
    %1114 = vmatpush2.msra.mxu0 0.0
    %1115 = vmatprep.subr.mxu0 0.0
    %1116 = vmatpush2.msra.mxu0 0.0
    %1117 = vmatprep.subr.mxu0 0.0
    %1118 = vmatpush2.msra.mxu0 0.0
    %1119 = vmatprep.subr.mxu0 0.0
    %1120 = vmatpush2.msra.mxu0 0.0
    %1121 = vmatprep.subr.mxu0 0.0
    %1122 = vmatpush2.msra.mxu0 0.0
    %1123 = vmatprep.subr.mxu0 0.0
    %1124 = vmatpush2.msra.mxu0 0.0
    %1125 = vmatprep.subr.mxu0 0.0
    %1126 = vmatpush2.msra.mxu0 0.0
    %1127 = vmatprep.subr.mxu0 0.0
    %1128 = vmatpush2.msra.mxu0 0.0
    %1129 = vmatprep.subr.mxu0 0.0
    %1130 = vmatpush2.msra.mxu0 0.0
    %1131 = vmatprep.subr.mxu0 0.0
    %1132 = vmatpush2.msra.mxu0 0.0
    %1133 = vmatprep.subr.mxu0 0.0
    %1134 = vmatpush2.msra.mxu0 0.0
    %1135 = vmatprep.subr.mxu0 0.0
    %1136 = vmatpush2.msra.mxu0 0.0
    %1137 = vmatprep.subr.mxu0 0.0
    %1138 = vmatpush2.msra.mxu0 0.0
    %1139 = vmatprep.mubr.f32.mxu0 0.0
    %1140 = vmatmul.mubr.f32.gmra.mxu0 %v1073
    %v1141 = vpop.f32.mrf.mxu0
    %v1142 = vadd.f32 %v633, %v1141
    %v1143 = vpop.f32.mrf.mxu0
    %1144 = vdwg.mxu0
    %s1145 = scalar_lea.vmem %s15, 8
    %1146 = vst [vmem:[%s1145] sm:$0xff] %v1142
    %1147 = vmax.xlane.f32.xlu0 %v1142
    %v1148 = vpop.xlane.xlu0 %1147
    %vm1149 = vcmp.eq.f32.partialorder %v1142, %v1148
    %v1150 = vsel %vm1149, %v717, -128.0
    %1151 = vmax.xlane.f32.xlu0 %v1150
    %v1152 = vpop.xlane.xlu0 %1151
    %v1153 = vsub.f32 0.0, %v1152
    %vm1154 = vcmp.eq.f32.partialorder %v713, %v1153
    %v1155 = vsel %vm1154, 1, 0
    %v1156 = vcvt.s32.f32 %v1155
    %s1157 = sld [smem:[#allocation2 + $0x2]]
    %p1158 = scmp.ne.s32.totalorder %s1157, 0
    %s1159 = scalar_lea.vmem %s2, 16
    %v1160 = vld [vmem:[%s1159] sm:$0xff]
    %s1161 = scalar_select %p1158, 1, 0
    %v1162 = vstv %s1161
    %vm1163 = vcmp.eq.s32.totalorder %v1162, 1
    %v1164 = vsel %vm1163, %v1160, %v1156
    %1165 = vmatprep.subr.mxu0 0.0
    %1166 = vmatpush1.msra.mxu0 0.0
    %1167 = vmatprep.subr.mxu0 0.0
    %1168 = vmatpush1.msra.mxu0 0.0
    %1169 = vmatprep.subr.mxu0 0.0
    %1170 = vmatpush1.msra.mxu0 0.0
    %1171 = vmatprep.subr.mxu0 0.0
    %1172 = vmatpush1.msra.mxu0 0.0
    %1173 = vmatprep.subr.mxu0 0.0
    %1174 = vmatpush1.msra.mxu0 0.0
    %1175 = vmatprep.subr.mxu0 0.0
    %1176 = vmatpush1.msra.mxu0 0.0
    %1177 = vmatprep.subr.mxu0 0.0
    %1178 = vmatpush1.msra.mxu0 0.0
    %1179 = vmatprep.subr.mxu0 0.0
    %1180 = vmatpush1.msra.mxu0 0.0
    %1181 = vmatprep.subr.mxu0 0.0
    %1182 = vmatpush1.msra.mxu0 0.0
    %1183 = vmatprep.subr.mxu0 0.0
    %1184 = vmatpush1.msra.mxu0 0.0
    %1185 = vmatprep.subr.mxu0 0.0
    %1186 = vmatpush1.msra.mxu0 0.0
    %1187 = vmatprep.subr.mxu0 0.0
    %1188 = vmatpush1.msra.mxu0 0.0
    %1189 = vmatprep.subr.mxu0 0.0
    %1190 = vmatpush1.msra.mxu0 %v259
    %1191 = vmatprep.subr.mxu0 0.0
    %1192 = vmatpush1.msra.mxu0 %v258
    %1193 = vmatprep.subr.mxu0 0.0
    %1194 = vmatpush1.msra.mxu0 %v257
    %1195 = vmatprep.subr.mxu0 0.0
    %1196 = vmatpush1.msra.mxu0 %v256
    %1197 = vmatprep.subr.mxu0 0.0
    %1198 = vmatpush2.msra.mxu0 0.0
    %1199 = vmatprep.subr.mxu0 0.0
    %1200 = vmatpush2.msra.mxu0 0.0
    %1201 = vmatprep.subr.mxu0 0.0
    %1202 = vmatpush2.msra.mxu0 0.0
    %1203 = vmatprep.subr.mxu0 0.0
    %1204 = vmatpush2.msra.mxu0 0.0
    %1205 = vmatprep.subr.mxu0 0.0
    %1206 = vmatpush2.msra.mxu0 0.0
    %1207 = vmatprep.subr.mxu0 0.0
    %1208 = vmatpush2.msra.mxu0 0.0
    %1209 = vmatprep.subr.mxu0 0.0
    %1210 = vmatpush2.msra.mxu0 0.0
    %1211 = vmatprep.subr.mxu0 0.0
    %1212 = vmatpush2.msra.mxu0 0.0
    %1213 = vmatprep.subr.mxu0 0.0
    %1214 = vmatpush2.msra.mxu0 0.0
    %1215 = vmatprep.subr.mxu0 0.0
    %1216 = vmatpush2.msra.mxu0 0.0
    %1217 = vmatprep.subr.mxu0 0.0
    %1218 = vmatpush2.msra.mxu0 0.0
    %1219 = vmatprep.subr.mxu0 0.0
    %1220 = vmatpush2.msra.mxu0 0.0
    %1221 = vmatprep.subr.mxu0 0.0
    %1222 = vmatpush2.msra.mxu0 0.0
    %1223 = vmatprep.subr.mxu0 0.0
    %1224 = vmatpush2.msra.mxu0 0.0
    %1225 = vmatprep.subr.mxu0 0.0
    %1226 = vmatpush2.msra.mxu0 0.0
    %1227 = vmatprep.subr.mxu0 0.0
    %1228 = vmatpush2.msra.mxu0 0.0
    %1229 = vmatprep.mubr.f32.mxu0 0.0
    %1230 = vmatmul.mubr.f32.gmra.mxu0 %v972
    %v1231 = vpop.f32.mrf.mxu0
    %v1232 = vadd.f32 0.0, %v1231
    %v1233 = vpop.f32.mrf.mxu0
    %1234 = vdwg.mxu0
    %1235 = vmatprep.subr.mxu0 0.0
    %1236 = vmatpush1.msra.mxu0 %v255
    %1237 = vmatprep.subr.mxu0 0.0
    %1238 = vmatpush1.msra.mxu0 %v254
    %1239 = vmatprep.subr.mxu0 0.0
    %1240 = vmatpush1.msra.mxu0 %v253
    %1241 = vmatprep.subr.mxu0 0.0
    %1242 = vmatpush1.msra.mxu0 %v252
    %1243 = vmatprep.subr.mxu0 0.0
    %1244 = vmatpush1.msra.mxu0 %v251
    %1245 = vmatprep.subr.mxu0 0.0
    %1246 = vmatpush1.msra.mxu0 %v250
    %1247 = vmatprep.subr.mxu0 0.0
    %1248 = vmatpush1.msra.mxu0 %v249
    %1249 = vmatprep.subr.mxu0 0.0
    %1250 = vmatpush1.msra.mxu0 %v248
    %1251 = vmatprep.subr.mxu0 0.0
    %1252 = vmatpush1.msra.mxu0 %v247
    %1253 = vmatprep.subr.mxu0 0.0
    %1254 = vmatpush1.msra.mxu0 %v246
    %1255 = vmatprep.subr.mxu0 0.0
    %1256 = vmatpush1.msra.mxu0 %v245
    %1257 = vmatprep.subr.mxu0 0.0
    %1258 = vmatpush1.msra.mxu0 %v244
    %1259 = vmatprep.subr.mxu0 0.0
    %1260 = vmatpush1.msra.mxu0 %v243
    %1261 = vmatprep.subr.mxu0 0.0
    %1262 = vmatpush1.msra.mxu0 %v242
    %1263 = vmatprep.subr.mxu0 0.0
    %1264 = vmatpush1.msra.mxu0 %v241
    %1265 = vmatprep.subr.mxu0 0.0
    %1266 = vmatpush1.msra.mxu0 %v240
    %1267 = vmatprep.subr.mxu0 0.0
    %1268 = vmatpush2.msra.mxu0 0.0
    %1269 = vmatprep.subr.mxu0 0.0
    %1270 = vmatpush2.msra.mxu0 0.0
    %1271 = vmatprep.subr.mxu0 0.0
    %1272 = vmatpush2.msra.mxu0 0.0
    %1273 = vmatprep.subr.mxu0 0.0
    %1274 = vmatpush2.msra.mxu0 0.0
    %1275 = vmatprep.subr.mxu0 0.0
    %1276 = vmatpush2.msra.mxu0 0.0
    %1277 = vmatprep.subr.mxu0 0.0
    %1278 = vmatpush2.msra.mxu0 0.0
    %1279 = vmatprep.subr.mxu0 0.0
    %1280 = vmatpush2.msra.mxu0 0.0
    %1281 = vmatprep.subr.mxu0 0.0
    %1282 = vmatpush2.msra.mxu0 0.0
    %1283 = vmatprep.subr.mxu0 0.0
    %1284 = vmatpush2.msra.mxu0 0.0
    %1285 = vmatprep.subr.mxu0 0.0
    %1286 = vmatpush2.msra.mxu0 0.0
    %1287 = vmatprep.subr.mxu0 0.0
    %1288 = vmatpush2.msra.mxu0 0.0
    %1289 = vmatprep.subr.mxu0 0.0
    %1290 = vmatpush2.msra.mxu0 0.0
    %1291 = vmatprep.subr.mxu0 0.0
    %1292 = vmatpush2.msra.mxu0 0.0
    %1293 = vmatprep.subr.mxu0 0.0
    %1294 = vmatpush2.msra.mxu0 0.0
    %1295 = vmatprep.subr.mxu0 0.0
    %1296 = vmatpush2.msra.mxu0 0.0
    %1297 = vmatprep.subr.mxu0 0.0
    %1298 = vmatpush2.msra.mxu0 0.0
    %1299 = vmatprep.mubr.f32.mxu0 0.0
    %1300 = vmatmul.mubr.f32.gmra.mxu0 %v1164
    %v1301 = vpop.f32.mrf.mxu0
    %v1302 = vadd.f32 %v1232, %v1301
    %v1303 = vpop.f32.mrf.mxu0
    %1304 = vdwg.mxu0
    %v1305 = vadd.f32 %v1302, %v424
    %v1306 = vxor.u32 %v1305, 2147483648
    %v1307 = vmul.f32 %v1306, 1.442695
    %v1308 = vpow.pop %v1307
    %v1309 = vadd.f32 %v1308, 1.0
    %v1310 = vrcp.pop %v1309
    %v1311 = vmul.f32 1.0, %v1310
    %v1312 = vmul.f32 %v1311, 2.0
    %v1313 = vsub.f32 %v1312, 1.0
    %v1314 = vmul.f32 %v1311, %v892
    %1316 = vrot.lane.b32.xlu0 %v1313, 64
    %v1317 = vpop.permute.xlu0 %1316
    %v1319 = vmul.f32 %v1311, %v1317
    %1321 = vrot.lane.b32.xlu0 %v1319, 32
    %v1322 = vpop.permute.xlu0 %1321
    %v1324 = vadd.f32 %v1314, %v1322
    %v1325 = vtanh.pop %v1324
    %1327 = vrot.lane.b32.xlu0 %v1325, 64
    %v1328 = vpop.permute.xlu0 %1327
    %v1330 = vmul.f32 %v1311, %v1328
    %1331 = vmatprep.subr.mxu0 0.0
    %1332 = vmatpush1.msra.mxu0 0.0
    %1333 = vmatprep.subr.mxu0 0.0
    %1334 = vmatpush1.msra.mxu0 0.0
    %1335 = vmatprep.subr.mxu0 0.0
    %1336 = vmatpush1.msra.mxu0 0.0
    %1337 = vmatprep.subr.mxu0 0.0
    %1338 = vmatpush1.msra.mxu0 0.0
    %1339 = vmatprep.subr.mxu0 0.0
    %1340 = vmatpush1.msra.mxu0 0.0
    %1341 = vmatprep.subr.mxu0 0.0
    %1342 = vmatpush1.msra.mxu0 0.0
    %1343 = vmatprep.subr.mxu0 0.0
    %1344 = vmatpush1.msra.mxu0 0.0
    %1345 = vmatprep.subr.mxu0 0.0
    %1346 = vmatpush1.msra.mxu0 0.0
    %1347 = vmatprep.subr.mxu0 0.0
    %1348 = vmatpush1.msra.mxu0 0.0
    %1349 = vmatprep.subr.mxu0 0.0
    %1350 = vmatpush1.msra.mxu0 0.0
    %1351 = vmatprep.subr.mxu0 0.0
    %1352 = vmatpush1.msra.mxu0 0.0
    %1353 = vmatprep.subr.mxu0 0.0
    %1354 = vmatpush1.msra.mxu0 0.0
    %1355 = vmatprep.subr.mxu0 0.0
    %1356 = vmatpush1.msra.mxu0 %v268
    %1357 = vmatprep.subr.mxu0 0.0
    %1358 = vmatpush1.msra.mxu0 %v267
    %1359 = vmatprep.subr.mxu0 0.0
    %1360 = vmatpush1.msra.mxu0 %v266
    %1361 = vmatprep.subr.mxu0 0.0
    %1362 = vmatpush1.msra.mxu0 %v265
    %1363 = vmatprep.subr.mxu0 0.0
    %1364 = vmatpush2.msra.mxu0 0.0
    %1365 = vmatprep.subr.mxu0 0.0
    %1366 = vmatpush2.msra.mxu0 0.0
    %1367 = vmatprep.subr.mxu0 0.0
    %1368 = vmatpush2.msra.mxu0 0.0
    %1369 = vmatprep.subr.mxu0 0.0
    %1370 = vmatpush2.msra.mxu0 0.0
    %1371 = vmatprep.subr.mxu0 0.0
    %1372 = vmatpush2.msra.mxu0 0.0
    %1373 = vmatprep.subr.mxu0 0.0
    %1374 = vmatpush2.msra.mxu0 0.0
    %1375 = vmatprep.subr.mxu0 0.0
    %1376 = vmatpush2.msra.mxu0 0.0
    %1377 = vmatprep.subr.mxu0 0.0
    %1378 = vmatpush2.msra.mxu0 0.0
    %1379 = vmatprep.subr.mxu0 0.0
    %1380 = vmatpush2.msra.mxu0 0.0
    %1381 = vmatprep.subr.mxu0 0.0
    %1382 = vmatpush2.msra.mxu0 0.0
    %1383 = vmatprep.subr.mxu0 0.0
    %1384 = vmatpush2.msra.mxu0 0.0
    %1385 = vmatprep.subr.mxu0 0.0
    %1386 = vmatpush2.msra.mxu0 0.0
    %1387 = vmatprep.subr.mxu0 0.0
    %1388 = vmatpush2.msra.mxu0 0.0
    %1389 = vmatprep.subr.mxu0 0.0
    %1390 = vmatpush2.msra.mxu0 0.0
    %1391 = vmatprep.subr.mxu0 0.0
    %1392 = vmatpush2.msra.mxu0 0.0
    %1393 = vmatprep.subr.mxu0 0.0
    %1394 = vmatpush2.msra.mxu0 0.0
    %1395 = vmatprep.mubr.f32.mxu0 0.0
    %1396 = vmatmul.mubr.f32.gmra.mxu0 %v1073
    %v1397 = vpop.f32.mrf.mxu0
    %v1398 = vadd.f32 0.0, %v1397
    %v1399 = vpop.f32.mrf.mxu0
    %1400 = vdwg.mxu0
    %1402 = vrot.lane.b32.xlu0 %v1330, 32
    %v1403 = vpop.permute.xlu0 %1402
    %v1404 = vsel %vm276, %v1403, 0
    %1406 = vmatprep.subr.mxu0 0.0
    %1407 = vmatpush1.msra.mxu0 0.0
    %1408 = vmatprep.subr.mxu0 0.0
    %1409 = vmatpush1.msra.mxu0 0.0
    %1410 = vmatprep.subr.mxu0 0.0
    %1411 = vmatpush1.msra.mxu0 0.0
    %1412 = vmatprep.subr.mxu0 0.0
    %1413 = vmatpush1.msra.mxu0 0.0
    %1414 = vmatprep.subr.mxu0 0.0
    %1415 = vmatpush1.msra.mxu0 0.0
    %1416 = vmatprep.subr.mxu0 0.0
    %1417 = vmatpush1.msra.mxu0 0.0
    %1418 = vmatprep.subr.mxu0 0.0
    %1419 = vmatpush1.msra.mxu0 0.0
    %1420 = vmatprep.subr.mxu0 0.0
    %1421 = vmatpush1.msra.mxu0 0.0
    %1422 = vmatprep.subr.mxu0 0.0
    %1423 = vmatpush1.msra.mxu0 0.0
    %1424 = vmatprep.subr.mxu0 0.0
    %1425 = vmatpush1.msra.mxu0 0.0
    %1426 = vmatprep.subr.mxu0 0.0
    %1427 = vmatpush1.msra.mxu0 0.0
    %1428 = vmatprep.subr.mxu0 0.0
    %1429 = vmatpush1.msra.mxu0 0.0
    %1430 = vmatprep.subr.mxu0 0.0
    %1431 = vmatpush1.msra.mxu0 %v264
    %1432 = vmatprep.subr.mxu0 0.0
    %1433 = vmatpush1.msra.mxu0 %v263
    %1434 = vmatprep.subr.mxu0 0.0
    %1435 = vmatpush1.msra.mxu0 %v262
    %1436 = vmatprep.subr.mxu0 0.0
    %1437 = vmatpush1.msra.mxu0 %v261
    %1438 = vmatprep.subr.mxu0 0.0
    %1439 = vmatpush2.msra.mxu0 0.0
    %1440 = vmatprep.subr.mxu0 0.0
    %1441 = vmatpush2.msra.mxu0 0.0
    %1442 = vmatprep.subr.mxu0 0.0
    %1443 = vmatpush2.msra.mxu0 0.0
    %1444 = vmatprep.subr.mxu0 0.0
    %1445 = vmatpush2.msra.mxu0 0.0
    %1446 = vmatprep.subr.mxu0 0.0
    %1447 = vmatpush2.msra.mxu0 0.0
    %1448 = vmatprep.subr.mxu0 0.0
    %1449 = vmatpush2.msra.mxu0 0.0
    %1450 = vmatprep.subr.mxu0 0.0
    %1451 = vmatpush2.msra.mxu0 0.0
    %1452 = vmatprep.subr.mxu0 0.0
    %1453 = vmatpush2.msra.mxu0 0.0
    %1454 = vmatprep.subr.mxu0 0.0
    %1455 = vmatpush2.msra.mxu0 0.0
    %1456 = vmatprep.subr.mxu0 0.0
    %1457 = vmatpush2.msra.mxu0 0.0
    %1458 = vmatprep.subr.mxu0 0.0
    %1459 = vmatpush2.msra.mxu0 0.0
    %1460 = vmatprep.subr.mxu0 0.0
    %1461 = vmatpush2.msra.mxu0 0.0
    %1462 = vmatprep.subr.mxu0 0.0
    %1463 = vmatpush2.msra.mxu0 0.0
    %1464 = vmatprep.subr.mxu0 0.0
    %1465 = vmatpush2.msra.mxu0 0.0
    %1466 = vmatprep.subr.mxu0 0.0
    %1467 = vmatpush2.msra.mxu0 0.0
    %1468 = vmatprep.subr.mxu0 0.0
    %1469 = vmatpush2.msra.mxu0 0.0
    %1470 = vmatprep.mubr.f32.mxu0 0.0
    %1471 = vmatmul.mubr.f32.gmra.mxu0 %v1404
    %v1472 = vpop.f32.mrf.mxu0
    %v1473 = vadd.f32 %v1398, %v1472
    %v1474 = vpop.f32.mrf.mxu0
    %1475 = vdwg.mxu0
    %v1476 = vadd.f32 %v1473, %v601
    %v1477 = vxor.u32 %v1476, 2147483648
    %v1478 = vmul.f32 %v1477, 1.442695
    %v1479 = vpow.pop %v1478
    %v1480 = vadd.f32 %v1479, 1.0
    %v1481 = vrcp.pop %v1480
    %v1482 = vmul.f32 1.0, %v1481
    %v1483 = vmul.f32 %v1482, 2.0
    %v1484 = vsub.f32 %v1483, 1.0
    %v1485 = vmul.f32 %v1482, %v1063
    %1487 = vrot.lane.b32.xlu0 %v1484, 64
    %v1488 = vpop.permute.xlu0 %1487
    %v1490 = vmul.f32 %v1482, %v1488
    %1492 = vrot.lane.b32.xlu0 %v1490, 32
    %v1493 = vpop.permute.xlu0 %1492
    %v1495 = vadd.f32 %v1485, %v1493
    %v1496 = vtanh.pop %v1495
    %1498 = vrot.lane.b32.xlu0 %v1496, 64
    %v1499 = vpop.permute.xlu0 %1498
    %v1501 = vmul.f32 %v1482, %v1499
    %1503 = vrot.lane.b32.xlu0 %v1501, 32
    %v1504 = vpop.permute.xlu0 %1503
    %v1505 = vsel %vm276, %v1504, 0
    %1507 = vmatprep.subr.mxu0 0.0
    %1508 = vmatpush1.msra.mxu0 0.0
    %1509 = vmatprep.subr.mxu0 0.0
    %1510 = vmatpush1.msra.mxu0 0.0
    %1511 = vmatprep.subr.mxu0 0.0
    %1512 = vmatpush1.msra.mxu0 0.0
    %1513 = vmatprep.subr.mxu0 0.0
    %1514 = vmatpush1.msra.mxu0 0.0
    %1515 = vmatprep.subr.mxu0 0.0
    %1516 = vmatpush1.msra.mxu0 0.0
    %1517 = vmatprep.subr.mxu0 0.0
    %1518 = vmatpush1.msra.mxu0 0.0
    %1519 = vmatprep.subr.mxu0 0.0
    %1520 = vmatpush1.msra.mxu0 0.0
    %1521 = vmatprep.subr.mxu0 0.0
    %1522 = vmatpush1.msra.mxu0 0.0
    %1523 = vmatprep.subr.mxu0 0.0
    %1524 = vmatpush1.msra.mxu0 0.0
    %1525 = vmatprep.subr.mxu0 0.0
    %1526 = vmatpush1.msra.mxu0 0.0
    %1527 = vmatprep.subr.mxu0 0.0
    %1528 = vmatpush1.msra.mxu0 0.0
    %1529 = vmatprep.subr.mxu0 0.0
    %1530 = vmatpush1.msra.mxu0 0.0
    %1531 = vmatprep.subr.mxu0 0.0
    %1532 = vmatpush1.msra.mxu0 %v273
    %1533 = vmatprep.subr.mxu0 0.0
    %1534 = vmatpush1.msra.mxu0 %v272
    %1535 = vmatprep.subr.mxu0 0.0
    %1536 = vmatpush1.msra.mxu0 %v271
    %1537 = vmatprep.subr.mxu0 0.0
    %1538 = vmatpush1.msra.mxu0 %v270
    %1539 = vmatprep.subr.mxu0 0.0
    %1540 = vmatpush2.msra.mxu0 0.0
    %1541 = vmatprep.subr.mxu0 0.0
    %1542 = vmatpush2.msra.mxu0 0.0
    %1543 = vmatprep.subr.mxu0 0.0
    %1544 = vmatpush2.msra.mxu0 0.0
    %1545 = vmatprep.subr.mxu0 0.0
    %1546 = vmatpush2.msra.mxu0 0.0
    %1547 = vmatprep.subr.mxu0 0.0
    %1548 = vmatpush2.msra.mxu0 0.0
    %1549 = vmatprep.subr.mxu0 0.0
    %1550 = vmatpush2.msra.mxu0 0.0
    %1551 = vmatprep.subr.mxu0 0.0
    %1552 = vmatpush2.msra.mxu0 0.0
    %1553 = vmatprep.subr.mxu0 0.0
    %1554 = vmatpush2.msra.mxu0 0.0
    %1555 = vmatprep.subr.mxu0 0.0
    %1556 = vmatpush2.msra.mxu0 0.0
    %1557 = vmatprep.subr.mxu0 0.0
    %1558 = vmatpush2.msra.mxu0 0.0
    %1559 = vmatprep.subr.mxu0 0.0
    %1560 = vmatpush2.msra.mxu0 0.0
    %1561 = vmatprep.subr.mxu0 0.0
    %1562 = vmatpush2.msra.mxu0 0.0
    %1563 = vmatprep.subr.mxu0 0.0
    %1564 = vmatpush2.msra.mxu0 0.0
    %1565 = vmatprep.subr.mxu0 0.0
    %1566 = vmatpush2.msra.mxu0 0.0
    %1567 = vmatprep.subr.mxu0 0.0
    %1568 = vmatpush2.msra.mxu0 0.0
    %1569 = vmatprep.subr.mxu0 0.0
    %1570 = vmatpush2.msra.mxu0 0.0
    %1571 = vmatprep.mubr.f32.mxu0 0.0
    %1572 = vmatmul.mubr.f32.gmra.mxu0 %v1505
    %v1573 = vpop.f32.mrf.mxu0
    %v1574 = vadd.f32 %v633, %v1573
    %v1575 = vpop.f32.mrf.mxu0
    %1576 = vdwg.mxu0
    %s1577 = scalar_lea.vmem %s15, 16
    %1578 = vst [vmem:[%s1577] sm:$0xff] %v1574
    %1579 = vmax.xlane.f32.xlu0 %v1574
    %v1580 = vpop.xlane.xlu0 %1579
    %vm1581 = vcmp.eq.f32.partialorder %v1574, %v1580
    %v1582 = vsel %vm1581, %v717, -128.0
    %1583 = vmax.xlane.f32.xlu0 %v1582
    %v1584 = vpop.xlane.xlu0 %1583
    %v1585 = vsub.f32 0.0, %v1584
    %vm1586 = vcmp.eq.f32.partialorder %v713, %v1585
    %v1587 = vsel %vm1586, 1, 0
    %v1588 = vcvt.s32.f32 %v1587
    %s1589 = sld [smem:[#allocation2 + $0x3]]
    %p1590 = scmp.ne.s32.totalorder %s1589, 0
    %s1591 = scalar_lea.vmem %s2, 24
    %v1592 = vld [vmem:[%s1591] sm:$0xff]
    %s1593 = scalar_select %p1590, 1, 0
    %v1594 = vstv %s1593
    %vm1595 = vcmp.eq.s32.totalorder %v1594, 1
    %v1596 = vsel %vm1595, %v1592, %v1588
    %1597 = vmatprep.subr.mxu0 0.0
    %1598 = vmatpush1.msra.mxu0 0.0
    %1599 = vmatprep.subr.mxu0 0.0
    %1600 = vmatpush1.msra.mxu0 0.0
    %1601 = vmatprep.subr.mxu0 0.0
    %1602 = vmatpush1.msra.mxu0 0.0
    %1603 = vmatprep.subr.mxu0 0.0
    %1604 = vmatpush1.msra.mxu0 0.0
    %1605 = vmatprep.subr.mxu0 0.0
    %1606 = vmatpush1.msra.mxu0 0.0
    %1607 = vmatprep.subr.mxu0 0.0
    %1608 = vmatpush1.msra.mxu0 0.0
    %1609 = vmatprep.subr.mxu0 0.0
    %1610 = vmatpush1.msra.mxu0 0.0
    %1611 = vmatprep.subr.mxu0 0.0
    %1612 = vmatpush1.msra.mxu0 0.0
    %1613 = vmatprep.subr.mxu0 0.0
    %1614 = vmatpush1.msra.mxu0 0.0
    %1615 = vmatprep.subr.mxu0 0.0
    %1616 = vmatpush1.msra.mxu0 0.0
    %1617 = vmatprep.subr.mxu0 0.0
    %1618 = vmatpush1.msra.mxu0 0.0
    %1619 = vmatprep.subr.mxu0 0.0
    %1620 = vmatpush1.msra.mxu0 0.0
    %1621 = vmatprep.subr.mxu0 0.0
    %1622 = vmatpush1.msra.mxu0 %v259
    %1623 = vmatprep.subr.mxu0 0.0
    %1624 = vmatpush1.msra.mxu0 %v258
    %1625 = vmatprep.subr.mxu0 0.0
    %1626 = vmatpush1.msra.mxu0 %v257
    %1627 = vmatprep.subr.mxu0 0.0
    %1628 = vmatpush1.msra.mxu0 %v256
    %1629 = vmatprep.subr.mxu0 0.0
    %1630 = vmatpush2.msra.mxu0 0.0
    %1631 = vmatprep.subr.mxu0 0.0
    %1632 = vmatpush2.msra.mxu0 0.0
    %1633 = vmatprep.subr.mxu0 0.0
    %1634 = vmatpush2.msra.mxu0 0.0
    %1635 = vmatprep.subr.mxu0 0.0
    %1636 = vmatpush2.msra.mxu0 0.0
    %1637 = vmatprep.subr.mxu0 0.0
    %1638 = vmatpush2.msra.mxu0 0.0
    %1639 = vmatprep.subr.mxu0 0.0
    %1640 = vmatpush2.msra.mxu0 0.0
    %1641 = vmatprep.subr.mxu0 0.0
    %1642 = vmatpush2.msra.mxu0 0.0
    %1643 = vmatprep.subr.mxu0 0.0
    %1644 = vmatpush2.msra.mxu0 0.0
    %1645 = vmatprep.subr.mxu0 0.0
    %1646 = vmatpush2.msra.mxu0 0.0
    %1647 = vmatprep.subr.mxu0 0.0
    %1648 = vmatpush2.msra.mxu0 0.0
    %1649 = vmatprep.subr.mxu0 0.0
    %1650 = vmatpush2.msra.mxu0 0.0
    %1651 = vmatprep.subr.mxu0 0.0
    %1652 = vmatpush2.msra.mxu0 0.0
    %1653 = vmatprep.subr.mxu0 0.0
    %1654 = vmatpush2.msra.mxu0 0.0
    %1655 = vmatprep.subr.mxu0 0.0
    %1656 = vmatpush2.msra.mxu0 0.0
    %1657 = vmatprep.subr.mxu0 0.0
    %1658 = vmatpush2.msra.mxu0 0.0
    %1659 = vmatprep.subr.mxu0 0.0
    %1660 = vmatpush2.msra.mxu0 0.0
    %1661 = vmatprep.mubr.f32.mxu0 0.0
    %1662 = vmatmul.mubr.f32.gmra.mxu0 %v1404
    %v1663 = vpop.f32.mrf.mxu0
    %v1664 = vadd.f32 0.0, %v1663
    %v1665 = vpop.f32.mrf.mxu0
    %1666 = vdwg.mxu0
    %1667 = vmatprep.subr.mxu0 0.0
    %1668 = vmatpush1.msra.mxu0 %v255
    %1669 = vmatprep.subr.mxu0 0.0
    %1670 = vmatpush1.msra.mxu0 %v254
    %1671 = vmatprep.subr.mxu0 0.0
    %1672 = vmatpush1.msra.mxu0 %v253
    %1673 = vmatprep.subr.mxu0 0.0
    %1674 = vmatpush1.msra.mxu0 %v252
    %1675 = vmatprep.subr.mxu0 0.0
    %1676 = vmatpush1.msra.mxu0 %v251
    %1677 = vmatprep.subr.mxu0 0.0
    %1678 = vmatpush1.msra.mxu0 %v250
    %1679 = vmatprep.subr.mxu0 0.0
    %1680 = vmatpush1.msra.mxu0 %v249
    %1681 = vmatprep.subr.mxu0 0.0
    %1682 = vmatpush1.msra.mxu0 %v248
    %1683 = vmatprep.subr.mxu0 0.0
    %1684 = vmatpush1.msra.mxu0 %v247
    %1685 = vmatprep.subr.mxu0 0.0
    %1686 = vmatpush1.msra.mxu0 %v246
    %1687 = vmatprep.subr.mxu0 0.0
    %1688 = vmatpush1.msra.mxu0 %v245
    %1689 = vmatprep.subr.mxu0 0.0
    %1690 = vmatpush1.msra.mxu0 %v244
    %1691 = vmatprep.subr.mxu0 0.0
    %1692 = vmatpush1.msra.mxu0 %v243
    %1693 = vmatprep.subr.mxu0 0.0
    %1694 = vmatpush1.msra.mxu0 %v242
    %1695 = vmatprep.subr.mxu0 0.0
    %1696 = vmatpush1.msra.mxu0 %v241
    %1697 = vmatprep.subr.mxu0 0.0
    %1698 = vmatpush1.msra.mxu0 %v240
    %1699 = vmatprep.subr.mxu0 0.0
    %1700 = vmatpush2.msra.mxu0 0.0
    %1701 = vmatprep.subr.mxu0 0.0
    %1702 = vmatpush2.msra.mxu0 0.0
    %1703 = vmatprep.subr.mxu0 0.0
    %1704 = vmatpush2.msra.mxu0 0.0
    %1705 = vmatprep.subr.mxu0 0.0
    %1706 = vmatpush2.msra.mxu0 0.0
    %1707 = vmatprep.subr.mxu0 0.0
    %1708 = vmatpush2.msra.mxu0 0.0
    %1709 = vmatprep.subr.mxu0 0.0
    %1710 = vmatpush2.msra.mxu0 0.0
    %1711 = vmatprep.subr.mxu0 0.0
    %1712 = vmatpush2.msra.mxu0 0.0
    %1713 = vmatprep.subr.mxu0 0.0
    %1714 = vmatpush2.msra.mxu0 0.0
    %1715 = vmatprep.subr.mxu0 0.0
    %1716 = vmatpush2.msra.mxu0 0.0
    %1717 = vmatprep.subr.mxu0 0.0
    %1718 = vmatpush2.msra.mxu0 0.0
    %1719 = vmatprep.subr.mxu0 0.0
    %1720 = vmatpush2.msra.mxu0 0.0
    %1721 = vmatprep.subr.mxu0 0.0
    %1722 = vmatpush2.msra.mxu0 0.0
    %1723 = vmatprep.subr.mxu0 0.0
    %1724 = vmatpush2.msra.mxu0 0.0
    %1725 = vmatprep.subr.mxu0 0.0
    %1726 = vmatpush2.msra.mxu0 0.0
    %1727 = vmatprep.subr.mxu0 0.0
    %1728 = vmatpush2.msra.mxu0 0.0
    %1729 = vmatprep.subr.mxu0 0.0
    %1730 = vmatpush2.msra.mxu0 0.0
    %1731 = vmatprep.mubr.f32.mxu0 0.0
    %1732 = vmatmul.mubr.f32.gmra.mxu0 %v1596
    %v1733 = vpop.f32.mrf.mxu0
    %v1734 = vadd.f32 %v1664, %v1733
    %v1735 = vpop.f32.mrf.mxu0
    %1736 = vdwg.mxu0
    %v1737 = vadd.f32 %v1734, %v424
    %v1738 = vxor.u32 %v1737, 2147483648
    %v1739 = vmul.f32 %v1738, 1.442695
    %v1740 = vpow.pop %v1739
    %v1741 = vadd.f32 %v1740, 1.0
    %v1742 = vrcp.pop %v1741
    %v1743 = vmul.f32 1.0, %v1742
    %v1744 = vmul.f32 %v1743, 2.0
    %v1745 = vsub.f32 %v1744, 1.0
    %v1746 = vmul.f32 %v1743, %v1324
    %1748 = vrot.lane.b32.xlu0 %v1745, 64
    %v1749 = vpop.permute.xlu0 %1748
    %v1751 = vmul.f32 %v1743, %v1749
    %1753 = vrot.lane.b32.xlu0 %v1751, 32
    %v1754 = vpop.permute.xlu0 %1753
    %v1756 = vadd.f32 %v1746, %v1754
    %v1757 = vtanh.pop %v1756
    %1759 = vrot.lane.b32.xlu0 %v1757, 64
    %v1760 = vpop.permute.xlu0 %1759
    %v1762 = vmul.f32 %v1743, %v1760
    %1763 = vmatprep.subr.mxu0 0.0
    %1764 = vmatpush1.msra.mxu0 0.0
    %1765 = vmatprep.subr.mxu0 0.0
    %1766 = vmatpush1.msra.mxu0 0.0
    %1767 = vmatprep.subr.mxu0 0.0
    %1768 = vmatpush1.msra.mxu0 0.0
    %1769 = vmatprep.subr.mxu0 0.0
    %1770 = vmatpush1.msra.mxu0 0.0
    %1771 = vmatprep.subr.mxu0 0.0
    %1772 = vmatpush1.msra.mxu0 0.0
    %1773 = vmatprep.subr.mxu0 0.0
    %1774 = vmatpush1.msra.mxu0 0.0
    %1775 = vmatprep.subr.mxu0 0.0
    %1776 = vmatpush1.msra.mxu0 0.0
    %1777 = vmatprep.subr.mxu0 0.0
    %1778 = vmatpush1.msra.mxu0 0.0
    %1779 = vmatprep.subr.mxu0 0.0
    %1780 = vmatpush1.msra.mxu0 0.0
    %1781 = vmatprep.subr.mxu0 0.0
    %1782 = vmatpush1.msra.mxu0 0.0
    %1783 = vmatprep.subr.mxu0 0.0
    %1784 = vmatpush1.msra.mxu0 0.0
    %1785 = vmatprep.subr.mxu0 0.0
    %1786 = vmatpush1.msra.mxu0 0.0
    %1787 = vmatprep.subr.mxu0 0.0
    %1788 = vmatpush1.msra.mxu0 %v268
    %1789 = vmatprep.subr.mxu0 0.0
    %1790 = vmatpush1.msra.mxu0 %v267
    %1791 = vmatprep.subr.mxu0 0.0
    %1792 = vmatpush1.msra.mxu0 %v266
    %1793 = vmatprep.subr.mxu0 0.0
    %1794 = vmatpush1.msra.mxu0 %v265
    %1795 = vmatprep.subr.mxu0 0.0
    %1796 = vmatpush2.msra.mxu0 0.0
    %1797 = vmatprep.subr.mxu0 0.0
    %1798 = vmatpush2.msra.mxu0 0.0
    %1799 = vmatprep.subr.mxu0 0.0
    %1800 = vmatpush2.msra.mxu0 0.0
    %1801 = vmatprep.subr.mxu0 0.0
    %1802 = vmatpush2.msra.mxu0 0.0
    %1803 = vmatprep.subr.mxu0 0.0
    %1804 = vmatpush2.msra.mxu0 0.0
    %1805 = vmatprep.subr.mxu0 0.0
    %1806 = vmatpush2.msra.mxu0 0.0
    %1807 = vmatprep.subr.mxu0 0.0
    %1808 = vmatpush2.msra.mxu0 0.0
    %1809 = vmatprep.subr.mxu0 0.0
    %1810 = vmatpush2.msra.mxu0 0.0
    %1811 = vmatprep.subr.mxu0 0.0
    %1812 = vmatpush2.msra.mxu0 0.0
    %1813 = vmatprep.subr.mxu0 0.0
    %1814 = vmatpush2.msra.mxu0 0.0
    %1815 = vmatprep.subr.mxu0 0.0
    %1816 = vmatpush2.msra.mxu0 0.0
    %1817 = vmatprep.subr.mxu0 0.0
    %1818 = vmatpush2.msra.mxu0 0.0
    %1819 = vmatprep.subr.mxu0 0.0
    %1820 = vmatpush2.msra.mxu0 0.0
    %1821 = vmatprep.subr.mxu0 0.0
    %1822 = vmatpush2.msra.mxu0 0.0
    %1823 = vmatprep.subr.mxu0 0.0
    %1824 = vmatpush2.msra.mxu0 0.0
    %1825 = vmatprep.subr.mxu0 0.0
    %1826 = vmatpush2.msra.mxu0 0.0
    %1827 = vmatprep.mubr.f32.mxu0 0.0
    %1828 = vmatmul.mubr.f32.gmra.mxu0 %v1505
    %v1829 = vpop.f32.mrf.mxu0
    %v1830 = vadd.f32 0.0, %v1829
    %v1831 = vpop.f32.mrf.mxu0
    %1832 = vdwg.mxu0
    %1834 = vrot.lane.b32.xlu0 %v1762, 32
    %v1835 = vpop.permute.xlu0 %1834
    %v1836 = vsel %vm276, %v1835, 0
    %1838 = vmatprep.subr.mxu0 0.0
    %1839 = vmatpush1.msra.mxu0 0.0
    %1840 = vmatprep.subr.mxu0 0.0
    %1841 = vmatpush1.msra.mxu0 0.0
    %1842 = vmatprep.subr.mxu0 0.0
    %1843 = vmatpush1.msra.mxu0 0.0
    %1844 = vmatprep.subr.mxu0 0.0
    %1845 = vmatpush1.msra.mxu0 0.0
    %1846 = vmatprep.subr.mxu0 0.0
    %1847 = vmatpush1.msra.mxu0 0.0
    %1848 = vmatprep.subr.mxu0 0.0
    %1849 = vmatpush1.msra.mxu0 0.0
    %1850 = vmatprep.subr.mxu0 0.0
    %1851 = vmatpush1.msra.mxu0 0.0
    %1852 = vmatprep.subr.mxu0 0.0
    %1853 = vmatpush1.msra.mxu0 0.0
    %1854 = vmatprep.subr.mxu0 0.0
    %1855 = vmatpush1.msra.mxu0 0.0
    %1856 = vmatprep.subr.mxu0 0.0
    %1857 = vmatpush1.msra.mxu0 0.0
    %1858 = vmatprep.subr.mxu0 0.0
    %1859 = vmatpush1.msra.mxu0 0.0
    %1860 = vmatprep.subr.mxu0 0.0
    %1861 = vmatpush1.msra.mxu0 0.0
    %1862 = vmatprep.subr.mxu0 0.0
    %1863 = vmatpush1.msra.mxu0 %v264
    %1864 = vmatprep.subr.mxu0 0.0
    %1865 = vmatpush1.msra.mxu0 %v263
    %1866 = vmatprep.subr.mxu0 0.0
    %1867 = vmatpush1.msra.mxu0 %v262
    %1868 = vmatprep.subr.mxu0 0.0
    %1869 = vmatpush1.msra.mxu0 %v261
    %1870 = vmatprep.subr.mxu0 0.0
    %1871 = vmatpush2.msra.mxu0 0.0
    %1872 = vmatprep.subr.mxu0 0.0
    %1873 = vmatpush2.msra.mxu0 0.0
    %1874 = vmatprep.subr.mxu0 0.0
    %1875 = vmatpush2.msra.mxu0 0.0
    %1876 = vmatprep.subr.mxu0 0.0
    %1877 = vmatpush2.msra.mxu0 0.0
    %1878 = vmatprep.subr.mxu0 0.0
    %1879 = vmatpush2.msra.mxu0 0.0
    %1880 = vmatprep.subr.mxu0 0.0
    %1881 = vmatpush2.msra.mxu0 0.0
    %1882 = vmatprep.subr.mxu0 0.0
    %1883 = vmatpush2.msra.mxu0 0.0
    %1884 = vmatprep.subr.mxu0 0.0
    %1885 = vmatpush2.msra.mxu0 0.0
    %1886 = vmatprep.subr.mxu0 0.0
    %1887 = vmatpush2.msra.mxu0 0.0
    %1888 = vmatprep.subr.mxu0 0.0
    %1889 = vmatpush2.msra.mxu0 0.0
    %1890 = vmatprep.subr.mxu0 0.0
    %1891 = vmatpush2.msra.mxu0 0.0
    %1892 = vmatprep.subr.mxu0 0.0
    %1893 = vmatpush2.msra.mxu0 0.0
    %1894 = vmatprep.subr.mxu0 0.0
    %1895 = vmatpush2.msra.mxu0 0.0
    %1896 = vmatprep.subr.mxu0 0.0
    %1897 = vmatpush2.msra.mxu0 0.0
    %1898 = vmatprep.subr.mxu0 0.0
    %1899 = vmatpush2.msra.mxu0 0.0
    %1900 = vmatprep.subr.mxu0 0.0
    %1901 = vmatpush2.msra.mxu0 0.0
    %1902 = vmatprep.mubr.f32.mxu0 0.0
    %1903 = vmatmul.mubr.f32.gmra.mxu0 %v1836
    %v1904 = vpop.f32.mrf.mxu0
    %v1905 = vadd.f32 %v1830, %v1904
    %v1906 = vpop.f32.mrf.mxu0
    %1907 = vdwg.mxu0
    %v1908 = vadd.f32 %v1905, %v601
    %v1909 = vxor.u32 %v1908, 2147483648
    %v1910 = vmul.f32 %v1909, 1.442695
    %v1911 = vpow.pop %v1910
    %v1912 = vadd.f32 %v1911, 1.0
    %v1913 = vrcp.pop %v1912
    %v1914 = vmul.f32 1.0, %v1913
    %v1915 = vmul.f32 %v1914, 2.0
    %v1916 = vsub.f32 %v1915, 1.0
    %v1917 = vmul.f32 %v1914, %v1495
    %1919 = vrot.lane.b32.xlu0 %v1916, 64
    %v1920 = vpop.permute.xlu0 %1919
    %v1922 = vmul.f32 %v1914, %v1920
    %1924 = vrot.lane.b32.xlu0 %v1922, 32
    %v1925 = vpop.permute.xlu0 %1924
    %v1927 = vadd.f32 %v1917, %v1925
    %v1928 = vtanh.pop %v1927
    %1930 = vrot.lane.b32.xlu0 %v1928, 64
    %v1931 = vpop.permute.xlu0 %1930
    %v1933 = vmul.f32 %v1914, %v1931
    %1935 = vrot.lane.b32.xlu0 %v1933, 32
    %v1936 = vpop.permute.xlu0 %1935
    %v1937 = vsel %vm276, %v1936, 0
    %1939 = vmatprep.subr.mxu0 0.0
    %1940 = vmatpush1.msra.mxu0 0.0
    %1941 = vmatprep.subr.mxu0 0.0
    %1942 = vmatpush1.msra.mxu0 0.0
    %1943 = vmatprep.subr.mxu0 0.0
    %1944 = vmatpush1.msra.mxu0 0.0
    %1945 = vmatprep.subr.mxu0 0.0
    %1946 = vmatpush1.msra.mxu0 0.0
    %1947 = vmatprep.subr.mxu0 0.0
    %1948 = vmatpush1.msra.mxu0 0.0
    %1949 = vmatprep.subr.mxu0 0.0
    %1950 = vmatpush1.msra.mxu0 0.0
    %1951 = vmatprep.subr.mxu0 0.0
    %1952 = vmatpush1.msra.mxu0 0.0
    %1953 = vmatprep.subr.mxu0 0.0
    %1954 = vmatpush1.msra.mxu0 0.0
    %1955 = vmatprep.subr.mxu0 0.0
    %1956 = vmatpush1.msra.mxu0 0.0
    %1957 = vmatprep.subr.mxu0 0.0
    %1958 = vmatpush1.msra.mxu0 0.0
    %1959 = vmatprep.subr.mxu0 0.0
    %1960 = vmatpush1.msra.mxu0 0.0
    %1961 = vmatprep.subr.mxu0 0.0
    %1962 = vmatpush1.msra.mxu0 0.0
    %1963 = vmatprep.subr.mxu0 0.0
    %1964 = vmatpush1.msra.mxu0 %v273
    %1965 = vmatprep.subr.mxu0 0.0
    %1966 = vmatpush1.msra.mxu0 %v272
    %1967 = vmatprep.subr.mxu0 0.0
    %1968 = vmatpush1.msra.mxu0 %v271
    %1969 = vmatprep.subr.mxu0 0.0
    %1970 = vmatpush1.msra.mxu0 %v270
    %1971 = vmatprep.subr.mxu0 0.0
    %1972 = vmatpush2.msra.mxu0 0.0
    %1973 = vmatprep.subr.mxu0 0.0
    %1974 = vmatpush2.msra.mxu0 0.0
    %1975 = vmatprep.subr.mxu0 0.0
    %1976 = vmatpush2.msra.mxu0 0.0
    %1977 = vmatprep.subr.mxu0 0.0
    %1978 = vmatpush2.msra.mxu0 0.0
    %1979 = vmatprep.subr.mxu0 0.0
    %1980 = vmatpush2.msra.mxu0 0.0
    %1981 = vmatprep.subr.mxu0 0.0
    %1982 = vmatpush2.msra.mxu0 0.0
    %1983 = vmatprep.subr.mxu0 0.0
    %1984 = vmatpush2.msra.mxu0 0.0
    %1985 = vmatprep.subr.mxu0 0.0
    %1986 = vmatpush2.msra.mxu0 0.0
    %1987 = vmatprep.subr.mxu0 0.0
    %1988 = vmatpush2.msra.mxu0 0.0
    %1989 = vmatprep.subr.mxu0 0.0
    %1990 = vmatpush2.msra.mxu0 0.0
    %1991 = vmatprep.subr.mxu0 0.0
    %1992 = vmatpush2.msra.mxu0 0.0
    %1993 = vmatprep.subr.mxu0 0.0
    %1994 = vmatpush2.msra.mxu0 0.0
    %1995 = vmatprep.subr.mxu0 0.0
    %1996 = vmatpush2.msra.mxu0 0.0
    %1997 = vmatprep.subr.mxu0 0.0
    %1998 = vmatpush2.msra.mxu0 0.0
    %1999 = vmatprep.subr.mxu0 0.0
    %2000 = vmatpush2.msra.mxu0 0.0
    %2001 = vmatprep.subr.mxu0 0.0
    %2002 = vmatpush2.msra.mxu0 0.0
    %2003 = vmatprep.mubr.f32.mxu0 0.0
    %2004 = vmatmul.mubr.f32.gmra.mxu0 %v1937
    %v2005 = vpop.f32.mrf.mxu0
    %v2006 = vadd.f32 %v633, %v2005
    %v2007 = vpop.f32.mrf.mxu0
    %2008 = vdwg.mxu0
    %s2009 = scalar_lea.vmem %s15, 24
    %2010 = vst [vmem:[%s2009] sm:$0xff] %v2006
    %2011 = vmax.xlane.f32.xlu0 %v2006
    %v2012 = vpop.xlane.xlu0 %2011
    %vm2013 = vcmp.eq.f32.partialorder %v2006, %v2012
    %v2014 = vsel %vm2013, %v717, -128.0
    %2015 = vmax.xlane.f32.xlu0 %v2014
    %v2016 = vpop.xlane.xlu0 %2015
    %v2017 = vsub.f32 0.0, %v2016
    %vm2018 = vcmp.eq.f32.partialorder %v713, %v2017
    %v2019 = vsel %vm2018, 1, 0
    %v2020 = vcvt.s32.f32 %v2019
    %s2021 = sld [smem:[#allocation2 + $0x4]]
    %p2022 = scmp.ne.s32.totalorder %s2021, 0
    %s2023 = scalar_lea.vmem %s2, 32
    %v2024 = vld [vmem:[%s2023] sm:$0xff]
    %s2025 = scalar_select %p2022, 1, 0
    %v2026 = vstv %s2025
    %vm2027 = vcmp.eq.s32.totalorder %v2026, 1
    %v2028 = vsel %vm2027, %v2024, %v2020
    %2029 = vmatprep.subr.mxu0 0.0
    %2030 = vmatpush1.msra.mxu0 0.0
    %2031 = vmatprep.subr.mxu0 0.0
    %2032 = vmatpush1.msra.mxu0 0.0
    %2033 = vmatprep.subr.mxu0 0.0
    %2034 = vmatpush1.msra.mxu0 0.0
    %2035 = vmatprep.subr.mxu0 0.0
    %2036 = vmatpush1.msra.mxu0 0.0
    %2037 = vmatprep.subr.mxu0 0.0
    %2038 = vmatpush1.msra.mxu0 0.0
    %2039 = vmatprep.subr.mxu0 0.0
    %2040 = vmatpush1.msra.mxu0 0.0
    %2041 = vmatprep.subr.mxu0 0.0
    %2042 = vmatpush1.msra.mxu0 0.0
    %2043 = vmatprep.subr.mxu0 0.0
    %2044 = vmatpush1.msra.mxu0 0.0
    %2045 = vmatprep.subr.mxu0 0.0
    %2046 = vmatpush1.msra.mxu0 0.0
    %2047 = vmatprep.subr.mxu0 0.0
    %2048 = vmatpush1.msra.mxu0 0.0
    %2049 = vmatprep.subr.mxu0 0.0
    %2050 = vmatpush1.msra.mxu0 0.0
    %2051 = vmatprep.subr.mxu0 0.0
    %2052 = vmatpush1.msra.mxu0 0.0
    %2053 = vmatprep.subr.mxu0 0.0
    %2054 = vmatpush1.msra.mxu0 %v259
    %2055 = vmatprep.subr.mxu0 0.0
    %2056 = vmatpush1.msra.mxu0 %v258
    %2057 = vmatprep.subr.mxu0 0.0
    %2058 = vmatpush1.msra.mxu0 %v257
    %2059 = vmatprep.subr.mxu0 0.0
    %2060 = vmatpush1.msra.mxu0 %v256
    %2061 = vmatprep.subr.mxu0 0.0
    %2062 = vmatpush2.msra.mxu0 0.0
    %2063 = vmatprep.subr.mxu0 0.0
    %2064 = vmatpush2.msra.mxu0 0.0
    %2065 = vmatprep.subr.mxu0 0.0
    %2066 = vmatpush2.msra.mxu0 0.0
    %2067 = vmatprep.subr.mxu0 0.0
    %2068 = vmatpush2.msra.mxu0 0.0
    %2069 = vmatprep.subr.mxu0 0.0
    %2070 = vmatpush2.msra.mxu0 0.0
    %2071 = vmatprep.subr.mxu0 0.0
    %2072 = vmatpush2.msra.mxu0 0.0
    %2073 = vmatprep.subr.mxu0 0.0
    %2074 = vmatpush2.msra.mxu0 0.0
    %2075 = vmatprep.subr.mxu0 0.0
    %2076 = vmatpush2.msra.mxu0 0.0
    %2077 = vmatprep.subr.mxu0 0.0
    %2078 = vmatpush2.msra.mxu0 0.0
    %2079 = vmatprep.subr.mxu0 0.0
    %2080 = vmatpush2.msra.mxu0 0.0
    %2081 = vmatprep.subr.mxu0 0.0
    %2082 = vmatpush2.msra.mxu0 0.0
    %2083 = vmatprep.subr.mxu0 0.0
    %2084 = vmatpush2.msra.mxu0 0.0
    %2085 = vmatprep.subr.mxu0 0.0
    %2086 = vmatpush2.msra.mxu0 0.0
    %2087 = vmatprep.subr.mxu0 0.0
    %2088 = vmatpush2.msra.mxu0 0.0
    %2089 = vmatprep.subr.mxu0 0.0
    %2090 = vmatpush2.msra.mxu0 0.0
    %2091 = vmatprep.subr.mxu0 0.0
    %2092 = vmatpush2.msra.mxu0 0.0
    %2093 = vmatprep.mubr.f32.mxu0 0.0
    %2094 = vmatmul.mubr.f32.gmra.mxu0 %v1836
    %v2095 = vpop.f32.mrf.mxu0
    %v2096 = vadd.f32 0.0, %v2095
    %v2097 = vpop.f32.mrf.mxu0
    %2098 = vdwg.mxu0
    %2099 = vmatprep.subr.mxu0 0.0
    %2100 = vmatpush1.msra.mxu0 %v255
    %2101 = vmatprep.subr.mxu0 0.0
    %2102 = vmatpush1.msra.mxu0 %v254
    %2103 = vmatprep.subr.mxu0 0.0
    %2104 = vmatpush1.msra.mxu0 %v253
    %2105 = vmatprep.subr.mxu0 0.0
    %2106 = vmatpush1.msra.mxu0 %v252
    %2107 = vmatprep.subr.mxu0 0.0
    %2108 = vmatpush1.msra.mxu0 %v251
    %2109 = vmatprep.subr.mxu0 0.0
    %2110 = vmatpush1.msra.mxu0 %v250
    %2111 = vmatprep.subr.mxu0 0.0
    %2112 = vmatpush1.msra.mxu0 %v249
    %2113 = vmatprep.subr.mxu0 0.0
    %2114 = vmatpush1.msra.mxu0 %v248
    %2115 = vmatprep.subr.mxu0 0.0
    %2116 = vmatpush1.msra.mxu0 %v247
    %2117 = vmatprep.subr.mxu0 0.0
    %2118 = vmatpush1.msra.mxu0 %v246
    %2119 = vmatprep.subr.mxu0 0.0
    %2120 = vmatpush1.msra.mxu0 %v245
    %2121 = vmatprep.subr.mxu0 0.0
    %2122 = vmatpush1.msra.mxu0 %v244
    %2123 = vmatprep.subr.mxu0 0.0
    %2124 = vmatpush1.msra.mxu0 %v243
    %2125 = vmatprep.subr.mxu0 0.0
    %2126 = vmatpush1.msra.mxu0 %v242
    %2127 = vmatprep.subr.mxu0 0.0
    %2128 = vmatpush1.msra.mxu0 %v241
    %2129 = vmatprep.subr.mxu0 0.0
    %2130 = vmatpush1.msra.mxu0 %v240
    %2131 = vmatprep.subr.mxu0 0.0
    %2132 = vmatpush2.msra.mxu0 0.0
    %2133 = vmatprep.subr.mxu0 0.0
    %2134 = vmatpush2.msra.mxu0 0.0
    %2135 = vmatprep.subr.mxu0 0.0
    %2136 = vmatpush2.msra.mxu0 0.0
    %2137 = vmatprep.subr.mxu0 0.0
    %2138 = vmatpush2.msra.mxu0 0.0
    %2139 = vmatprep.subr.mxu0 0.0
    %2140 = vmatpush2.msra.mxu0 0.0
    %2141 = vmatprep.subr.mxu0 0.0
    %2142 = vmatpush2.msra.mxu0 0.0
    %2143 = vmatprep.subr.mxu0 0.0
    %2144 = vmatpush2.msra.mxu0 0.0
    %2145 = vmatprep.subr.mxu0 0.0
    %2146 = vmatpush2.msra.mxu0 0.0
    %2147 = vmatprep.subr.mxu0 0.0
    %2148 = vmatpush2.msra.mxu0 0.0
    %2149 = vmatprep.subr.mxu0 0.0
    %2150 = vmatpush2.msra.mxu0 0.0
    %2151 = vmatprep.subr.mxu0 0.0
    %2152 = vmatpush2.msra.mxu0 0.0
    %2153 = vmatprep.subr.mxu0 0.0
    %2154 = vmatpush2.msra.mxu0 0.0
    %2155 = vmatprep.subr.mxu0 0.0
    %2156 = vmatpush2.msra.mxu0 0.0
    %2157 = vmatprep.subr.mxu0 0.0
    %2158 = vmatpush2.msra.mxu0 0.0
    %2159 = vmatprep.subr.mxu0 0.0
    %2160 = vmatpush2.msra.mxu0 0.0
    %2161 = vmatprep.subr.mxu0 0.0
    %2162 = vmatpush2.msra.mxu0 0.0
    %2163 = vmatprep.mubr.f32.mxu0 0.0
    %2164 = vmatmul.mubr.f32.gmra.mxu0 %v2028
    %v2165 = vpop.f32.mrf.mxu0
    %v2166 = vadd.f32 %v2096, %v2165
    %v2167 = vpop.f32.mrf.mxu0
    %2168 = vdwg.mxu0
    %v2169 = vadd.f32 %v2166, %v424
    %v2170 = vxor.u32 %v2169, 2147483648
    %v2171 = vmul.f32 %v2170, 1.442695
    %v2172 = vpow.pop %v2171
    %v2173 = vadd.f32 %v2172, 1.0
    %v2174 = vrcp.pop %v2173
    %v2175 = vmul.f32 1.0, %v2174
    %v2176 = vmul.f32 %v2175, 2.0
    %v2177 = vsub.f32 %v2176, 1.0
    %v2178 = vmul.f32 %v2175, %v1756
    %2180 = vrot.lane.b32.xlu0 %v2177, 64
    %v2181 = vpop.permute.xlu0 %2180
    %v2183 = vmul.f32 %v2175, %v2181
    %2185 = vrot.lane.b32.xlu0 %v2183, 32
    %v2186 = vpop.permute.xlu0 %2185
    %v2188 = vadd.f32 %v2178, %v2186
    %v2189 = vtanh.pop %v2188
    %2191 = vrot.lane.b32.xlu0 %v2189, 64
    %v2192 = vpop.permute.xlu0 %2191
    %v2194 = vmul.f32 %v2175, %v2192
    %2195 = vmatprep.subr.mxu0 0.0
    %2196 = vmatpush1.msra.mxu0 0.0
    %2197 = vmatprep.subr.mxu0 0.0
    %2198 = vmatpush1.msra.mxu0 0.0
    %2199 = vmatprep.subr.mxu0 0.0
    %2200 = vmatpush1.msra.mxu0 0.0
    %2201 = vmatprep.subr.mxu0 0.0
    %2202 = vmatpush1.msra.mxu0 0.0
    %2203 = vmatprep.subr.mxu0 0.0
    %2204 = vmatpush1.msra.mxu0 0.0
    %2205 = vmatprep.subr.mxu0 0.0
    %2206 = vmatpush1.msra.mxu0 0.0
    %2207 = vmatprep.subr.mxu0 0.0
    %2208 = vmatpush1.msra.mxu0 0.0
    %2209 = vmatprep.subr.mxu0 0.0
    %2210 = vmatpush1.msra.mxu0 0.0
    %2211 = vmatprep.subr.mxu0 0.0
    %2212 = vmatpush1.msra.mxu0 0.0
    %2213 = vmatprep.subr.mxu0 0.0
    %2214 = vmatpush1.msra.mxu0 0.0
    %2215 = vmatprep.subr.mxu0 0.0
    %2216 = vmatpush1.msra.mxu0 0.0
    %2217 = vmatprep.subr.mxu0 0.0
    %2218 = vmatpush1.msra.mxu0 0.0
    %2219 = vmatprep.subr.mxu0 0.0
    %2220 = vmatpush1.msra.mxu0 %v268
    %2221 = vmatprep.subr.mxu0 0.0
    %2222 = vmatpush1.msra.mxu0 %v267
    %2223 = vmatprep.subr.mxu0 0.0
    %2224 = vmatpush1.msra.mxu0 %v266
    %2225 = vmatprep.subr.mxu0 0.0
    %2226 = vmatpush1.msra.mxu0 %v265
    %2227 = vmatprep.subr.mxu0 0.0
    %2228 = vmatpush2.msra.mxu0 0.0
    %2229 = vmatprep.subr.mxu0 0.0
    %2230 = vmatpush2.msra.mxu0 0.0
    %2231 = vmatprep.subr.mxu0 0.0
    %2232 = vmatpush2.msra.mxu0 0.0
    %2233 = vmatprep.subr.mxu0 0.0
    %2234 = vmatpush2.msra.mxu0 0.0
    %2235 = vmatprep.subr.mxu0 0.0
    %2236 = vmatpush2.msra.mxu0 0.0
    %2237 = vmatprep.subr.mxu0 0.0
    %2238 = vmatpush2.msra.mxu0 0.0
    %2239 = vmatprep.subr.mxu0 0.0
    %2240 = vmatpush2.msra.mxu0 0.0
    %2241 = vmatprep.subr.mxu0 0.0
    %2242 = vmatpush2.msra.mxu0 0.0
    %2243 = vmatprep.subr.mxu0 0.0
    %2244 = vmatpush2.msra.mxu0 0.0
    %2245 = vmatprep.subr.mxu0 0.0
    %2246 = vmatpush2.msra.mxu0 0.0
    %2247 = vmatprep.subr.mxu0 0.0
    %2248 = vmatpush2.msra.mxu0 0.0
    %2249 = vmatprep.subr.mxu0 0.0
    %2250 = vmatpush2.msra.mxu0 0.0
    %2251 = vmatprep.subr.mxu0 0.0
    %2252 = vmatpush2.msra.mxu0 0.0
    %2253 = vmatprep.subr.mxu0 0.0
    %2254 = vmatpush2.msra.mxu0 0.0
    %2255 = vmatprep.subr.mxu0 0.0
    %2256 = vmatpush2.msra.mxu0 0.0
    %2257 = vmatprep.subr.mxu0 0.0
    %2258 = vmatpush2.msra.mxu0 0.0
    %2259 = vmatprep.mubr.f32.mxu0 0.0
    %2260 = vmatmul.mubr.f32.gmra.mxu0 %v1937
    %v2261 = vpop.f32.mrf.mxu0
    %v2262 = vadd.f32 0.0, %v2261
    %v2263 = vpop.f32.mrf.mxu0
    %2264 = vdwg.mxu0
    %2266 = vrot.lane.b32.xlu0 %v2194, 32
    %v2267 = vpop.permute.xlu0 %2266
    %v2268 = vsel %vm276, %v2267, 0
    %2270 = vmatprep.subr.mxu0 0.0
    %2271 = vmatpush1.msra.mxu0 0.0
    %2272 = vmatprep.subr.mxu0 0.0
    %2273 = vmatpush1.msra.mxu0 0.0
    %2274 = vmatprep.subr.mxu0 0.0
    %2275 = vmatpush1.msra.mxu0 0.0
    %2276 = vmatprep.subr.mxu0 0.0
    %2277 = vmatpush1.msra.mxu0 0.0
    %2278 = vmatprep.subr.mxu0 0.0
    %2279 = vmatpush1.msra.mxu0 0.0
    %2280 = vmatprep.subr.mxu0 0.0
    %2281 = vmatpush1.msra.mxu0 0.0
    %2282 = vmatprep.subr.mxu0 0.0
    %2283 = vmatpush1.msra.mxu0 0.0
    %2284 = vmatprep.subr.mxu0 0.0
    %2285 = vmatpush1.msra.mxu0 0.0
    %2286 = vmatprep.subr.mxu0 0.0
    %2287 = vmatpush1.msra.mxu0 0.0
    %2288 = vmatprep.subr.mxu0 0.0
    %2289 = vmatpush1.msra.mxu0 0.0
    %2290 = vmatprep.subr.mxu0 0.0
    %2291 = vmatpush1.msra.mxu0 0.0
    %2292 = vmatprep.subr.mxu0 0.0
    %2293 = vmatpush1.msra.mxu0 0.0
    %2294 = vmatprep.subr.mxu0 0.0
    %2295 = vmatpush1.msra.mxu0 %v264
    %2296 = vmatprep.subr.mxu0 0.0
    %2297 = vmatpush1.msra.mxu0 %v263
    %2298 = vmatprep.subr.mxu0 0.0
    %2299 = vmatpush1.msra.mxu0 %v262
    %2300 = vmatprep.subr.mxu0 0.0
    %2301 = vmatpush1.msra.mxu0 %v261
    %2302 = vmatprep.subr.mxu0 0.0
    %2303 = vmatpush2.msra.mxu0 0.0
    %2304 = vmatprep.subr.mxu0 0.0
    %2305 = vmatpush2.msra.mxu0 0.0
    %2306 = vmatprep.subr.mxu0 0.0
    %2307 = vmatpush2.msra.mxu0 0.0
    %2308 = vmatprep.subr.mxu0 0.0
    %2309 = vmatpush2.msra.mxu0 0.0
    %2310 = vmatprep.subr.mxu0 0.0
    %2311 = vmatpush2.msra.mxu0 0.0
    %2312 = vmatprep.subr.mxu0 0.0
    %2313 = vmatpush2.msra.mxu0 0.0
    %2314 = vmatprep.subr.mxu0 0.0
    %2315 = vmatpush2.msra.mxu0 0.0
    %2316 = vmatprep.subr.mxu0 0.0
    %2317 = vmatpush2.msra.mxu0 0.0
    %2318 = vmatprep.subr.mxu0 0.0
    %2319 = vmatpush2.msra.mxu0 0.0
    %2320 = vmatprep.subr.mxu0 0.0
    %2321 = vmatpush2.msra.mxu0 0.0
    %2322 = vmatprep.subr.mxu0 0.0
    %2323 = vmatpush2.msra.mxu0 0.0
    %2324 = vmatprep.subr.mxu0 0.0
    %2325 = vmatpush2.msra.mxu0 0.0
    %2326 = vmatprep.subr.mxu0 0.0
    %2327 = vmatpush2.msra.mxu0 0.0
    %2328 = vmatprep.subr.mxu0 0.0
    %2329 = vmatpush2.msra.mxu0 0.0
    %2330 = vmatprep.subr.mxu0 0.0
    %2331 = vmatpush2.msra.mxu0 0.0
    %2332 = vmatprep.subr.mxu0 0.0
    %2333 = vmatpush2.msra.mxu0 0.0
    %2334 = vmatprep.mubr.f32.mxu0 0.0
    %2335 = vmatmul.mubr.f32.gmra.mxu0 %v2268
    %v2336 = vpop.f32.mrf.mxu0
    %v2337 = vadd.f32 %v2262, %v2336
    %v2338 = vpop.f32.mrf.mxu0
    %2339 = vdwg.mxu0
    %v2340 = vadd.f32 %v2337, %v601
    %v2341 = vxor.u32 %v2340, 2147483648
    %v2342 = vmul.f32 %v2341, 1.442695
    %v2343 = vpow.pop %v2342
    %v2344 = vadd.f32 %v2343, 1.0
    %v2345 = vrcp.pop %v2344
    %v2346 = vmul.f32 1.0, %v2345
    %v2347 = vmul.f32 %v2346, 2.0
    %v2348 = vsub.f32 %v2347, 1.0
    %v2349 = vmul.f32 %v2346, %v1927
    %2351 = vrot.lane.b32.xlu0 %v2348, 64
    %v2352 = vpop.permute.xlu0 %2351
    %v2354 = vmul.f32 %v2346, %v2352
    %2356 = vrot.lane.b32.xlu0 %v2354, 32
    %v2357 = vpop.permute.xlu0 %2356
    %v2359 = vadd.f32 %v2349, %v2357
    %v2360 = vtanh.pop %v2359
    %2362 = vrot.lane.b32.xlu0 %v2360, 64
    %v2363 = vpop.permute.xlu0 %2362
    %v2365 = vmul.f32 %v2346, %v2363
    %2367 = vrot.lane.b32.xlu0 %v2365, 32
    %v2368 = vpop.permute.xlu0 %2367
    %v2369 = vsel %vm276, %v2368, 0
    %2371 = vmatprep.subr.mxu0 0.0
    %2372 = vmatpush1.msra.mxu0 0.0
    %2373 = vmatprep.subr.mxu0 0.0
    %2374 = vmatpush1.msra.mxu0 0.0
    %2375 = vmatprep.subr.mxu0 0.0
    %2376 = vmatpush1.msra.mxu0 0.0
    %2377 = vmatprep.subr.mxu0 0.0
    %2378 = vmatpush1.msra.mxu0 0.0
    %2379 = vmatprep.subr.mxu0 0.0
    %2380 = vmatpush1.msra.mxu0 0.0
    %2381 = vmatprep.subr.mxu0 0.0
    %2382 = vmatpush1.msra.mxu0 0.0
    %2383 = vmatprep.subr.mxu0 0.0
    %2384 = vmatpush1.msra.mxu0 0.0
    %2385 = vmatprep.subr.mxu0 0.0
    %2386 = vmatpush1.msra.mxu0 0.0
    %2387 = vmatprep.subr.mxu0 0.0
    %2388 = vmatpush1.msra.mxu0 0.0
    %2389 = vmatprep.subr.mxu0 0.0
    %2390 = vmatpush1.msra.mxu0 0.0
    %2391 = vmatprep.subr.mxu0 0.0
    %2392 = vmatpush1.msra.mxu0 0.0
    %2393 = vmatprep.subr.mxu0 0.0
    %2394 = vmatpush1.msra.mxu0 0.0
    %2395 = vmatprep.subr.mxu0 0.0
    %2396 = vmatpush1.msra.mxu0 %v273
    %2397 = vmatprep.subr.mxu0 0.0
    %2398 = vmatpush1.msra.mxu0 %v272
    %2399 = vmatprep.subr.mxu0 0.0
    %2400 = vmatpush1.msra.mxu0 %v271
    %2401 = vmatprep.subr.mxu0 0.0
    %2402 = vmatpush1.msra.mxu0 %v270
    %2403 = vmatprep.subr.mxu0 0.0
    %2404 = vmatpush2.msra.mxu0 0.0
    %2405 = vmatprep.subr.mxu0 0.0
    %2406 = vmatpush2.msra.mxu0 0.0
    %2407 = vmatprep.subr.mxu0 0.0
    %2408 = vmatpush2.msra.mxu0 0.0
    %2409 = vmatprep.subr.mxu0 0.0
    %2410 = vmatpush2.msra.mxu0 0.0
    %2411 = vmatprep.subr.mxu0 0.0
    %2412 = vmatpush2.msra.mxu0 0.0
    %2413 = vmatprep.subr.mxu0 0.0
    %2414 = vmatpush2.msra.mxu0 0.0
    %2415 = vmatprep.subr.mxu0 0.0
    %2416 = vmatpush2.msra.mxu0 0.0
    %2417 = vmatprep.subr.mxu0 0.0
    %2418 = vmatpush2.msra.mxu0 0.0
    %2419 = vmatprep.subr.mxu0 0.0
    %2420 = vmatpush2.msra.mxu0 0.0
    %2421 = vmatprep.subr.mxu0 0.0
    %2422 = vmatpush2.msra.mxu0 0.0
    %2423 = vmatprep.subr.mxu0 0.0
    %2424 = vmatpush2.msra.mxu0 0.0
    %2425 = vmatprep.subr.mxu0 0.0
    %2426 = vmatpush2.msra.mxu0 0.0
    %2427 = vmatprep.subr.mxu0 0.0
    %2428 = vmatpush2.msra.mxu0 0.0
    %2429 = vmatprep.subr.mxu0 0.0
    %2430 = vmatpush2.msra.mxu0 0.0
    %2431 = vmatprep.subr.mxu0 0.0
    %2432 = vmatpush2.msra.mxu0 0.0
    %2433 = vmatprep.subr.mxu0 0.0
    %2434 = vmatpush2.msra.mxu0 0.0
    %2435 = vmatprep.mubr.f32.mxu0 0.0
    %2436 = vmatmul.mubr.f32.gmra.mxu0 %v2369
    %v2437 = vpop.f32.mrf.mxu0
    %v2438 = vadd.f32 %v633, %v2437
    %v2439 = vpop.f32.mrf.mxu0
    %2440 = vdwg.mxu0
    %s2441 = scalar_lea.vmem %s15, 32
    %2442 = vst [vmem:[%s2441] sm:$0xff] %v2438
    %2443 = vmax.xlane.f32.xlu0 %v2438
    %v2444 = vpop.xlane.xlu0 %2443
    %vm2445 = vcmp.eq.f32.partialorder %v2438, %v2444
    %v2446 = vsel %vm2445, %v717, -128.0
    %2447 = vmax.xlane.f32.xlu0 %v2446
    %v2448 = vpop.xlane.xlu0 %2447
    %v2449 = vsub.f32 0.0, %v2448
    %vm2450 = vcmp.eq.f32.partialorder %v713, %v2449
    %v2451 = vsel %vm2450, 1, 0
    %v2452 = vcvt.s32.f32 %v2451
    %s2453 = sld [smem:[#allocation2 + $0x5]]
    %p2454 = scmp.ne.s32.totalorder %s2453, 0
    %s2455 = scalar_lea.vmem %s2, 40
    %v2456 = vld [vmem:[%s2455] sm:$0xff]
    %s2457 = scalar_select %p2454, 1, 0
    %v2458 = vstv %s2457
    %vm2459 = vcmp.eq.s32.totalorder %v2458, 1
    %v2460 = vsel %vm2459, %v2456, %v2452
    %2461 = vmatprep.subr.mxu0 0.0
    %2462 = vmatpush1.msra.mxu0 0.0
    %2463 = vmatprep.subr.mxu0 0.0
    %2464 = vmatpush1.msra.mxu0 0.0
    %2465 = vmatprep.subr.mxu0 0.0
    %2466 = vmatpush1.msra.mxu0 0.0
    %2467 = vmatprep.subr.mxu0 0.0
    %2468 = vmatpush1.msra.mxu0 0.0
    %2469 = vmatprep.subr.mxu0 0.0
    %2470 = vmatpush1.msra.mxu0 0.0
    %2471 = vmatprep.subr.mxu0 0.0
    %2472 = vmatpush1.msra.mxu0 0.0
    %2473 = vmatprep.subr.mxu0 0.0
    %2474 = vmatpush1.msra.mxu0 0.0
    %2475 = vmatprep.subr.mxu0 0.0
    %2476 = vmatpush1.msra.mxu0 0.0
    %2477 = vmatprep.subr.mxu0 0.0
    %2478 = vmatpush1.msra.mxu0 0.0
    %2479 = vmatprep.subr.mxu0 0.0
    %2480 = vmatpush1.msra.mxu0 0.0
    %2481 = vmatprep.subr.mxu0 0.0
    %2482 = vmatpush1.msra.mxu0 0.0
    %2483 = vmatprep.subr.mxu0 0.0
    %2484 = vmatpush1.msra.mxu0 0.0
    %2485 = vmatprep.subr.mxu0 0.0
    %2486 = vmatpush1.msra.mxu0 %v259
    %2487 = vmatprep.subr.mxu0 0.0
    %2488 = vmatpush1.msra.mxu0 %v258
    %2489 = vmatprep.subr.mxu0 0.0
    %2490 = vmatpush1.msra.mxu0 %v257
    %2491 = vmatprep.subr.mxu0 0.0
    %2492 = vmatpush1.msra.mxu0 %v256
    %2493 = vmatprep.subr.mxu0 0.0
    %2494 = vmatpush2.msra.mxu0 0.0
    %2495 = vmatprep.subr.mxu0 0.0
    %2496 = vmatpush2.msra.mxu0 0.0
    %2497 = vmatprep.subr.mxu0 0.0
    %2498 = vmatpush2.msra.mxu0 0.0
    %2499 = vmatprep.subr.mxu0 0.0
    %2500 = vmatpush2.msra.mxu0 0.0
    %2501 = vmatprep.subr.mxu0 0.0
    %2502 = vmatpush2.msra.mxu0 0.0
    %2503 = vmatprep.subr.mxu0 0.0
    %2504 = vmatpush2.msra.mxu0 0.0
    %2505 = vmatprep.subr.mxu0 0.0
    %2506 = vmatpush2.msra.mxu0 0.0
    %2507 = vmatprep.subr.mxu0 0.0
    %2508 = vmatpush2.msra.mxu0 0.0
    %2509 = vmatprep.subr.mxu0 0.0
    %2510 = vmatpush2.msra.mxu0 0.0
    %2511 = vmatprep.subr.mxu0 0.0
    %2512 = vmatpush2.msra.mxu0 0.0
    %2513 = vmatprep.subr.mxu0 0.0
    %2514 = vmatpush2.msra.mxu0 0.0
    %2515 = vmatprep.subr.mxu0 0.0
    %2516 = vmatpush2.msra.mxu0 0.0
    %2517 = vmatprep.subr.mxu0 0.0
    %2518 = vmatpush2.msra.mxu0 0.0
    %2519 = vmatprep.subr.mxu0 0.0
    %2520 = vmatpush2.msra.mxu0 0.0
    %2521 = vmatprep.subr.mxu0 0.0
    %2522 = vmatpush2.msra.mxu0 0.0
    %2523 = vmatprep.subr.mxu0 0.0
    %2524 = vmatpush2.msra.mxu0 0.0
    %2525 = vmatprep.mubr.f32.mxu0 0.0
    %2526 = vmatmul.mubr.f32.gmra.mxu0 %v2268
    %v2527 = vpop.f32.mrf.mxu0
    %v2528 = vadd.f32 0.0, %v2527
    %v2529 = vpop.f32.mrf.mxu0
    %2530 = vdwg.mxu0
    %2531 = vmatprep.subr.mxu0 0.0
    %2532 = vmatpush1.msra.mxu0 %v255
    %2533 = vmatprep.subr.mxu0 0.0
    %2534 = vmatpush1.msra.mxu0 %v254
    %2535 = vmatprep.subr.mxu0 0.0
    %2536 = vmatpush1.msra.mxu0 %v253
    %2537 = vmatprep.subr.mxu0 0.0
    %2538 = vmatpush1.msra.mxu0 %v252
    %2539 = vmatprep.subr.mxu0 0.0
    %2540 = vmatpush1.msra.mxu0 %v251
    %2541 = vmatprep.subr.mxu0 0.0
    %2542 = vmatpush1.msra.mxu0 %v250
    %2543 = vmatprep.subr.mxu0 0.0
    %2544 = vmatpush1.msra.mxu0 %v249
    %2545 = vmatprep.subr.mxu0 0.0
    %2546 = vmatpush1.msra.mxu0 %v248
    %2547 = vmatprep.subr.mxu0 0.0
    %2548 = vmatpush1.msra.mxu0 %v247
    %2549 = vmatprep.subr.mxu0 0.0
    %2550 = vmatpush1.msra.mxu0 %v246
    %2551 = vmatprep.subr.mxu0 0.0
    %2552 = vmatpush1.msra.mxu0 %v245
    %2553 = vmatprep.subr.mxu0 0.0
    %2554 = vmatpush1.msra.mxu0 %v244
    %2555 = vmatprep.subr.mxu0 0.0
    %2556 = vmatpush1.msra.mxu0 %v243
    %2557 = vmatprep.subr.mxu0 0.0
    %2558 = vmatpush1.msra.mxu0 %v242
    %2559 = vmatprep.subr.mxu0 0.0
    %2560 = vmatpush1.msra.mxu0 %v241
    %2561 = vmatprep.subr.mxu0 0.0
    %2562 = vmatpush1.msra.mxu0 %v240
    %2563 = vmatprep.subr.mxu0 0.0
    %2564 = vmatpush2.msra.mxu0 0.0
    %2565 = vmatprep.subr.mxu0 0.0
    %2566 = vmatpush2.msra.mxu0 0.0
    %2567 = vmatprep.subr.mxu0 0.0
    %2568 = vmatpush2.msra.mxu0 0.0
    %2569 = vmatprep.subr.mxu0 0.0
    %2570 = vmatpush2.msra.mxu0 0.0
    %2571 = vmatprep.subr.mxu0 0.0
    %2572 = vmatpush2.msra.mxu0 0.0
    %2573 = vmatprep.subr.mxu0 0.0
    %2574 = vmatpush2.msra.mxu0 0.0
    %2575 = vmatprep.subr.mxu0 0.0
    %2576 = vmatpush2.msra.mxu0 0.0
    %2577 = vmatprep.subr.mxu0 0.0
    %2578 = vmatpush2.msra.mxu0 0.0
    %2579 = vmatprep.subr.mxu0 0.0
    %2580 = vmatpush2.msra.mxu0 0.0
    %2581 = vmatprep.subr.mxu0 0.0
    %2582 = vmatpush2.msra.mxu0 0.0
    %2583 = vmatprep.subr.mxu0 0.0
    %2584 = vmatpush2.msra.mxu0 0.0
    %2585 = vmatprep.subr.mxu0 0.0
    %2586 = vmatpush2.msra.mxu0 0.0
    %2587 = vmatprep.subr.mxu0 0.0
    %2588 = vmatpush2.msra.mxu0 0.0
    %2589 = vmatprep.subr.mxu0 0.0
    %2590 = vmatpush2.msra.mxu0 0.0
    %2591 = vmatprep.subr.mxu0 0.0
    %2592 = vmatpush2.msra.mxu0 0.0
    %2593 = vmatprep.subr.mxu0 0.0
    %2594 = vmatpush2.msra.mxu0 0.0
    %2595 = vmatprep.mubr.f32.mxu0 0.0
    %2596 = vmatmul.mubr.f32.gmra.mxu0 %v2460
    %v2597 = vpop.f32.mrf.mxu0
    %v2598 = vadd.f32 %v2528, %v2597
    %v2599 = vpop.f32.mrf.mxu0
    %2600 = vdwg.mxu0
    %v2601 = vadd.f32 %v2598, %v424
    %v2602 = vxor.u32 %v2601, 2147483648
    %v2603 = vmul.f32 %v2602, 1.442695
    %v2604 = vpow.pop %v2603
    %v2605 = vadd.f32 %v2604, 1.0
    %v2606 = vrcp.pop %v2605
    %v2607 = vmul.f32 1.0, %v2606
    %v2608 = vmul.f32 %v2607, 2.0
    %v2609 = vsub.f32 %v2608, 1.0
    %v2610 = vmul.f32 %v2607, %v2188
    %2612 = vrot.lane.b32.xlu0 %v2609, 64
    %v2613 = vpop.permute.xlu0 %2612
    %v2615 = vmul.f32 %v2607, %v2613
    %2617 = vrot.lane.b32.xlu0 %v2615, 32
    %v2618 = vpop.permute.xlu0 %2617
    %v2620 = vadd.f32 %v2610, %v2618
    %v2621 = vtanh.pop %v2620
    %2623 = vrot.lane.b32.xlu0 %v2621, 64
    %v2624 = vpop.permute.xlu0 %2623
    %v2626 = vmul.f32 %v2607, %v2624
    %2627 = vmatprep.subr.mxu0 0.0
    %2628 = vmatpush1.msra.mxu0 0.0
    %2629 = vmatprep.subr.mxu0 0.0
    %2630 = vmatpush1.msra.mxu0 0.0
    %2631 = vmatprep.subr.mxu0 0.0
    %2632 = vmatpush1.msra.mxu0 0.0
    %2633 = vmatprep.subr.mxu0 0.0
    %2634 = vmatpush1.msra.mxu0 0.0
    %2635 = vmatprep.subr.mxu0 0.0
    %2636 = vmatpush1.msra.mxu0 0.0
    %2637 = vmatprep.subr.mxu0 0.0
    %2638 = vmatpush1.msra.mxu0 0.0
    %2639 = vmatprep.subr.mxu0 0.0
    %2640 = vmatpush1.msra.mxu0 0.0
    %2641 = vmatprep.subr.mxu0 0.0
    %2642 = vmatpush1.msra.mxu0 0.0
    %2643 = vmatprep.subr.mxu0 0.0
    %2644 = vmatpush1.msra.mxu0 0.0
    %2645 = vmatprep.subr.mxu0 0.0
    %2646 = vmatpush1.msra.mxu0 0.0
    %2647 = vmatprep.subr.mxu0 0.0
    %2648 = vmatpush1.msra.mxu0 0.0
    %2649 = vmatprep.subr.mxu0 0.0
    %2650 = vmatpush1.msra.mxu0 0.0
    %2651 = vmatprep.subr.mxu0 0.0
    %2652 = vmatpush1.msra.mxu0 %v268
    %2653 = vmatprep.subr.mxu0 0.0
    %2654 = vmatpush1.msra.mxu0 %v267
    %2655 = vmatprep.subr.mxu0 0.0
    %2656 = vmatpush1.msra.mxu0 %v266
    %2657 = vmatprep.subr.mxu0 0.0
    %2658 = vmatpush1.msra.mxu0 %v265
    %2659 = vmatprep.subr.mxu0 0.0
    %2660 = vmatpush2.msra.mxu0 0.0
    %2661 = vmatprep.subr.mxu0 0.0
    %2662 = vmatpush2.msra.mxu0 0.0
    %2663 = vmatprep.subr.mxu0 0.0
    %2664 = vmatpush2.msra.mxu0 0.0
    %2665 = vmatprep.subr.mxu0 0.0
    %2666 = vmatpush2.msra.mxu0 0.0
    %2667 = vmatprep.subr.mxu0 0.0
    %2668 = vmatpush2.msra.mxu0 0.0
    %2669 = vmatprep.subr.mxu0 0.0
    %2670 = vmatpush2.msra.mxu0 0.0
    %2671 = vmatprep.subr.mxu0 0.0
    %2672 = vmatpush2.msra.mxu0 0.0
    %2673 = vmatprep.subr.mxu0 0.0
    %2674 = vmatpush2.msra.mxu0 0.0
    %2675 = vmatprep.subr.mxu0 0.0
    %2676 = vmatpush2.msra.mxu0 0.0
    %2677 = vmatprep.subr.mxu0 0.0
    %2678 = vmatpush2.msra.mxu0 0.0
    %2679 = vmatprep.subr.mxu0 0.0
    %2680 = vmatpush2.msra.mxu0 0.0
    %2681 = vmatprep.subr.mxu0 0.0
    %2682 = vmatpush2.msra.mxu0 0.0
    %2683 = vmatprep.subr.mxu0 0.0
    %2684 = vmatpush2.msra.mxu0 0.0
    %2685 = vmatprep.subr.mxu0 0.0
    %2686 = vmatpush2.msra.mxu0 0.0
    %2687 = vmatprep.subr.mxu0 0.0
    %2688 = vmatpush2.msra.mxu0 0.0
    %2689 = vmatprep.subr.mxu0 0.0
    %2690 = vmatpush2.msra.mxu0 0.0
    %2691 = vmatprep.mubr.f32.mxu0 0.0
    %2692 = vmatmul.mubr.f32.gmra.mxu0 %v2369
    %v2693 = vpop.f32.mrf.mxu0
    %v2694 = vadd.f32 0.0, %v2693
    %v2695 = vpop.f32.mrf.mxu0
    %2696 = vdwg.mxu0
    %2698 = vrot.lane.b32.xlu0 %v2626, 32
    %v2699 = vpop.permute.xlu0 %2698
    %v2700 = vsel %vm276, %v2699, 0
    %2702 = vmatprep.subr.mxu0 0.0
    %2703 = vmatpush1.msra.mxu0 0.0
    %2704 = vmatprep.subr.mxu0 0.0
    %2705 = vmatpush1.msra.mxu0 0.0
    %2706 = vmatprep.subr.mxu0 0.0
    %2707 = vmatpush1.msra.mxu0 0.0
    %2708 = vmatprep.subr.mxu0 0.0
    %2709 = vmatpush1.msra.mxu0 0.0
    %2710 = vmatprep.subr.mxu0 0.0
    %2711 = vmatpush1.msra.mxu0 0.0
    %2712 = vmatprep.subr.mxu0 0.0
    %2713 = vmatpush1.msra.mxu0 0.0
    %2714 = vmatprep.subr.mxu0 0.0
    %2715 = vmatpush1.msra.mxu0 0.0
    %2716 = vmatprep.subr.mxu0 0.0
    %2717 = vmatpush1.msra.mxu0 0.0
    %2718 = vmatprep.subr.mxu0 0.0
    %2719 = vmatpush1.msra.mxu0 0.0
    %2720 = vmatprep.subr.mxu0 0.0
    %2721 = vmatpush1.msra.mxu0 0.0
    %2722 = vmatprep.subr.mxu0 0.0
    %2723 = vmatpush1.msra.mxu0 0.0
    %2724 = vmatprep.subr.mxu0 0.0
    %2725 = vmatpush1.msra.mxu0 0.0
    %2726 = vmatprep.subr.mxu0 0.0
    %2727 = vmatpush1.msra.mxu0 %v264
    %2728 = vmatprep.subr.mxu0 0.0
    %2729 = vmatpush1.msra.mxu0 %v263
    %2730 = vmatprep.subr.mxu0 0.0
    %2731 = vmatpush1.msra.mxu0 %v262
    %2732 = vmatprep.subr.mxu0 0.0
    %2733 = vmatpush1.msra.mxu0 %v261
    %2734 = vmatprep.subr.mxu0 0.0
    %2735 = vmatpush2.msra.mxu0 0.0
    %2736 = vmatprep.subr.mxu0 0.0
    %2737 = vmatpush2.msra.mxu0 0.0
    %2738 = vmatprep.subr.mxu0 0.0
    %2739 = vmatpush2.msra.mxu0 0.0
    %2740 = vmatprep.subr.mxu0 0.0
    %2741 = vmatpush2.msra.mxu0 0.0
    %2742 = vmatprep.subr.mxu0 0.0
    %2743 = vmatpush2.msra.mxu0 0.0
    %2744 = vmatprep.subr.mxu0 0.0
    %2745 = vmatpush2.msra.mxu0 0.0
    %2746 = vmatprep.subr.mxu0 0.0
    %2747 = vmatpush2.msra.mxu0 0.0
    %2748 = vmatprep.subr.mxu0 0.0
    %2749 = vmatpush2.msra.mxu0 0.0
    %2750 = vmatprep.subr.mxu0 0.0
    %2751 = vmatpush2.msra.mxu0 0.0
    %2752 = vmatprep.subr.mxu0 0.0
    %2753 = vmatpush2.msra.mxu0 0.0
    %2754 = vmatprep.subr.mxu0 0.0
    %2755 = vmatpush2.msra.mxu0 0.0
    %2756 = vmatprep.subr.mxu0 0.0
    %2757 = vmatpush2.msra.mxu0 0.0
    %2758 = vmatprep.subr.mxu0 0.0
    %2759 = vmatpush2.msra.mxu0 0.0
    %2760 = vmatprep.subr.mxu0 0.0
    %2761 = vmatpush2.msra.mxu0 0.0
    %2762 = vmatprep.subr.mxu0 0.0
    %2763 = vmatpush2.msra.mxu0 0.0
    %2764 = vmatprep.subr.mxu0 0.0
    %2765 = vmatpush2.msra.mxu0 0.0
    %2766 = vmatprep.mubr.f32.mxu0 0.0
    %2767 = vmatmul.mubr.f32.gmra.mxu0 %v2700
    %v2768 = vpop.f32.mrf.mxu0
    %v2769 = vadd.f32 %v2694, %v2768
    %v2770 = vpop.f32.mrf.mxu0
    %2771 = vdwg.mxu0
    %v2772 = vadd.f32 %v2769, %v601
    %v2773 = vxor.u32 %v2772, 2147483648
    %v2774 = vmul.f32 %v2773, 1.442695
    %v2775 = vpow.pop %v2774
    %v2776 = vadd.f32 %v2775, 1.0
    %v2777 = vrcp.pop %v2776
    %v2778 = vmul.f32 1.0, %v2777
    %v2779 = vmul.f32 %v2778, 2.0
    %v2780 = vsub.f32 %v2779, 1.0
    %v2781 = vmul.f32 %v2778, %v2359
    %2783 = vrot.lane.b32.xlu0 %v2780, 64
    %v2784 = vpop.permute.xlu0 %2783
    %v2786 = vmul.f32 %v2778, %v2784
    %2788 = vrot.lane.b32.xlu0 %v2786, 32
    %v2789 = vpop.permute.xlu0 %2788
    %v2791 = vadd.f32 %v2781, %v2789
    %v2792 = vtanh.pop %v2791
    %2794 = vrot.lane.b32.xlu0 %v2792, 64
    %v2795 = vpop.permute.xlu0 %2794
    %v2797 = vmul.f32 %v2778, %v2795
    %2799 = vrot.lane.b32.xlu0 %v2797, 32
    %v2800 = vpop.permute.xlu0 %2799
    %v2801 = vsel %vm276, %v2800, 0
    %2803 = vmatprep.subr.mxu0 0.0
    %2804 = vmatpush1.msra.mxu0 0.0
    %2805 = vmatprep.subr.mxu0 0.0
    %2806 = vmatpush1.msra.mxu0 0.0
    %2807 = vmatprep.subr.mxu0 0.0
    %2808 = vmatpush1.msra.mxu0 0.0
    %2809 = vmatprep.subr.mxu0 0.0
    %2810 = vmatpush1.msra.mxu0 0.0
    %2811 = vmatprep.subr.mxu0 0.0
    %2812 = vmatpush1.msra.mxu0 0.0
    %2813 = vmatprep.subr.mxu0 0.0
    %2814 = vmatpush1.msra.mxu0 0.0
    %2815 = vmatprep.subr.mxu0 0.0
    %2816 = vmatpush1.msra.mxu0 0.0
    %2817 = vmatprep.subr.mxu0 0.0
    %2818 = vmatpush1.msra.mxu0 0.0
    %2819 = vmatprep.subr.mxu0 0.0
    %2820 = vmatpush1.msra.mxu0 0.0
    %2821 = vmatprep.subr.mxu0 0.0
    %2822 = vmatpush1.msra.mxu0 0.0
    %2823 = vmatprep.subr.mxu0 0.0
    %2824 = vmatpush1.msra.mxu0 0.0
    %2825 = vmatprep.subr.mxu0 0.0
    %2826 = vmatpush1.msra.mxu0 0.0
    %2827 = vmatprep.subr.mxu0 0.0
    %2828 = vmatpush1.msra.mxu0 %v273
    %2829 = vmatprep.subr.mxu0 0.0
    %2830 = vmatpush1.msra.mxu0 %v272
    %2831 = vmatprep.subr.mxu0 0.0
    %2832 = vmatpush1.msra.mxu0 %v271
    %2833 = vmatprep.subr.mxu0 0.0
    %2834 = vmatpush1.msra.mxu0 %v270
    %2835 = vmatprep.subr.mxu0 0.0
    %2836 = vmatpush2.msra.mxu0 0.0
    %2837 = vmatprep.subr.mxu0 0.0
    %2838 = vmatpush2.msra.mxu0 0.0
    %2839 = vmatprep.subr.mxu0 0.0
    %2840 = vmatpush2.msra.mxu0 0.0
    %2841 = vmatprep.subr.mxu0 0.0
    %2842 = vmatpush2.msra.mxu0 0.0
    %2843 = vmatprep.subr.mxu0 0.0
    %2844 = vmatpush2.msra.mxu0 0.0
    %2845 = vmatprep.subr.mxu0 0.0
    %2846 = vmatpush2.msra.mxu0 0.0
    %2847 = vmatprep.subr.mxu0 0.0
    %2848 = vmatpush2.msra.mxu0 0.0
    %2849 = vmatprep.subr.mxu0 0.0
    %2850 = vmatpush2.msra.mxu0 0.0
    %2851 = vmatprep.subr.mxu0 0.0
    %2852 = vmatpush2.msra.mxu0 0.0
    %2853 = vmatprep.subr.mxu0 0.0
    %2854 = vmatpush2.msra.mxu0 0.0
    %2855 = vmatprep.subr.mxu0 0.0
    %2856 = vmatpush2.msra.mxu0 0.0
    %2857 = vmatprep.subr.mxu0 0.0
    %2858 = vmatpush2.msra.mxu0 0.0
    %2859 = vmatprep.subr.mxu0 0.0
    %2860 = vmatpush2.msra.mxu0 0.0
    %2861 = vmatprep.subr.mxu0 0.0
    %2862 = vmatpush2.msra.mxu0 0.0
    %2863 = vmatprep.subr.mxu0 0.0
    %2864 = vmatpush2.msra.mxu0 0.0
    %2865 = vmatprep.subr.mxu0 0.0
    %2866 = vmatpush2.msra.mxu0 0.0
    %2867 = vmatprep.mubr.f32.mxu0 0.0
    %2868 = vmatmul.mubr.f32.gmra.mxu0 %v2801
    %v2869 = vpop.f32.mrf.mxu0
    %v2870 = vadd.f32 %v633, %v2869
    %v2871 = vpop.f32.mrf.mxu0
    %2872 = vdwg.mxu0
    %s2873 = scalar_lea.vmem %s15, 40
    %2874 = vst [vmem:[%s2873] sm:$0xff] %v2870
    %2875 = vmax.xlane.f32.xlu0 %v2870
    %v2876 = vpop.xlane.xlu0 %2875
    %vm2877 = vcmp.eq.f32.partialorder %v2870, %v2876
    %v2878 = vsel %vm2877, %v717, -128.0
    %2879 = vmax.xlane.f32.xlu0 %v2878
    %v2880 = vpop.xlane.xlu0 %2879
    %v2881 = vsub.f32 0.0, %v2880
    %vm2882 = vcmp.eq.f32.partialorder %v713, %v2881
    %v2883 = vsel %vm2882, 1, 0
    %v2884 = vcvt.s32.f32 %v2883
    %s2885 = sld [smem:[#allocation2 + $0x6]]
    %p2886 = scmp.ne.s32.totalorder %s2885, 0
    %s2887 = scalar_lea.vmem %s2, 48
    %v2888 = vld [vmem:[%s2887] sm:$0xff]
    %s2889 = scalar_select %p2886, 1, 0
    %v2890 = vstv %s2889
    %vm2891 = vcmp.eq.s32.totalorder %v2890, 1
    %v2892 = vsel %vm2891, %v2888, %v2884
    %2893 = vmatprep.subr.mxu0 0.0
    %2894 = vmatpush1.msra.mxu0 0.0
    %2895 = vmatprep.subr.mxu0 0.0
    %2896 = vmatpush1.msra.mxu0 0.0
    %2897 = vmatprep.subr.mxu0 0.0
    %2898 = vmatpush1.msra.mxu0 0.0
    %2899 = vmatprep.subr.mxu0 0.0
    %2900 = vmatpush1.msra.mxu0 0.0
    %2901 = vmatprep.subr.mxu0 0.0
    %2902 = vmatpush1.msra.mxu0 0.0
    %2903 = vmatprep.subr.mxu0 0.0
    %2904 = vmatpush1.msra.mxu0 0.0
    %2905 = vmatprep.subr.mxu0 0.0
    %2906 = vmatpush1.msra.mxu0 0.0
    %2907 = vmatprep.subr.mxu0 0.0
    %2908 = vmatpush1.msra.mxu0 0.0
    %2909 = vmatprep.subr.mxu0 0.0
    %2910 = vmatpush1.msra.mxu0 0.0
    %2911 = vmatprep.subr.mxu0 0.0
    %2912 = vmatpush1.msra.mxu0 0.0
    %2913 = vmatprep.subr.mxu0 0.0
    %2914 = vmatpush1.msra.mxu0 0.0
    %2915 = vmatprep.subr.mxu0 0.0
    %2916 = vmatpush1.msra.mxu0 0.0
    %2917 = vmatprep.subr.mxu0 0.0
    %2918 = vmatpush1.msra.mxu0 %v259
    %2919 = vmatprep.subr.mxu0 0.0
    %2920 = vmatpush1.msra.mxu0 %v258
    %2921 = vmatprep.subr.mxu0 0.0
    %2922 = vmatpush1.msra.mxu0 %v257
    %2923 = vmatprep.subr.mxu0 0.0
    %2924 = vmatpush1.msra.mxu0 %v256
    %2925 = vmatprep.subr.mxu0 0.0
    %2926 = vmatpush2.msra.mxu0 0.0
    %2927 = vmatprep.subr.mxu0 0.0
    %2928 = vmatpush2.msra.mxu0 0.0
    %2929 = vmatprep.subr.mxu0 0.0
    %2930 = vmatpush2.msra.mxu0 0.0
    %2931 = vmatprep.subr.mxu0 0.0
    %2932 = vmatpush2.msra.mxu0 0.0
    %2933 = vmatprep.subr.mxu0 0.0
    %2934 = vmatpush2.msra.mxu0 0.0
    %2935 = vmatprep.subr.mxu0 0.0
    %2936 = vmatpush2.msra.mxu0 0.0
    %2937 = vmatprep.subr.mxu0 0.0
    %2938 = vmatpush2.msra.mxu0 0.0
    %2939 = vmatprep.subr.mxu0 0.0
    %2940 = vmatpush2.msra.mxu0 0.0
    %2941 = vmatprep.subr.mxu0 0.0
    %2942 = vmatpush2.msra.mxu0 0.0
    %2943 = vmatprep.subr.mxu0 0.0
    %2944 = vmatpush2.msra.mxu0 0.0
    %2945 = vmatprep.subr.mxu0 0.0
    %2946 = vmatpush2.msra.mxu0 0.0
    %2947 = vmatprep.subr.mxu0 0.0
    %2948 = vmatpush2.msra.mxu0 0.0
    %2949 = vmatprep.subr.mxu0 0.0
    %2950 = vmatpush2.msra.mxu0 0.0
    %2951 = vmatprep.subr.mxu0 0.0
    %2952 = vmatpush2.msra.mxu0 0.0
    %2953 = vmatprep.subr.mxu0 0.0
    %2954 = vmatpush2.msra.mxu0 0.0
    %2955 = vmatprep.subr.mxu0 0.0
    %2956 = vmatpush2.msra.mxu0 0.0
    %2957 = vmatprep.mubr.f32.mxu0 0.0
    %2958 = vmatmul.mubr.f32.gmra.mxu0 %v2700
    %v2959 = vpop.f32.mrf.mxu0
    %v2960 = vadd.f32 0.0, %v2959
    %v2961 = vpop.f32.mrf.mxu0
    %2962 = vdwg.mxu0
    %2963 = vmatprep.subr.mxu0 0.0
    %2964 = vmatpush1.msra.mxu0 %v255
    %2965 = vmatprep.subr.mxu0 0.0
    %2966 = vmatpush1.msra.mxu0 %v254
    %2967 = vmatprep.subr.mxu0 0.0
    %2968 = vmatpush1.msra.mxu0 %v253
    %2969 = vmatprep.subr.mxu0 0.0
    %2970 = vmatpush1.msra.mxu0 %v252
    %2971 = vmatprep.subr.mxu0 0.0
    %2972 = vmatpush1.msra.mxu0 %v251
    %2973 = vmatprep.subr.mxu0 0.0
    %2974 = vmatpush1.msra.mxu0 %v250
    %2975 = vmatprep.subr.mxu0 0.0
    %2976 = vmatpush1.msra.mxu0 %v249
    %2977 = vmatprep.subr.mxu0 0.0
    %2978 = vmatpush1.msra.mxu0 %v248
    %2979 = vmatprep.subr.mxu0 0.0
    %2980 = vmatpush1.msra.mxu0 %v247
    %2981 = vmatprep.subr.mxu0 0.0
    %2982 = vmatpush1.msra.mxu0 %v246
    %2983 = vmatprep.subr.mxu0 0.0
    %2984 = vmatpush1.msra.mxu0 %v245
    %2985 = vmatprep.subr.mxu0 0.0
    %2986 = vmatpush1.msra.mxu0 %v244
    %2987 = vmatprep.subr.mxu0 0.0
    %2988 = vmatpush1.msra.mxu0 %v243
    %2989 = vmatprep.subr.mxu0 0.0
    %2990 = vmatpush1.msra.mxu0 %v242
    %2991 = vmatprep.subr.mxu0 0.0
    %2992 = vmatpush1.msra.mxu0 %v241
    %2993 = vmatprep.subr.mxu0 0.0
    %2994 = vmatpush1.msra.mxu0 %v240
    %2995 = vmatprep.subr.mxu0 0.0
    %2996 = vmatpush2.msra.mxu0 0.0
    %2997 = vmatprep.subr.mxu0 0.0
    %2998 = vmatpush2.msra.mxu0 0.0
    %2999 = vmatprep.subr.mxu0 0.0
    %3000 = vmatpush2.msra.mxu0 0.0
    %3001 = vmatprep.subr.mxu0 0.0
    %3002 = vmatpush2.msra.mxu0 0.0
    %3003 = vmatprep.subr.mxu0 0.0
    %3004 = vmatpush2.msra.mxu0 0.0
    %3005 = vmatprep.subr.mxu0 0.0
    %3006 = vmatpush2.msra.mxu0 0.0
    %3007 = vmatprep.subr.mxu0 0.0
    %3008 = vmatpush2.msra.mxu0 0.0
    %3009 = vmatprep.subr.mxu0 0.0
    %3010 = vmatpush2.msra.mxu0 0.0
    %3011 = vmatprep.subr.mxu0 0.0
    %3012 = vmatpush2.msra.mxu0 0.0
    %3013 = vmatprep.subr.mxu0 0.0
    %3014 = vmatpush2.msra.mxu0 0.0
    %3015 = vmatprep.subr.mxu0 0.0
    %3016 = vmatpush2.msra.mxu0 0.0
    %3017 = vmatprep.subr.mxu0 0.0
    %3018 = vmatpush2.msra.mxu0 0.0
    %3019 = vmatprep.subr.mxu0 0.0
    %3020 = vmatpush2.msra.mxu0 0.0
    %3021 = vmatprep.subr.mxu0 0.0
    %3022 = vmatpush2.msra.mxu0 0.0
    %3023 = vmatprep.subr.mxu0 0.0
    %3024 = vmatpush2.msra.mxu0 0.0
    %3025 = vmatprep.subr.mxu0 0.0
    %3026 = vmatpush2.msra.mxu0 0.0
    %3027 = vmatprep.mubr.f32.mxu0 0.0
    %3028 = vmatmul.mubr.f32.gmra.mxu0 %v2892
    %v3029 = vpop.f32.mrf.mxu0
    %v3030 = vadd.f32 %v2960, %v3029
    %v3031 = vpop.f32.mrf.mxu0
    %3032 = vdwg.mxu0
    %v3033 = vadd.f32 %v3030, %v424
    %v3034 = vxor.u32 %v3033, 2147483648
    %v3035 = vmul.f32 %v3034, 1.442695
    %v3036 = vpow.pop %v3035
    %v3037 = vadd.f32 %v3036, 1.0
    %v3038 = vrcp.pop %v3037
    %v3039 = vmul.f32 1.0, %v3038
    %v3040 = vmul.f32 %v3039, 2.0
    %v3041 = vsub.f32 %v3040, 1.0
    %v3042 = vmul.f32 %v3039, %v2620
    %3044 = vrot.lane.b32.xlu0 %v3041, 64
    %v3045 = vpop.permute.xlu0 %3044
    %v3047 = vmul.f32 %v3039, %v3045
    %3049 = vrot.lane.b32.xlu0 %v3047, 32
    %v3050 = vpop.permute.xlu0 %3049
    %v3052 = vadd.f32 %v3042, %v3050
    %v3053 = vtanh.pop %v3052
    %3055 = vrot.lane.b32.xlu0 %v3053, 64
    %v3056 = vpop.permute.xlu0 %3055
    %v3058 = vmul.f32 %v3039, %v3056
    %3059 = vmatprep.subr.mxu0 0.0
    %3060 = vmatpush1.msra.mxu0 0.0
    %3061 = vmatprep.subr.mxu0 0.0
    %3062 = vmatpush1.msra.mxu0 0.0
    %3063 = vmatprep.subr.mxu0 0.0
    %3064 = vmatpush1.msra.mxu0 0.0
    %3065 = vmatprep.subr.mxu0 0.0
    %3066 = vmatpush1.msra.mxu0 0.0
    %3067 = vmatprep.subr.mxu0 0.0
    %3068 = vmatpush1.msra.mxu0 0.0
    %3069 = vmatprep.subr.mxu0 0.0
    %3070 = vmatpush1.msra.mxu0 0.0
    %3071 = vmatprep.subr.mxu0 0.0
    %3072 = vmatpush1.msra.mxu0 0.0
    %3073 = vmatprep.subr.mxu0 0.0
    %3074 = vmatpush1.msra.mxu0 0.0
    %3075 = vmatprep.subr.mxu0 0.0
    %3076 = vmatpush1.msra.mxu0 0.0
    %3077 = vmatprep.subr.mxu0 0.0
    %3078 = vmatpush1.msra.mxu0 0.0
    %3079 = vmatprep.subr.mxu0 0.0
    %3080 = vmatpush1.msra.mxu0 0.0
    %3081 = vmatprep.subr.mxu0 0.0
    %3082 = vmatpush1.msra.mxu0 0.0
    %3083 = vmatprep.subr.mxu0 0.0
    %3084 = vmatpush1.msra.mxu0 %v268
    %3085 = vmatprep.subr.mxu0 0.0
    %3086 = vmatpush1.msra.mxu0 %v267
    %3087 = vmatprep.subr.mxu0 0.0
    %3088 = vmatpush1.msra.mxu0 %v266
    %3089 = vmatprep.subr.mxu0 0.0
    %3090 = vmatpush1.msra.mxu0 %v265
    %3091 = vmatprep.subr.mxu0 0.0
    %3092 = vmatpush2.msra.mxu0 0.0
    %3093 = vmatprep.subr.mxu0 0.0
    %3094 = vmatpush2.msra.mxu0 0.0
    %3095 = vmatprep.subr.mxu0 0.0
    %3096 = vmatpush2.msra.mxu0 0.0
    %3097 = vmatprep.subr.mxu0 0.0
    %3098 = vmatpush2.msra.mxu0 0.0
    %3099 = vmatprep.subr.mxu0 0.0
    %3100 = vmatpush2.msra.mxu0 0.0
    %3101 = vmatprep.subr.mxu0 0.0
    %3102 = vmatpush2.msra.mxu0 0.0
    %3103 = vmatprep.subr.mxu0 0.0
    %3104 = vmatpush2.msra.mxu0 0.0
    %3105 = vmatprep.subr.mxu0 0.0
    %3106 = vmatpush2.msra.mxu0 0.0
    %3107 = vmatprep.subr.mxu0 0.0
    %3108 = vmatpush2.msra.mxu0 0.0
    %3109 = vmatprep.subr.mxu0 0.0
    %3110 = vmatpush2.msra.mxu0 0.0
    %3111 = vmatprep.subr.mxu0 0.0
    %3112 = vmatpush2.msra.mxu0 0.0
    %3113 = vmatprep.subr.mxu0 0.0
    %3114 = vmatpush2.msra.mxu0 0.0
    %3115 = vmatprep.subr.mxu0 0.0
    %3116 = vmatpush2.msra.mxu0 0.0
    %3117 = vmatprep.subr.mxu0 0.0
    %3118 = vmatpush2.msra.mxu0 0.0
    %3119 = vmatprep.subr.mxu0 0.0
    %3120 = vmatpush2.msra.mxu0 0.0
    %3121 = vmatprep.subr.mxu0 0.0
    %3122 = vmatpush2.msra.mxu0 0.0
    %3123 = vmatprep.mubr.f32.mxu0 0.0
    %3124 = vmatmul.mubr.f32.gmra.mxu0 %v2801
    %v3125 = vpop.f32.mrf.mxu0
    %v3126 = vadd.f32 0.0, %v3125
    %v3127 = vpop.f32.mrf.mxu0
    %3128 = vdwg.mxu0
    %3130 = vrot.lane.b32.xlu0 %v3058, 32
    %v3131 = vpop.permute.xlu0 %3130
    %v3132 = vsel %vm276, %v3131, 0
    %3134 = vmatprep.subr.mxu0 0.0
    %3135 = vmatpush1.msra.mxu0 0.0
    %3136 = vmatprep.subr.mxu0 0.0
    %3137 = vmatpush1.msra.mxu0 0.0
    %3138 = vmatprep.subr.mxu0 0.0
    %3139 = vmatpush1.msra.mxu0 0.0
    %3140 = vmatprep.subr.mxu0 0.0
    %3141 = vmatpush1.msra.mxu0 0.0
    %3142 = vmatprep.subr.mxu0 0.0
    %3143 = vmatpush1.msra.mxu0 0.0
    %3144 = vmatprep.subr.mxu0 0.0
    %3145 = vmatpush1.msra.mxu0 0.0
    %3146 = vmatprep.subr.mxu0 0.0
    %3147 = vmatpush1.msra.mxu0 0.0
    %3148 = vmatprep.subr.mxu0 0.0
    %3149 = vmatpush1.msra.mxu0 0.0
    %3150 = vmatprep.subr.mxu0 0.0
    %3151 = vmatpush1.msra.mxu0 0.0
    %3152 = vmatprep.subr.mxu0 0.0
    %3153 = vmatpush1.msra.mxu0 0.0
    %3154 = vmatprep.subr.mxu0 0.0
    %3155 = vmatpush1.msra.mxu0 0.0
    %3156 = vmatprep.subr.mxu0 0.0
    %3157 = vmatpush1.msra.mxu0 0.0
    %3158 = vmatprep.subr.mxu0 0.0
    %3159 = vmatpush1.msra.mxu0 %v264
    %3160 = vmatprep.subr.mxu0 0.0
    %3161 = vmatpush1.msra.mxu0 %v263
    %3162 = vmatprep.subr.mxu0 0.0
    %3163 = vmatpush1.msra.mxu0 %v262
    %3164 = vmatprep.subr.mxu0 0.0
    %3165 = vmatpush1.msra.mxu0 %v261
    %3166 = vmatprep.subr.mxu0 0.0
    %3167 = vmatpush2.msra.mxu0 0.0
    %3168 = vmatprep.subr.mxu0 0.0
    %3169 = vmatpush2.msra.mxu0 0.0
    %3170 = vmatprep.subr.mxu0 0.0
    %3171 = vmatpush2.msra.mxu0 0.0
    %3172 = vmatprep.subr.mxu0 0.0
    %3173 = vmatpush2.msra.mxu0 0.0
    %3174 = vmatprep.subr.mxu0 0.0
    %3175 = vmatpush2.msra.mxu0 0.0
    %3176 = vmatprep.subr.mxu0 0.0
    %3177 = vmatpush2.msra.mxu0 0.0
    %3178 = vmatprep.subr.mxu0 0.0
    %3179 = vmatpush2.msra.mxu0 0.0
    %3180 = vmatprep.subr.mxu0 0.0
    %3181 = vmatpush2.msra.mxu0 0.0
    %3182 = vmatprep.subr.mxu0 0.0
    %3183 = vmatpush2.msra.mxu0 0.0
    %3184 = vmatprep.subr.mxu0 0.0
    %3185 = vmatpush2.msra.mxu0 0.0
    %3186 = vmatprep.subr.mxu0 0.0
    %3187 = vmatpush2.msra.mxu0 0.0
    %3188 = vmatprep.subr.mxu0 0.0
    %3189 = vmatpush2.msra.mxu0 0.0
    %3190 = vmatprep.subr.mxu0 0.0
    %3191 = vmatpush2.msra.mxu0 0.0
    %3192 = vmatprep.subr.mxu0 0.0
    %3193 = vmatpush2.msra.mxu0 0.0
    %3194 = vmatprep.subr.mxu0 0.0
    %3195 = vmatpush2.msra.mxu0 0.0
    %3196 = vmatprep.subr.mxu0 0.0
    %3197 = vmatpush2.msra.mxu0 0.0
    %3198 = vmatprep.mubr.f32.mxu0 0.0
    %3199 = vmatmul.mubr.f32.gmra.mxu0 %v3132
    %v3200 = vpop.f32.mrf.mxu0
    %v3201 = vadd.f32 %v3126, %v3200
    %v3202 = vpop.f32.mrf.mxu0
    %3203 = vdwg.mxu0
    %v3204 = vadd.f32 %v3201, %v601
    %v3205 = vxor.u32 %v3204, 2147483648
    %v3206 = vmul.f32 %v3205, 1.442695
    %v3207 = vpow.pop %v3206
    %v3208 = vadd.f32 %v3207, 1.0
    %v3209 = vrcp.pop %v3208
    %v3210 = vmul.f32 1.0, %v3209
    %v3211 = vmul.f32 %v3210, 2.0
    %v3212 = vsub.f32 %v3211, 1.0
    %v3213 = vmul.f32 %v3210, %v2791
    %3215 = vrot.lane.b32.xlu0 %v3212, 64
    %v3216 = vpop.permute.xlu0 %3215
    %v3218 = vmul.f32 %v3210, %v3216
    %3220 = vrot.lane.b32.xlu0 %v3218, 32
    %v3221 = vpop.permute.xlu0 %3220
    %v3223 = vadd.f32 %v3213, %v3221
    %v3224 = vtanh.pop %v3223
    %3226 = vrot.lane.b32.xlu0 %v3224, 64
    %v3227 = vpop.permute.xlu0 %3226
    %v3229 = vmul.f32 %v3210, %v3227
    %3231 = vrot.lane.b32.xlu0 %v3229, 32
    %v3232 = vpop.permute.xlu0 %3231
    %v3233 = vsel %vm276, %v3232, 0
    %3235 = vmatprep.subr.mxu0 0.0
    %3236 = vmatpush1.msra.mxu0 0.0
    %3237 = vmatprep.subr.mxu0 0.0
    %3238 = vmatpush1.msra.mxu0 0.0
    %3239 = vmatprep.subr.mxu0 0.0
    %3240 = vmatpush1.msra.mxu0 0.0
    %3241 = vmatprep.subr.mxu0 0.0
    %3242 = vmatpush1.msra.mxu0 0.0
    %3243 = vmatprep.subr.mxu0 0.0
    %3244 = vmatpush1.msra.mxu0 0.0
    %3245 = vmatprep.subr.mxu0 0.0
    %3246 = vmatpush1.msra.mxu0 0.0
    %3247 = vmatprep.subr.mxu0 0.0
    %3248 = vmatpush1.msra.mxu0 0.0
    %3249 = vmatprep.subr.mxu0 0.0
    %3250 = vmatpush1.msra.mxu0 0.0
    %3251 = vmatprep.subr.mxu0 0.0
    %3252 = vmatpush1.msra.mxu0 0.0
    %3253 = vmatprep.subr.mxu0 0.0
    %3254 = vmatpush1.msra.mxu0 0.0
    %3255 = vmatprep.subr.mxu0 0.0
    %3256 = vmatpush1.msra.mxu0 0.0
    %3257 = vmatprep.subr.mxu0 0.0
    %3258 = vmatpush1.msra.mxu0 0.0
    %3259 = vmatprep.subr.mxu0 0.0
    %3260 = vmatpush1.msra.mxu0 %v273
    %3261 = vmatprep.subr.mxu0 0.0
    %3262 = vmatpush1.msra.mxu0 %v272
    %3263 = vmatprep.subr.mxu0 0.0
    %3264 = vmatpush1.msra.mxu0 %v271
    %3265 = vmatprep.subr.mxu0 0.0
    %3266 = vmatpush1.msra.mxu0 %v270
    %3267 = vmatprep.subr.mxu0 0.0
    %3268 = vmatpush2.msra.mxu0 0.0
    %3269 = vmatprep.subr.mxu0 0.0
    %3270 = vmatpush2.msra.mxu0 0.0
    %3271 = vmatprep.subr.mxu0 0.0
    %3272 = vmatpush2.msra.mxu0 0.0
    %3273 = vmatprep.subr.mxu0 0.0
    %3274 = vmatpush2.msra.mxu0 0.0
    %3275 = vmatprep.subr.mxu0 0.0
    %3276 = vmatpush2.msra.mxu0 0.0
    %3277 = vmatprep.subr.mxu0 0.0
    %3278 = vmatpush2.msra.mxu0 0.0
    %3279 = vmatprep.subr.mxu0 0.0
    %3280 = vmatpush2.msra.mxu0 0.0
    %3281 = vmatprep.subr.mxu0 0.0
    %3282 = vmatpush2.msra.mxu0 0.0
    %3283 = vmatprep.subr.mxu0 0.0
    %3284 = vmatpush2.msra.mxu0 0.0
    %3285 = vmatprep.subr.mxu0 0.0
    %3286 = vmatpush2.msra.mxu0 0.0
    %3287 = vmatprep.subr.mxu0 0.0
    %3288 = vmatpush2.msra.mxu0 0.0
    %3289 = vmatprep.subr.mxu0 0.0
    %3290 = vmatpush2.msra.mxu0 0.0
    %3291 = vmatprep.subr.mxu0 0.0
    %3292 = vmatpush2.msra.mxu0 0.0
    %3293 = vmatprep.subr.mxu0 0.0
    %3294 = vmatpush2.msra.mxu0 0.0
    %3295 = vmatprep.subr.mxu0 0.0
    %3296 = vmatpush2.msra.mxu0 0.0
    %3297 = vmatprep.subr.mxu0 0.0
    %3298 = vmatpush2.msra.mxu0 0.0
    %3299 = vmatprep.mubr.f32.mxu0 0.0
    %3300 = vmatmul.mubr.f32.gmra.mxu0 %v3233
    %v3301 = vpop.f32.mrf.mxu0
    %v3302 = vadd.f32 %v633, %v3301
    %v3303 = vpop.f32.mrf.mxu0
    %3304 = vdwg.mxu0
    %s3305 = scalar_lea.vmem %s15, 48
    %3306 = vst [vmem:[%s3305] sm:$0xff] %v3302
    // Predicated region
    $region66: #{seq2seq_forward.1} parent=1 // pred_check
      _
    $region67: #{seq2seq_forward.1} parent=1 // pred_check_branch
      %3308 = sbr.rel (0) target = $region69
    $region68: #{seq2seq_forward.1} parent=1 // pred_region
      _
    $region69: #{seq2seq_forward.1} parent=1 // pred_fallthru
      _
    // Predicated region
    $region70: #{seq2seq_forward.1} parent=1 // pred_check
      _
    $region71: #{seq2seq_forward.1} parent=1 // pred_check_branch
      %3310 = sbr.rel (0) target = $region73
    $region72: #{seq2seq_forward.1} parent=1 // pred_region
      _
    $region73: #{seq2seq_forward.1} parent=1 // pred_fallthru
      _
    %3311 = vsyncpa [#allocation3], 1

</llo_original>
